<compile_context>
chip_gen: v6e
topology: v6e:2x2x1
jax: 0.10.0
libtpu: 0.0.40
codegen_flags: <defaults>
</compile_context>

<pallas_src>
import functools

import jax
import jax.numpy as jnp
from jax.experimental import pallas as pl
from jax.experimental.pallas import tpu as pltpu

EPS = 1e-5


# --------------------------------------------------------------------------- #
# Zero only the halo margins of the flat activation scratch (the interior is
# fully overwritten every grid step).
# --------------------------------------------------------------------------- #
def _zero_margins(xext_ref, off):
    total = xext_ref.shape[1]
    z = jnp.zeros((xext_ref.shape[0], off), xext_ref.dtype)
    xext_ref[:, 0:off] = z
    xext_ref[:, total - off:total] = z


# --------------------------------------------------------------------------- #
# im2col: scatter K*K shifted+masked taps of the flat activation into a
# VMEM scratch:  col[(kh*K+kw)*C + c, i*Wo + j] = act[c, i+kh-p, j+kw-p]
# (out-of-range H rows read the zero margins of `src_ref`; out-of-range W
#  columns are masked to zero on the lanes).
# --------------------------------------------------------------------------- #
def _build_col(src_ref, col_ref, *, Cq, K, p, Ho, Wo, off):
    HoWo = Ho * Wo
    lane = jax.lax.broadcasted_iota(jnp.int32, (1, HoWo), 1)
    j = lane % Wo
    for kh in range(K):
        for kw in range(K):
            t = kh * K + kw
            s = (kh - p) * Wo + (kw - p)
            tap = src_ref[:, off + s: off + s + HoWo]          # (Cq, HoWo)
            jj = j + (kw - p)
            valid = jnp.logical_and(jj >= 0, jj < Wo)          # (1, HoWo)
            col_ref[t * Cq:(t + 1) * Cq, :] = jnp.where(
                valid, tap, jnp.zeros_like(tap))


# --------------------------------------------------------------------------- #
# Kernel 1: fused 2x2 maxpool + conv1(+bias) + partial BN1 stats.  Grid = (N,)
# --------------------------------------------------------------------------- #
def _pool_conv_stats_kernel(x_ref, w_ref, b_ref, y_ref, st_ref,
                            xext_ref, col_ref, *, K, p, Ho, Wo):
    Cin = x_ref.shape[1]
    H = x_ref.shape[2]
    W = x_ref.shape[3]
    HoWo = Ho * Wo
    off = p * Wo + p                                           # zero margin

    x = x_ref[0]                                               # (Cin, H, W)

    # ---- 2x2 max-pool: pair-max via static slices, even-column pick on MXU
    m = jnp.maximum(x[:, :H - 1, :], x[:, 1:, :])              # (Cin, H-1, W)
    m = jnp.maximum(m[:, :, :W - 1], m[:, :, 1:])              # (Cin, H-1, W-1)
    m2 = m.reshape(Cin * (H - 1), W - 1).astype(jnp.bfloat16)  # leading collapse
    rr = jax.lax.broadcasted_iota(jnp.int32, (W - 1, Wo), 0)
    cc = jax.lax.broadcasted_iota(jnp.int32, (W - 1, Wo), 1)
    sel = (rr == 2 * cc).astype(jnp.bfloat16)                  # exact 0/1 selector
    mw = jnp.dot(m2, sel, preferred_element_type=jnp.float32)  # (Cin*(H-1), Wo)
    mw = mw.reshape(Cin, H - 1, Wo).astype(jnp.bfloat16)

    # ---- write pooled rows (even rows of mw) into zero-margined flat scratch
    _zero_margins(xext_ref, off)
    for i in range(Ho):
        xext_ref[:, off + i * Wo: off + (i + 1) * Wo] = mw[:, 2 * i, :]

    # ---- im2col once + single wide matmul (bf16 operands, f32 accumulate)
    _build_col(xext_ref, col_ref, Cq=Cin, K=K, p=p, Ho=Ho, Wo=Wo, off=off)
    y = jnp.dot(w_ref[...], col_ref[...], preferred_element_type=jnp.float32)
    y = y + b_ref[...]                                         # (Cmid, HoWo) f32
    y_ref[0] = y.astype(y_ref.dtype)                           # bf16 across HBM

    # ---- per-image partial BatchNorm statistics (f32)
    st_ref[0, :, 0:1] = jnp.sum(y, axis=1, keepdims=True)
    st_ref[0, :, 1:2] = jnp.sum(y * y, axis=1, keepdims=True)


# --------------------------------------------------------------------------- #
# Kernel 2: BN1+ReLU + conv2(+bias) + partial BN2 stats.  Grid = (N,)
# --------------------------------------------------------------------------- #
def _bnrelu_conv_stats_kernel(y1_ref, sc_ref, sh_ref, w_ref, b_ref,
                              y2_ref, st_ref, xext_ref, col_ref,
                              *, K, p, Ho, Wo):
    Cmid = y1_ref.shape[1]
    HoWo = Ho * Wo
    off = p * Wo + p

    # BN1 (folded affine) + ReLU; y1 arrives bf16, affine applied in f32.
    a = y1_ref[0].astype(jnp.float32) * sc_ref[...] + sh_ref[...]
    a = jnp.maximum(a, 0.0)

    _zero_margins(xext_ref, off)
    xext_ref[:, off: off + HoWo] = a.astype(xext_ref.dtype)

    _build_col(xext_ref, col_ref, Cq=Cmid, K=K, p=p, Ho=Ho, Wo=Wo, off=off)
    y = jnp.dot(w_ref[...], col_ref[...], preferred_element_type=jnp.float32)
    y = y + b_ref[...]                                          # (Cout, HoWo)
    y2_ref[0] = y

    st_ref[0, :, 0:1] = jnp.sum(y, axis=1, keepdims=True)
    st_ref[0, :, 1:2] = jnp.sum(y * y, axis=1, keepdims=True)


# --------------------------------------------------------------------------- #
# Kernel 3: BN2 + ReLU (folded affine).  Grid = (N,)
# --------------------------------------------------------------------------- #
def _bnrelu_kernel(y_ref, sc_ref, sh_ref, o_ref):
    o_ref[0] = jnp.maximum(y_ref[0] * sc_ref[...] + sh_ref[...], 0.0)


# --------------------------------------------------------------------------- #
# Wrapper
# --------------------------------------------------------------------------- #
def _bn_affine(stats, count, gamma, beta):
    # stats: (N, C, 2) per-image [sum, sum_sq]  ->  folded (scale, shift)
    s = jnp.sum(stats[..., 0], axis=0)
    sq = jnp.sum(stats[..., 1], axis=0)
    mean = s / count
    var = jnp.maximum(sq / count - mean * mean, 0.0)
    scale = gamma * jax.lax.rsqrt(var + EPS)
    shift = beta - mean * scale
    return scale.reshape(-1, 1), shift.reshape(-1, 1)


def down_forward(x_nchw, params, kernel_size):
    N, Cin, H, W = x_nchw.shape
    K = kernel_size
    p = K // 2
    Ho, Wo = H // 2, W // 2
    HoWo = Ho * Wo
    Cmid = params["w1"].shape[0]
    Cout = params["w2"].shape[0]
    margin = p * Wo + p

    # weight relayout (parameters only -- tiny): OIHW -> (Cout, K*K*Cin), bf16
    w1 = jnp.transpose(params["w1"], (0, 2, 3, 1)).reshape(Cmid, K * K * Cin)
    w1 = w1.astype(jnp.bfloat16)
    w2 = jnp.transpose(params["w2"], (0, 2, 3, 1)).reshape(Cout, K * K * Cmid)
    w2 = w2.astype(jnp.bfloat16)
    b1 = params["b1"].reshape(Cmid, 1)
    b2 = params["b2"].reshape(Cout, 1)

    cparams = pltpu.CompilerParams(
        dimension_semantics=("parallel",),
        vmem_limit_bytes=64 * 1024 * 1024,
    )

    # ---- pass 1: fused maxpool + conv1 + partial BN1 stats
    y1, st1 = pl.pallas_call(
        functools.partial(_pool_conv_stats_kernel, K=K, p=p, Ho=Ho, Wo=Wo),
        grid=(N,),
        in_specs=[
            pl.BlockSpec((1, Cin, H, W), lambda n: (n, 0, 0, 0)),
            pl.BlockSpec((Cmid, K * K * Cin), lambda n: (0, 0)),
            pl.BlockSpec((Cmid, 1), lambda n: (0, 0)),
        ],
        out_specs=[
            pl.BlockSpec((1, Cmid, HoWo), lambda n: (n, 0, 0)),
            pl.BlockSpec((1, Cmid, 2), lambda n: (n, 0, 0)),
        ],
        out_shape=[
            jax.ShapeDtypeStruct((N, Cmid, HoWo), jnp.bfloat16),
            jax.ShapeDtypeStruct((N, Cmid, 2), jnp.float32),
        ],
        scratch_shapes=[
            pltpu.VMEM((Cin, HoWo + 2 * margin), jnp.bfloat16),
            pltpu.VMEM((K * K * Cin, HoWo), jnp.bfloat16),
        ],
        compiler_params=cparams,
    )(x_nchw, w1, b1)

    sc1, sh1 = _bn_affine(st1, N * HoWo, params["g1"], params["be1"])

    # ---- pass 2: BN1+ReLU + conv2 + partial BN2 stats
    y2, st2 = pl.pallas_call(
        functools.partial(_bnrelu_conv_stats_kernel, K=K, p=p, Ho=Ho, Wo=Wo),
        grid=(N,),
        in_specs=[
            pl.BlockSpec((1, Cmid, HoWo), lambda n: (n, 0, 0)),
            pl.BlockSpec((Cmid, 1), lambda n: (0, 0)),
            pl.BlockSpec((Cmid, 1), lambda n: (0, 0)),
            pl.BlockSpec((Cout, K * K * Cmid), lambda n: (0, 0)),
            pl.BlockSpec((Cout, 1), lambda n: (0, 0)),
        ],
        out_specs=[
            pl.BlockSpec((1, Cout, HoWo), lambda n: (n, 0, 0)),
            pl.BlockSpec((1, Cout, 2), lambda n: (n, 0, 0)),
        ],
        out_shape=[
            jax.ShapeDtypeStruct((N, Cout, HoWo), jnp.float32),
            jax.ShapeDtypeStruct((N, Cout, 2), jnp.float32),
        ],
        scratch_shapes=[
            pltpu.VMEM((Cmid, HoWo + 2 * margin), jnp.bfloat16),
            pltpu.VMEM((K * K * Cmid, HoWo), jnp.bfloat16),
        ],
        compiler_params=cparams,
    )(y1, sc1, sh1, w2, b2)

    sc2, sh2 = _bn_affine(st2, N * HoWo, params["g2"], params["be2"])

    # ---- pass 3: BN2 + ReLU
    out = pl.pallas_call(
        _bnrelu_kernel,
        grid=(N,),
        in_specs=[
            pl.BlockSpec((1, Cout, HoWo), lambda n: (n, 0, 0)),
            pl.BlockSpec((Cout, 1), lambda n: (0, 0)),
            pl.BlockSpec((Cout, 1), lambda n: (0, 0)),
        ],
        out_specs=pl.BlockSpec((1, Cout, HoWo), lambda n: (n, 0, 0)),
        out_shape=jax.ShapeDtypeStruct((N, Cout, HoWo), jnp.float32),
        compiler_params=cparams,
    )(y2, sc2, sh2)

    # free row-major split of the last dim -> NCHW
    return out.reshape(N, Cout, Ho, Wo)


# --------------------------- pure-JAX reference ---------------------------- #
def down_reference(x_nchw, params, kernel_size):
    N, C, H, W = x_nchw.shape
    x = x_nchw.reshape(N, C, H // 2, 2, W // 2, 2).max(axis=5).max(axis=3)

    def cbr(x, w, b, g, be):
        y = jax.lax.conv_general_dilated(
            x, w, window_strides=(1, 1), padding="SAME",
            dimension_numbers=("NCHW", "OIHW", "NCHW"))
        y = y + b[None, :, None, None]
        mean = y.mean(axis=(0, 2, 3), keepdims=True)
        var = ((y - mean) ** 2).mean(axis=(0, 2, 3), keepdims=True)
        y = (y - mean) * jax.lax.rsqrt(var + EPS)
        y = y * g[None, :, None, None] + be[None, :, None, None]
        return jnp.maximum(y, 0.0)

    x = cbr(x, params["w1"], params["b1"], params["g1"], params["be1"])
    x = cbr(x, params["w2"], params["b2"], params["g2"], params["be2"])
    return x


if __name__ == "__main__":
    key = jax.random.PRNGKey(0)
    N, Cin, H, W = 2, 4, 16, 16
    Cout = 8          # out_channels (mid_channels defaults to out_channels)
    K = 3             # kernel_size

    ks = jax.random.split(key, 5)
    x = jax.random.normal(ks[0], (N, Cin, H, W), jnp.float32)
    params = {
        "w1": jax.random.normal(ks[1], (Cout, Cin, K, K), jnp.float32) * 0.1,
        "b1": jax.random.normal(ks[2], (Cout,), jnp.float32) * 0.1,
        "g1": jnp.ones((Cout,), jnp.float32),    # BN weight default init
        "be1": jnp.zeros((Cout,), jnp.float32),  # BN bias default init
        "w2": jax.random.normal(ks[3], (Cout, Cout, K, K), jnp.float32) * 0.1,
        "b2": jax.random.normal(ks[4], (Cout,), jnp.float32) * 0.1,
        "g2": jnp.ones((Cout,), jnp.float32),
        "be2": jnp.zeros((Cout,), jnp.float32),
    }

    fwd = jax.jit(functools.partial(down_forward, kernel_size=K))
    out = jax.block_until_ready(fwd(x, params))

    ref = down_reference(x, params, K)
    assert out.shape == (N, Cout, H // 2, W // 2), out.shape
    assert jnp.allclose(out, ref, atol=5e-2, rtol=5e-2), \
        float(jnp.max(jnp.abs(out - ref)))

    print("KERNEL_OK")
</pallas_src>

<mosaic_0001>
module attributes {stable_mosaic.version = 11 : i64} {
  func.func @_bnrelu_kernel(%arg0: i32, %arg1: memref<1x8x64xf32, #tpu.memory_space<vmem>>, %arg2: memref<8x1xf32, #tpu.memory_space<vmem>>, %arg3: memref<8x1xf32, #tpu.memory_space<vmem>>, %arg4: memref<1x8x64xf32, #tpu.memory_space<vmem>>) attributes {dimension_semantics = [#tpu.dimension_semantics<parallel>], iteration_bounds = array<i64: 2>, scalar_prefetch = 0 : i64, scratch_operands = 0 : i64, tpu.core_type = #tpu.core_type<tc>, window_params = [{transform_indices = @transform_0, window_bounds = array<i64: 1, 8, 64>}, {pipeline_mode = #tpu.pipeline_mode<synchronous>, transform_indices = @transform_1, window_bounds = array<i64: 8, 1>}, {pipeline_mode = #tpu.pipeline_mode<synchronous>, transform_indices = @transform_2, window_bounds = array<i64: 8, 1>}, {transform_indices = @transform_3, window_bounds = array<i64: 1, 8, 64>}]} {
    %c0 = arith.constant 0 : index
    %c0_0 = arith.constant 0 : index
    %c0_1 = arith.constant 0 : index
    %0 = vector.load %arg1[%c0, %c0_0, %c0_1] : memref<1x8x64xf32, #tpu.memory_space<vmem>>, vector<1x8x64xf32>
    %1 = vector.shape_cast %0 : vector<1x8x64xf32> to vector<8x64xf32>
    %c0_2 = arith.constant 0 : index
    %c0_3 = arith.constant 0 : index
    %2 = vector.load %arg2[%c0_2, %c0_3] : memref<8x1xf32, #tpu.memory_space<vmem>>, vector<8x1xf32>
    %3 = vector.broadcast %2 : vector<8x1xf32> to vector<8x64xf32>
    %4 = arith.mulf %1, %3 : vector<8x64xf32>
    %c0_4 = arith.constant 0 : index
    %c0_5 = arith.constant 0 : index
    %5 = vector.load %arg3[%c0_4, %c0_5] : memref<8x1xf32, #tpu.memory_space<vmem>>, vector<8x1xf32>
    %6 = vector.broadcast %5 : vector<8x1xf32> to vector<8x64xf32>
    %7 = arith.addf %4, %6 : vector<8x64xf32>
    %cst = arith.constant 0.000000e+00 : f32
    %8 = vector.broadcast %cst : f32 to vector<8x64xf32>
    %9 = arith.maximumf %7, %8 : vector<8x64xf32>
    %c0_6 = arith.constant 0 : index
    %c0_7 = arith.constant 0 : index
    %c0_8 = arith.constant 0 : index
    %10 = vector.load %arg4[%c0_6, %c0_7, %c0_8] : memref<1x8x64xf32, #tpu.memory_space<vmem>>, vector<1x8x64xf32>
    %11 = vector.shape_cast %10 : vector<1x8x64xf32> to vector<8x64xf32>
    %12 = vector.shape_cast %9 : vector<8x64xf32> to vector<1x8x64xf32>
    tpu.vector_store %arg4[%c0_6, %c0_7, %c0_8], %12 {strides = array<i32>} : memref<1x8x64xf32, #tpu.memory_space<vmem>>, vector<1x8x64xf32>,
    return
  }
  func.func @transform_0(%arg0: i32) -> (i32, i32, i32) {
    %c0_i32 = arith.constant 0 : i32
    %c0_i32_0 = arith.constant 0 : i32
    %c0_i32_1 = arith.constant 0 : i32
    return %arg0, %c0_i32, %c0_i32_0 : i32, i32, i32
  }
  func.func @transform_1(%arg0: i32) -> (i32, i32) {
    %c0_i32 = arith.constant 0 : i32
    %c0_i32_0 = arith.constant 0 : i32
    %c0_i32_1 = arith.constant 0 : i32
    return %c0_i32, %c0_i32_0 : i32, i32
  }
  func.func @transform_2(%arg0: i32) -> (i32, i32) {
    %c0_i32 = arith.constant 0 : i32
    %c0_i32_0 = arith.constant 0 : i32
    %c0_i32_1 = arith.constant 0 : i32
    return %c0_i32, %c0_i32_0 : i32, i32
  }
  func.func @transform_3(%arg0: i32) -> (i32, i32, i32) {
    %c0_i32 = arith.constant 0 : i32
    %c0_i32_0 = arith.constant 0 : i32
    %c0_i32_1 = arith.constant 0 : i32
    return %arg0, %c0_i32, %c0_i32_0 : i32, i32, i32
  }
}

module attributes {stable_mosaic.version = 11 : i64} {
  func.func @_pool_conv_stats_kernel(%arg0: i32, %arg1: memref<1x4x16x16xf32, #tpu.memory_space<vmem>>, %arg2: memref<8x36xbf16, #tpu.memory_space<vmem>>, %arg3: memref<8x1xf32, #tpu.memory_space<vmem>>, %arg4: memref<1x8x64xbf16, #tpu.memory_space<vmem>>, %arg5: memref<1x8x2xf32, #tpu.memory_space<vmem>>, %arg6: memref<4x82xbf16, #tpu.memory_space<vmem>>, %arg7: memref<36x64xbf16, #tpu.memory_space<vmem>>) attributes {dimension_semantics = [#tpu.dimension_semantics<parallel>], iteration_bounds = array<i64: 2>, scalar_prefetch = 0 : i64, scratch_operands = 2 : i64, tpu.core_type = #tpu.core_type<tc>, window_params = [{transform_indices = @transform_0, window_bounds = array<i64: 1, 4, 16, 16>}, {pipeline_mode = #tpu.pipeline_mode<synchronous>, transform_indices = @transform_1, window_bounds = array<i64: 8, 36>}, {pipeline_mode = #tpu.pipeline_mode<synchronous>, transform_indices = @transform_2, window_bounds = array<i64: 8, 1>}, {transform_indices = @transform_3, window_bounds = array<i64: 1, 8, 64>}, {transform_indices = @transform_4, window_bounds = array<i64: 1, 8, 2>}]} {
    %c0 = arith.constant 0 : index
    %c0_0 = arith.constant 0 : index
    %c0_1 = arith.constant 0 : index
    %c0_2 = arith.constant 0 : index
    %0 = vector.load %arg1[%c0, %c0_0, %c0_1, %c0_2] : memref<1x4x16x16xf32, #tpu.memory_space<vmem>>, vector<1x4x16x16xf32>
    %1 = vector.shape_cast %0 : vector<1x4x16x16xf32> to vector<4x16x16xf32>
    %2 = vector.extract_strided_slice %1 {offsets = [0, 0, 0], sizes = [4, 15, 16], strides = [1, 1, 1]} : vector<4x16x16xf32> to vector<4x15x16xf32>
    %3 = vector.extract_strided_slice %1 {offsets = [0, 1, 0], sizes = [4, 15, 16], strides = [1, 1, 1]} : vector<4x16x16xf32> to vector<4x15x16xf32>
    %4 = arith.maximumf %2, %3 : vector<4x15x16xf32>
    %5 = vector.extract_strided_slice %4 {offsets = [0, 0, 0], sizes = [4, 15, 15], strides = [1, 1, 1]} : vector<4x15x16xf32> to vector<4x15x15xf32>
    %6 = vector.extract_strided_slice %4 {offsets = [0, 0, 1], sizes = [4, 15, 15], strides = [1, 1, 1]} : vector<4x15x16xf32> to vector<4x15x15xf32>
    %7 = arith.maximumf %5, %6 : vector<4x15x15xf32>
    %8 = vector.shape_cast %7 : vector<4x15x15xf32> to vector<60x15xf32>
    %9 = arith.truncf %8 : vector<60x15xf32> to vector<60x15xbf16>
    %10 = tpu.iota {dimensions = array<i32: 0>} : vector<15x8xi32>
    %11 = tpu.iota {dimensions = array<i32: 1>} : vector<15x8xi32>
    %c2_i32 = arith.constant 2 : i32
    %12 = vector.broadcast %c2_i32 : i32 to vector<15x8xi32>
    %13 = arith.muli %12, %11 : vector<15x8xi32>
    %14 = arith.cmpi eq, %10, %13 : vector<15x8xi32>
    %15 = arith.extui %14 : vector<15x8xi1> to vector<15x8xi32>
    %16 = arith.sitofp %15 : vector<15x8xi32> to vector<15x8xf32>
    %17 = arith.truncf %16 : vector<15x8xf32> to vector<15x8xbf16>
    %cst = arith.constant dense<0.000000e+00> : vector<60x8xf32>
    %18 = tpu.matmul %9, %17, %cst {dimension_numbers = #tpu.dot_dimension_numbers<[1], [0], [0], [1], [0, 0, 1, 1], [], []>} : vector<60x15xbf16>, vector<15x8xbf16>, vector<60x8xf32> -> vector<60x8xf32>
    %19 = vector.shape_cast %18 : vector<60x8xf32> to vector<4x15x8xf32>
    %20 = arith.truncf %19 : vector<4x15x8xf32> to vector<4x15x8xbf16>
    %cst_3 = arith.constant 0.000000e+00 : bf16
    %21 = vector.broadcast %cst_3 : bf16 to vector<4x9xbf16>
    %c0_4 = arith.constant 0 : index
    %c0_5 = arith.constant 0 : index
    %22 = vector.load %arg6[%c0_4, %c0_5] : memref<4x82xbf16, #tpu.memory_space<vmem>>, vector<4x9xbf16>
    tpu.vector_store %arg6[%c0_4, %c0_5], %21 {strides = array<i32>} : memref<4x82xbf16, #tpu.memory_space<vmem>>, vector<4x9xbf16>,
    %c0_6 = arith.constant 0 : index
    %c73 = arith.constant 73 : index
    %23 = vector.load %arg6[%c0_6, %c73] : memref<4x82xbf16, #tpu.memory_space<vmem>>, vector<4x9xbf16>
    tpu.vector_store %arg6[%c0_6, %c73], %21 {strides = array<i32>} : memref<4x82xbf16, #tpu.memory_space<vmem>>, vector<4x9xbf16>,
    %24 = vector.extract_strided_slice %20 {offsets = [0, 0, 0], sizes = [4, 1, 8], strides = [1, 1, 1]} : vector<4x15x8xbf16> to vector<4x1x8xbf16>
    %25 = vector.shape_cast %24 : vector<4x1x8xbf16> to vector<4x8xbf16>
    %c0_7 = arith.constant 0 : index
    %c9 = arith.constant 9 : index
    %26 = vector.load %arg6[%c0_7, %c9] : memref<4x82xbf16, #tpu.memory_space<vmem>>, vector<4x8xbf16>
    tpu.vector_store %arg6[%c0_7, %c9], %25 {strides = array<i32>} : memref<4x82xbf16, #tpu.memory_space<vmem>>, vector<4x8xbf16>,
    %27 = vector.extract_strided_slice %20 {offsets = [0, 2, 0], sizes = [4, 1, 8], strides = [1, 1, 1]} : vector<4x15x8xbf16> to vector<4x1x8xbf16>
    %28 = vector.shape_cast %27 : vector<4x1x8xbf16> to vector<4x8xbf16>
    %c0_8 = arith.constant 0 : index
    %c17 = arith.constant 17 : index
    %29 = vector.load %arg6[%c0_8, %c17] : memref<4x82xbf16, #tpu.memory_space<vmem>>, vector<4x8xbf16>
    tpu.vector_store %arg6[%c0_8, %c17], %28 {strides = array<i32>} : memref<4x82xbf16, #tpu.memory_space<vmem>>, vector<4x8xbf16>,
    %30 = vector.extract_strided_slice %20 {offsets = [0, 4, 0], sizes = [4, 1, 8], strides = [1, 1, 1]} : vector<4x15x8xbf16> to vector<4x1x8xbf16>
    %31 = vector.shape_cast %30 : vector<4x1x8xbf16> to vector<4x8xbf16>
    %c0_9 = arith.constant 0 : index
    %c25 = arith.constant 25 : index
    %32 = vector.load %arg6[%c0_9, %c25] : memref<4x82xbf16, #tpu.memory_space<vmem>>, vector<4x8xbf16>
    tpu.vector_store %arg6[%c0_9, %c25], %31 {strides = array<i32>} : memref<4x82xbf16, #tpu.memory_space<vmem>>, vector<4x8xbf16>,
    %33 = vector.extract_strided_slice %20 {offsets = [0, 6, 0], sizes = [4, 1, 8], strides = [1, 1, 1]} : vector<4x15x8xbf16> to vector<4x1x8xbf16>
    %34 = vector.shape_cast %33 : vector<4x1x8xbf16> to vector<4x8xbf16>
    %c0_10 = arith.constant 0 : index
    %c33 = arith.constant 33 : index
    %35 = vector.load %arg6[%c0_10, %c33] : memref<4x82xbf16, #tpu.memory_space<vmem>>, vector<4x8xbf16>
    tpu.vector_store %arg6[%c0_10, %c33], %34 {strides = array<i32>} : memref<4x82xbf16, #tpu.memory_space<vmem>>, vector<4x8xbf16>,
    %36 = vector.extract_strided_slice %20 {offsets = [0, 8, 0], sizes = [4, 1, 8], strides = [1, 1, 1]} : vector<4x15x8xbf16> to vector<4x1x8xbf16>
    %37 = vector.shape_cast %36 : vector<4x1x8xbf16> to vector<4x8xbf16>
    %c0_11 = arith.constant 0 : index
    %c41 = arith.constant 41 : index
    %38 = vector.load %arg6[%c0_11, %c41] : memref<4x82xbf16, #tpu.memory_space<vmem>>, vector<4x8xbf16>
    tpu.vector_store %arg6[%c0_11, %c41], %37 {strides = array<i32>} : memref<4x82xbf16, #tpu.memory_space<vmem>>, vector<4x8xbf16>,
    %39 = vector.extract_strided_slice %20 {offsets = [0, 10, 0], sizes = [4, 1, 8], strides = [1, 1, 1]} : vector<4x15x8xbf16> to vector<4x1x8xbf16>
    %40 = vector.shape_cast %39 : vector<4x1x8xbf16> to vector<4x8xbf16>
    %c0_12 = arith.constant 0 : index
    %c49 = arith.constant 49 : index
    %41 = vector.load %arg6[%c0_12, %c49] : memref<4x82xbf16, #tpu.memory_space<vmem>>, vector<4x8xbf16>
    tpu.vector_store %arg6[%c0_12, %c49], %40 {strides = array<i32>} : memref<4x82xbf16, #tpu.memory_space<vmem>>, vector<4x8xbf16>,
    %42 = vector.extract_strided_slice %20 {offsets = [0, 12, 0], sizes = [4, 1, 8], strides = [1, 1, 1]} : vector<4x15x8xbf16> to vector<4x1x8xbf16>
    %43 = vector.shape_cast %42 : vector<4x1x8xbf16> to vector<4x8xbf16>
    %c0_13 = arith.constant 0 : index
    %c57 = arith.constant 57 : index
    %44 = vector.load %arg6[%c0_13, %c57] : memref<4x82xbf16, #tpu.memory_space<vmem>>, vector<4x8xbf16>
    tpu.vector_store %arg6[%c0_13, %c57], %43 {strides = array<i32>} : memref<4x82xbf16, #tpu.memory_space<vmem>>, vector<4x8xbf16>,
    %45 = vector.extract_strided_slice %20 {offsets = [0, 14, 0], sizes = [4, 1, 8], strides = [1, 1, 1]} : vector<4x15x8xbf16> to vector<4x1x8xbf16>
    %46 = vector.shape_cast %45 : vector<4x1x8xbf16> to vector<4x8xbf16>
    %c0_14 = arith.constant 0 : index
    %c65 = arith.constant 65 : index
    %47 = vector.load %arg6[%c0_14, %c65] : memref<4x82xbf16, #tpu.memory_space<vmem>>, vector<4x8xbf16>
    tpu.vector_store %arg6[%c0_14, %c65], %46 {strides = array<i32>} : memref<4x82xbf16, #tpu.memory_space<vmem>>, vector<4x8xbf16>,
    %48 = tpu.iota {dimensions = array<i32: 1>} : vector<1x64xi32>
    %c8_i32 = arith.constant 8 : i32
    %c0_i32 = arith.constant 0 : i32
    %49 = arith.cmpi eq, %c8_i32, %c0_i32 : i32
    %c1_i32 = arith.constant 1 : i32
    %50 = arith.select %49, %c1_i32, %c8_i32 : i32
    %51 = vector.broadcast %50 : i32 to vector<1x64xi32>
    %52 = arith.remsi %48, %51 : vector<1x64xi32>
    %c0_i32_15 = arith.constant 0 : i32
    %53 = vector.broadcast %c0_i32_15 : i32 to vector<1x64xi32>
    %54 = arith.cmpi ne, %52, %53 : vector<1x64xi32>
    %c0_i32_16 = arith.constant 0 : i32
    %55 = vector.broadcast %c0_i32_16 : i32 to vector<1x64xi32>
    %56 = arith.cmpi slt, %52, %55 : vector<1x64xi32>
    %c0_i32_17 = arith.constant 0 : i32
    %57 = arith.cmpi slt, %50, %c0_i32_17 : i32
    %58 = vector.broadcast %57 : i1 to vector<1x64xi1>
    %59 = vector.broadcast %58 : vector<1x64xi1> to vector<1x64xi1>
    %60 = arith.xori %56, %59 : vector<1x64xi1>
    %61 = arith.andi %60, %54 : vector<1x64xi1>
    %62 = vector.broadcast %50 : i32 to vector<1x64xi32>
    %63 = arith.addi %52, %62 : vector<1x64xi32>
    %64 = arith.select %61, %63, %52 : vector<1x64xi1>, vector<1x64xi32>
    %c0_18 = arith.constant 0 : index
    %c0_19 = arith.constant 0 : index
    %65 = vector.load %arg6[%c0_18, %c0_19] : memref<4x82xbf16, #tpu.memory_space<vmem>>, vector<4x64xbf16>
    %c-1_i32 = arith.constant -1 : i32
    %66 = vector.broadcast %c-1_i32 : i32 to vector<1x64xi32>
    %67 = arith.addi %64, %66 : vector<1x64xi32>
    %c0_i32_20 = arith.constant 0 : i32
    %68 = vector.broadcast %c0_i32_20 : i32 to vector<1x64xi32>
    %69 = arith.cmpi sge, %67, %68 : vector<1x64xi32>
    %c8_i32_21 = arith.constant 8 : i32
    %70 = vector.broadcast %c8_i32_21 : i32 to vector<1x64xi32>
    %71 = arith.cmpi slt, %67, %70 : vector<1x64xi32>
    %72 = arith.andi %69, %71 : vector<1x64xi1>
    %cst_22 = arith.constant 0.000000e+00 : bf16
    %73 = vector.broadcast %cst_22 : bf16 to vector<4x64xbf16>
    %74 = vector.shape_cast %72 : vector<1x64xi1> to vector<1x64xi1>
    %75 = vector.broadcast %74 : vector<1x64xi1> to vector<4x64xi1>
    %76 = arith.select %75, %65, %73 : vector<4x64xi1>, vector<4x64xbf16>
    %c0_23 = arith.constant 0 : index
    %c0_24 = arith.constant 0 : index
    %77 = vector.load %arg7[%c0_23, %c0_24] : memref<36x64xbf16, #tpu.memory_space<vmem>>, vector<4x64xbf16>
    tpu.vector_store %arg7[%c0_23, %c0_24], %76 {strides = array<i32>} : memref<36x64xbf16, #tpu.memory_space<vmem>>, vector<4x64xbf16>,
    %c0_25 = arith.constant 0 : index
    %c1 = arith.constant 1 : index
    %78 = vector.load %arg6[%c0_25, %c1] : memref<4x82xbf16, #tpu.memory_space<vmem>>, vector<4x64xbf16>
    %c0_i32_26 = arith.constant 0 : i32
    %79 = vector.broadcast %c0_i32_26 : i32 to vector<1x64xi32>
    %80 = arith.addi %64, %79 : vector<1x64xi32>
    %c0_i32_27 = arith.constant 0 : i32
    %81 = vector.broadcast %c0_i32_27 : i32 to vector<1x64xi32>
    %82 = arith.cmpi sge, %80, %81 : vector<1x64xi32>
    %c8_i32_28 = arith.constant 8 : i32
    %83 = vector.broadcast %c8_i32_28 : i32 to vector<1x64xi32>
    %84 = arith.cmpi slt, %80, %83 : vector<1x64xi32>
    %85 = arith.andi %82, %84 : vector<1x64xi1>
    %cst_29 = arith.constant 0.000000e+00 : bf16
    %86 = vector.broadcast %cst_29 : bf16 to vector<4x64xbf16>
    %87 = vector.shape_cast %85 : vector<1x64xi1> to vector<1x64xi1>
    %88 = vector.broadcast %87 : vector<1x64xi1> to vector<4x64xi1>
    %89 = arith.select %88, %78, %86 : vector<4x64xi1>, vector<4x64xbf16>
    %c4 = arith.constant 4 : index
    %c0_30 = arith.constant 0 : index
    %90 = vector.load %arg7[%c4, %c0_30] : memref<36x64xbf16, #tpu.memory_space<vmem>>, vector<4x64xbf16>
    tpu.vector_store %arg7[%c4, %c0_30], %89 {strides = array<i32>} : memref<36x64xbf16, #tpu.memory_space<vmem>>, vector<4x64xbf16>,
    %c0_31 = arith.constant 0 : index
    %c2 = arith.constant 2 : index
    %91 = vector.load %arg6[%c0_31, %c2] : memref<4x82xbf16, #tpu.memory_space<vmem>>, vector<4x64xbf16>
    %c1_i32_32 = arith.constant 1 : i32
    %92 = vector.broadcast %c1_i32_32 : i32 to vector<1x64xi32>
    %93 = arith.addi %64, %92 : vector<1x64xi32>
    %c0_i32_33 = arith.constant 0 : i32
    %94 = vector.broadcast %c0_i32_33 : i32 to vector<1x64xi32>
    %95 = arith.cmpi sge, %93, %94 : vector<1x64xi32>
    %c8_i32_34 = arith.constant 8 : i32
    %96 = vector.broadcast %c8_i32_34 : i32 to vector<1x64xi32>
    %97 = arith.cmpi slt, %93, %96 : vector<1x64xi32>
    %98 = arith.andi %95, %97 : vector<1x64xi1>
    %cst_35 = arith.constant 0.000000e+00 : bf16
    %99 = vector.broadcast %cst_35 : bf16 to vector<4x64xbf16>
    %100 = vector.shape_cast %98 : vector<1x64xi1> to vector<1x64xi1>
    %101 = vector.broadcast %100 : vector<1x64xi1> to vector<4x64xi1>
    %102 = arith.select %101, %91, %99 : vector<4x64xi1>, vector<4x64xbf16>
    %c8 = arith.constant 8 : index
    %c0_36 = arith.constant 0 : index
    %103 = vector.load %arg7[%c8, %c0_36] : memref<36x64xbf16, #tpu.memory_space<vmem>>, vector<4x64xbf16>
    tpu.vector_store %arg7[%c8, %c0_36], %102 {strides = array<i32>} : memref<36x64xbf16, #tpu.memory_space<vmem>>, vector<4x64xbf16>,
    %c0_37 = arith.constant 0 : index
    %c8_38 = arith.constant 8 : index
    %104 = vector.load %arg6[%c0_37, %c8_38] : memref<4x82xbf16, #tpu.memory_space<vmem>>, vector<4x64xbf16>
    %c-1_i32_39 = arith.constant -1 : i32
    %105 = vector.broadcast %c-1_i32_39 : i32 to vector<1x64xi32>
    %106 = arith.addi %64, %105 : vector<1x64xi32>
    %c0_i32_40 = arith.constant 0 : i32
    %107 = vector.broadcast %c0_i32_40 : i32 to vector<1x64xi32>
    %108 = arith.cmpi sge, %106, %107 : vector<1x64xi32>
    %c8_i32_41 = arith.constant 8 : i32
    %109 = vector.broadcast %c8_i32_41 : i32 to vector<1x64xi32>
    %110 = arith.cmpi slt, %106, %109 : vector<1x64xi32>
    %111 = arith.andi %108, %110 : vector<1x64xi1>
    %cst_42 = arith.constant 0.000000e+00 : bf16
    %112 = vector.broadcast %cst_42 : bf16 to vector<4x64xbf16>
    %113 = vector.shape_cast %111 : vector<1x64xi1> to vector<1x64xi1>
    %114 = vector.broadcast %113 : vector<1x64xi1> to vector<4x64xi1>
    %115 = arith.select %114, %104, %112 : vector<4x64xi1>, vector<4x64xbf16>
    %c12 = arith.constant 12 : index
    %c0_43 = arith.constant 0 : index
    %116 = vector.load %arg7[%c12, %c0_43] : memref<36x64xbf16, #tpu.memory_space<vmem>>, vector<4x64xbf16>
    tpu.vector_store %arg7[%c12, %c0_43], %115 {strides = array<i32>} : memref<36x64xbf16, #tpu.memory_space<vmem>>, vector<4x64xbf16>,
    %c0_44 = arith.constant 0 : index
    %c9_45 = arith.constant 9 : index
    %117 = vector.load %arg6[%c0_44, %c9_45] : memref<4x82xbf16, #tpu.memory_space<vmem>>, vector<4x64xbf16>
    %c0_i32_46 = arith.constant 0 : i32
    %118 = vector.broadcast %c0_i32_46 : i32 to vector<1x64xi32>
    %119 = arith.addi %64, %118 : vector<1x64xi32>
    %c0_i32_47 = arith.constant 0 : i32
    %120 = vector.broadcast %c0_i32_47 : i32 to vector<1x64xi32>
    %121 = arith.cmpi sge, %119, %120 : vector<1x64xi32>
    %c8_i32_48 = arith.constant 8 : i32
    %122 = vector.broadcast %c8_i32_48 : i32 to vector<1x64xi32>
    %123 = arith.cmpi slt, %119, %122 : vector<1x64xi32>
    %124 = arith.andi %121, %123 : vector<1x64xi1>
    %cst_49 = arith.constant 0.000000e+00 : bf16
    %125 = vector.broadcast %cst_49 : bf16 to vector<4x64xbf16>
    %126 = vector.shape_cast %124 : vector<1x64xi1> to vector<1x64xi1>
    %127 = vector.broadcast %126 : vector<1x64xi1> to vector<4x64xi1>
    %128 = arith.select %127, %117, %125 : vector<4x64xi1>, vector<4x64xbf16>
    %c16 = arith.constant 16 : index
    %c0_50 = arith.constant 0 : index
    %129 = vector.load %arg7[%c16, %c0_50] : memref<36x64xbf16, #tpu.memory_space<vmem>>, vector<4x64xbf16>
    tpu.vector_store %arg7[%c16, %c0_50], %128 {strides = array<i32>} : memref<36x64xbf16, #tpu.memory_space<vmem>>, vector<4x64xbf16>,
    %c0_51 = arith.constant 0 : index
    %c10 = arith.constant 10 : index
    %130 = vector.load %arg6[%c0_51, %c10] : memref<4x82xbf16, #tpu.memory_space<vmem>>, vector<4x64xbf16>
    %c1_i32_52 = arith.constant 1 : i32
    %131 = vector.broadcast %c1_i32_52 : i32 to vector<1x64xi32>
    %132 = arith.addi %64, %131 : vector<1x64xi32>
    %c0_i32_53 = arith.constant 0 : i32
    %133 = vector.broadcast %c0_i32_53 : i32 to vector<1x64xi32>
    %134 = arith.cmpi sge, %132, %133 : vector<1x64xi32>
    %c8_i32_54 = arith.constant 8 : i32
    %135 = vector.broadcast %c8_i32_54 : i32 to vector<1x64xi32>
    %136 = arith.cmpi slt, %132, %135 : vector<1x64xi32>
    %137 = arith.andi %134, %136 : vector<1x64xi1>
    %cst_55 = arith.constant 0.000000e+00 : bf16
    %138 = vector.broadcast %cst_55 : bf16 to vector<4x64xbf16>
    %139 = vector.shape_cast %137 : vector<1x64xi1> to vector<1x64xi1>
    %140 = vector.broadcast %139 : vector<1x64xi1> to vector<4x64xi1>
    %141 = arith.select %140, %130, %138 : vector<4x64xi1>, vector<4x64xbf16>
    %c20 = arith.constant 20 : index
    %c0_56 = arith.constant 0 : index
    %142 = vector.load %arg7[%c20, %c0_56] : memref<36x64xbf16, #tpu.memory_space<vmem>>, vector<4x64xbf16>
    tpu.vector_store %arg7[%c20, %c0_56], %141 {strides = array<i32>} : memref<36x64xbf16, #tpu.memory_space<vmem>>, vector<4x64xbf16>,
    %c0_57 = arith.constant 0 : index
    %c16_58 = arith.constant 16 : index
    %143 = vector.load %arg6[%c0_57, %c16_58] : memref<4x82xbf16, #tpu.memory_space<vmem>>, vector<4x64xbf16>
    %c-1_i32_59 = arith.constant -1 : i32
    %144 = vector.broadcast %c-1_i32_59 : i32 to vector<1x64xi32>
    %145 = arith.addi %64, %144 : vector<1x64xi32>
    %c0_i32_60 = arith.constant 0 : i32
    %146 = vector.broadcast %c0_i32_60 : i32 to vector<1x64xi32>
    %147 = arith.cmpi sge, %145, %146 : vector<1x64xi32>
    %c8_i32_61 = arith.constant 8 : i32
    %148 = vector.broadcast %c8_i32_61 : i32 to vector<1x64xi32>
    %149 = arith.cmpi slt, %145, %148 : vector<1x64xi32>
    %150 = arith.andi %147, %149 : vector<1x64xi1>
    %cst_62 = arith.constant 0.000000e+00 : bf16
    %151 = vector.broadcast %cst_62 : bf16 to vector<4x64xbf16>
    %152 = vector.shape_cast %150 : vector<1x64xi1> to vector<1x64xi1>
    %153 = vector.broadcast %152 : vector<1x64xi1> to vector<4x64xi1>
    %154 = arith.select %153, %143, %151 : vector<4x64xi1>, vector<4x64xbf16>
    %c24 = arith.constant 24 : index
    %c0_63 = arith.constant 0 : index
    %155 = vector.load %arg7[%c24, %c0_63] : memref<36x64xbf16, #tpu.memory_space<vmem>>, vector<4x64xbf16>
    tpu.vector_store %arg7[%c24, %c0_63], %154 {strides = array<i32>} : memref<36x64xbf16, #tpu.memory_space<vmem>>, vector<4x64xbf16>,
    %c0_64 = arith.constant 0 : index
    %c17_65 = arith.constant 17 : index
    %156 = vector.load %arg6[%c0_64, %c17_65] : memref<4x82xbf16, #tpu.memory_space<vmem>>, vector<4x64xbf16>
    %c0_i32_66 = arith.constant 0 : i32
    %157 = vector.broadcast %c0_i32_66 : i32 to vector<1x64xi32>
    %158 = arith.addi %64, %157 : vector<1x64xi32>
    %c0_i32_67 = arith.constant 0 : i32
    %159 = vector.broadcast %c0_i32_67 : i32 to vector<1x64xi32>
    %160 = arith.cmpi sge, %158, %159 : vector<1x64xi32>
    %c8_i32_68 = arith.constant 8 : i32
    %161 = vector.broadcast %c8_i32_68 : i32 to vector<1x64xi32>
    %162 = arith.cmpi slt, %158, %161 : vector<1x64xi32>
    %163 = arith.andi %160, %162 : vector<1x64xi1>
    %cst_69 = arith.constant 0.000000e+00 : bf16
    %164 = vector.broadcast %cst_69 : bf16 to vector<4x64xbf16>
    %165 = vector.shape_cast %163 : vector<1x64xi1> to vector<1x64xi1>
    %166 = vector.broadcast %165 : vector<1x64xi1> to vector<4x64xi1>
    %167 = arith.select %166, %156, %164 : vector<4x64xi1>, vector<4x64xbf16>
    %c28 = arith.constant 28 : index
    %c0_70 = arith.constant 0 : index
    %168 = vector.load %arg7[%c28, %c0_70] : memref<36x64xbf16, #tpu.memory_space<vmem>>, vector<4x64xbf16>
    tpu.vector_store %arg7[%c28, %c0_70], %167 {strides = array<i32>} : memref<36x64xbf16, #tpu.memory_space<vmem>>, vector<4x64xbf16>,
    %c0_71 = arith.constant 0 : index
    %c18 = arith.constant 18 : index
    %169 = vector.load %arg6[%c0_71, %c18] : memref<4x82xbf16, #tpu.memory_space<vmem>>, vector<4x64xbf16>
    %c1_i32_72 = arith.constant 1 : i32
    %170 = vector.broadcast %c1_i32_72 : i32 to vector<1x64xi32>
    %171 = arith.addi %64, %170 : vector<1x64xi32>
    %c0_i32_73 = arith.constant 0 : i32
    %172 = vector.broadcast %c0_i32_73 : i32 to vector<1x64xi32>
    %173 = arith.cmpi sge, %171, %172 : vector<1x64xi32>
    %c8_i32_74 = arith.constant 8 : i32
    %174 = vector.broadcast %c8_i32_74 : i32 to vector<1x64xi32>
    %175 = arith.cmpi slt, %171, %174 : vector<1x64xi32>
    %176 = arith.andi %173, %175 : vector<1x64xi1>
    %cst_75 = arith.constant 0.000000e+00 : bf16
    %177 = vector.broadcast %cst_75 : bf16 to vector<4x64xbf16>
    %178 = vector.shape_cast %176 : vector<1x64xi1> to vector<1x64xi1>
    %179 = vector.broadcast %178 : vector<1x64xi1> to vector<4x64xi1>
    %180 = arith.select %179, %169, %177 : vector<4x64xi1>, vector<4x64xbf16>
    %c32 = arith.constant 32 : index
    %c0_76 = arith.constant 0 : index
    %181 = vector.load %arg7[%c32, %c0_76] : memref<36x64xbf16, #tpu.memory_space<vmem>>, vector<4x64xbf16>
    tpu.vector_store %arg7[%c32, %c0_76], %180 {strides = array<i32>} : memref<36x64xbf16, #tpu.memory_space<vmem>>, vector<4x64xbf16>,
    %c0_77 = arith.constant 0 : index
    %c0_78 = arith.constant 0 : index
    %182 = vector.load %arg2[%c0_77, %c0_78] : memref<8x36xbf16, #tpu.memory_space<vmem>>, vector<8x36xbf16>
    %c0_79 = arith.constant 0 : index
    %c0_80 = arith.constant 0 : index
    %183 = vector.load %arg7[%c0_79, %c0_80] : memref<36x64xbf16, #tpu.memory_space<vmem>>, vector<36x64xbf16>
    %cst_81 = arith.constant dense<0.000000e+00> : vector<8x64xf32>
    %184 = tpu.matmul %182, %183, %cst_81 {dimension_numbers = #tpu.dot_dimension_numbers<[1], [0], [0], [1], [0, 0, 1, 1], [], []>} : vector<8x36xbf16>, vector<36x64xbf16>, vector<8x64xf32> -> vector<8x64xf32>
    %c0_82 = arith.constant 0 : index
    %c0_83 = arith.constant 0 : index
    %185 = vector.load %arg3[%c0_82, %c0_83] : memref<8x1xf32, #tpu.memory_space<vmem>>, vector<8x1xf32>
    %186 = vector.broadcast %185 : vector<8x1xf32> to vector<8x64xf32>
    %187 = arith.addf %184, %186 : vector<8x64xf32>
    %188 = arith.truncf %187 : vector<8x64xf32> to vector<8x64xbf16>
    %c0_84 = arith.constant 0 : index
    %c0_85 = arith.constant 0 : index
    %c0_86 = arith.constant 0 : index
    %189 = vector.load %arg4[%c0_84, %c0_85, %c0_86] : memref<1x8x64xbf16, #tpu.memory_space<vmem>>, vector<1x8x64xbf16>
    %190 = vector.shape_cast %189 : vector<1x8x64xbf16> to vector<8x64xbf16>
    %191 = vector.shape_cast %188 : vector<8x64xbf16> to vector<1x8x64xbf16>
    tpu.vector_store %arg4[%c0_84, %c0_85, %c0_86], %191 {strides = array<i32>} : memref<1x8x64xbf16, #tpu.memory_space<vmem>>, vector<1x8x64xbf16>,
    %cst_87 = arith.constant dense<0.000000e+00> : vector<8xf32>
    %192 = vector.multi_reduction <add>, %187, %cst_87 [1] : vector<8x64xf32> to vector<8xf32>
    %193 = vector.shape_cast %192 : vector<8xf32> to vector<8x1xf32>
    %c0_88 = arith.constant 0 : index
    %c0_89 = arith.constant 0 : index
    %c0_90 = arith.constant 0 : index
    %194 = vector.load %arg5[%c0_88, %c0_89, %c0_90] : memref<1x8x2xf32, #tpu.memory_space<vmem>>, vector<1x8x1xf32>
    %195 = vector.shape_cast %194 : vector<1x8x1xf32> to vector<8x1xf32>
    %196 = vector.shape_cast %193 : vector<8x1xf32> to vector<1x8x1xf32>
    tpu.vector_store %arg5[%c0_88, %c0_89, %c0_90], %196 {strides = array<i32>} : memref<1x8x2xf32, #tpu.memory_space<vmem>>, vector<1x8x1xf32>,
    %197 = arith.mulf %187, %187 : vector<8x64xf32>
    %cst_91 = arith.constant dense<0.000000e+00> : vector<8xf32>
    %198 = vector.multi_reduction <add>, %197, %cst_91 [1] : vector<8x64xf32> to vector<8xf32>
    %199 = vector.shape_cast %198 : vector<8xf32> to vector<8x1xf32>
    %c0_92 = arith.constant 0 : index
    %c0_93 = arith.constant 0 : index
    %c1_94 = arith.constant 1 : index
    %200 = vector.load %arg5[%c0_92, %c0_93, %c1_94] : memref<1x8x2xf32, #tpu.memory_space<vmem>>, vector<1x8x1xf32>
    %201 = vector.shape_cast %200 : vector<1x8x1xf32> to vector<8x1xf32>
    %202 = vector.shape_cast %199 : vector<8x1xf32> to vector<1x8x1xf32>
    tpu.vector_store %arg5[%c0_92, %c0_93, %c1_94], %202 {strides = array<i32>} : memref<1x8x2xf32, #tpu.memory_space<vmem>>, vector<1x8x1xf32>,
    return
  }
  func.func @transform_0(%arg0: i32) -> (i32, i32, i32, i32) {
    %c0_i32 = arith.constant 0 : i32
    %c0_i32_0 = arith.constant 0 : i32
    %c0_i32_1 = arith.constant 0 : i32
    %c0_i32_2 = arith.constant 0 : i32
    return %arg0, %c0_i32, %c0_i32_0, %c0_i32_1 : i32, i32, i32, i32
  }
  func.func @transform_1(%arg0: i32) -> (i32, i32) {
    %c0_i32 = arith.constant 0 : i32
    %c0_i32_0 = arith.constant 0 : i32
    %c0_i32_1 = arith.constant 0 : i32
    return %c0_i32, %c0_i32_0 : i32, i32
  }
  func.func @transform_2(%arg0: i32) -> (i32, i32) {
    %c0_i32 = arith.constant 0 : i32
    %c0_i32_0 = arith.constant 0 : i32
    %c0_i32_1 = arith.constant 0 : i32
    return %c0_i32, %c0_i32_0 : i32, i32
  }
  func.func @transform_3(%arg0: i32) -> (i32, i32, i32) {
    %c0_i32 = arith.constant 0 : i32
    %c0_i32_0 = arith.constant 0 : i32
    %c0_i32_1 = arith.constant 0 : i32
    return %arg0, %c0_i32, %c0_i32_0 : i32, i32, i32
  }
  func.func @transform_4(%arg0: i32) -> (i32, i32, i32) {
    %c0_i32 = arith.constant 0 : i32
    %c0_i32_0 = arith.constant 0 : i32
    %c0_i32_1 = arith.constant 0 : i32
    return %arg0, %c0_i32, %c0_i32_0 : i32, i32, i32
  }
}

module attributes {stable_mosaic.version = 11 : i64} {
  func.func @_bnrelu_conv_stats_kernel(%arg0: i32, %arg1: memref<1x8x64xbf16, #tpu.memory_space<vmem>>, %arg2: memref<8x1xf32, #tpu.memory_space<vmem>>, %arg3: memref<8x1xf32, #tpu.memory_space<vmem>>, %arg4: memref<8x72xbf16, #tpu.memory_space<vmem>>, %arg5: memref<8x1xf32, #tpu.memory_space<vmem>>, %arg6: memref<1x8x64xf32, #tpu.memory_space<vmem>>, %arg7: memref<1x8x2xf32, #tpu.memory_space<vmem>>, %arg8: memref<8x82xbf16, #tpu.memory_space<vmem>>, %arg9: memref<72x64xbf16, #tpu.memory_space<vmem>>) attributes {dimension_semantics = [#tpu.dimension_semantics<parallel>], iteration_bounds = array<i64: 2>, scalar_prefetch = 0 : i64, scratch_operands = 2 : i64, tpu.core_type = #tpu.core_type<tc>, window_params = [{transform_indices = @transform_0, window_bounds = array<i64: 1, 8, 64>}, {pipeline_mode = #tpu.pipeline_mode<synchronous>, transform_indices = @transform_1, window_bounds = array<i64: 8, 1>}, {pipeline_mode = #tpu.pipeline_mode<synchronous>, transform_indices = @transform_2, window_bounds = array<i64: 8, 1>}, {pipeline_mode = #tpu.pipeline_mode<synchronous>, transform_indices = @transform_3, window_bounds = array<i64: 8, 72>}, {pipeline_mode = #tpu.pipeline_mode<synchronous>, transform_indices = @transform_4, window_bounds = array<i64: 8, 1>}, {transform_indices = @transform_5, window_bounds = array<i64: 1, 8, 64>}, {transform_indices = @transform_6, window_bounds = array<i64: 1, 8, 2>}]} {
    %c0 = arith.constant 0 : index
    %c0_0 = arith.constant 0 : index
    %c0_1 = arith.constant 0 : index
    %0 = vector.load %arg1[%c0, %c0_0, %c0_1] : memref<1x8x64xbf16, #tpu.memory_space<vmem>>, vector<1x8x64xbf16>
    %1 = vector.shape_cast %0 : vector<1x8x64xbf16> to vector<8x64xbf16>
    %2 = arith.extf %1 : vector<8x64xbf16> to vector<8x64xf32>
    %c0_2 = arith.constant 0 : index
    %c0_3 = arith.constant 0 : index
    %3 = vector.load %arg2[%c0_2, %c0_3] : memref<8x1xf32, #tpu.memory_space<vmem>>, vector<8x1xf32>
    %4 = vector.broadcast %3 : vector<8x1xf32> to vector<8x64xf32>
    %5 = arith.mulf %2, %4 : vector<8x64xf32>
    %c0_4 = arith.constant 0 : index
    %c0_5 = arith.constant 0 : index
    %6 = vector.load %arg3[%c0_4, %c0_5] : memref<8x1xf32, #tpu.memory_space<vmem>>, vector<8x1xf32>
    %7 = vector.broadcast %6 : vector<8x1xf32> to vector<8x64xf32>
    %8 = arith.addf %5, %7 : vector<8x64xf32>
    %cst = arith.constant 0.000000e+00 : f32
    %9 = vector.broadcast %cst : f32 to vector<8x64xf32>
    %10 = arith.maximumf %8, %9 : vector<8x64xf32>
    %cst_6 = arith.constant 0.000000e+00 : bf16
    %11 = vector.broadcast %cst_6 : bf16 to vector<8x9xbf16>
    %c0_7 = arith.constant 0 : index
    %c0_8 = arith.constant 0 : index
    %12 = vector.load %arg8[%c0_7, %c0_8] : memref<8x82xbf16, #tpu.memory_space<vmem>>, vector<8x9xbf16>
    tpu.vector_store %arg8[%c0_7, %c0_8], %11 {strides = array<i32>} : memref<8x82xbf16, #tpu.memory_space<vmem>>, vector<8x9xbf16>,
    %c0_9 = arith.constant 0 : index
    %c73 = arith.constant 73 : index
    %13 = vector.load %arg8[%c0_9, %c73] : memref<8x82xbf16, #tpu.memory_space<vmem>>, vector<8x9xbf16>
    tpu.vector_store %arg8[%c0_9, %c73], %11 {strides = array<i32>} : memref<8x82xbf16, #tpu.memory_space<vmem>>, vector<8x9xbf16>,
    %14 = arith.truncf %10 : vector<8x64xf32> to vector<8x64xbf16>
    %c0_10 = arith.constant 0 : index
    %c9 = arith.constant 9 : index
    %15 = vector.load %arg8[%c0_10, %c9] : memref<8x82xbf16, #tpu.memory_space<vmem>>, vector<8x64xbf16>
    tpu.vector_store %arg8[%c0_10, %c9], %14 {strides = array<i32>} : memref<8x82xbf16, #tpu.memory_space<vmem>>, vector<8x64xbf16>,
    %16 = tpu.iota {dimensions = array<i32: 1>} : vector<1x64xi32>
    %c8_i32 = arith.constant 8 : i32
    %c0_i32 = arith.constant 0 : i32
    %17 = arith.cmpi eq, %c8_i32, %c0_i32 : i32
    %c1_i32 = arith.constant 1 : i32
    %18 = arith.select %17, %c1_i32, %c8_i32 : i32
    %19 = vector.broadcast %18 : i32 to vector<1x64xi32>
    %20 = arith.remsi %16, %19 : vector<1x64xi32>
    %c0_i32_11 = arith.constant 0 : i32
    %21 = vector.broadcast %c0_i32_11 : i32 to vector<1x64xi32>
    %22 = arith.cmpi ne, %20, %21 : vector<1x64xi32>
    %c0_i32_12 = arith.constant 0 : i32
    %23 = vector.broadcast %c0_i32_12 : i32 to vector<1x64xi32>
    %24 = arith.cmpi slt, %20, %23 : vector<1x64xi32>
    %c0_i32_13 = arith.constant 0 : i32
    %25 = arith.cmpi slt, %18, %c0_i32_13 : i32
    %26 = vector.broadcast %25 : i1 to vector<1x64xi1>
    %27 = vector.broadcast %26 : vector<1x64xi1> to vector<1x64xi1>
    %28 = arith.xori %24, %27 : vector<1x64xi1>
    %29 = arith.andi %28, %22 : vector<1x64xi1>
    %30 = vector.broadcast %18 : i32 to vector<1x64xi32>
    %31 = arith.addi %20, %30 : vector<1x64xi32>
    %32 = arith.select %29, %31, %20 : vector<1x64xi1>, vector<1x64xi32>
    %c0_14 = arith.constant 0 : index
    %c0_15 = arith.constant 0 : index
    %33 = vector.load %arg8[%c0_14, %c0_15] : memref<8x82xbf16, #tpu.memory_space<vmem>>, vector<8x64xbf16>
    %c-1_i32 = arith.constant -1 : i32
    %34 = vector.broadcast %c-1_i32 : i32 to vector<1x64xi32>
    %35 = arith.addi %32, %34 : vector<1x64xi32>
    %c0_i32_16 = arith.constant 0 : i32
    %36 = vector.broadcast %c0_i32_16 : i32 to vector<1x64xi32>
    %37 = arith.cmpi sge, %35, %36 : vector<1x64xi32>
    %c8_i32_17 = arith.constant 8 : i32
    %38 = vector.broadcast %c8_i32_17 : i32 to vector<1x64xi32>
    %39 = arith.cmpi slt, %35, %38 : vector<1x64xi32>
    %40 = arith.andi %37, %39 : vector<1x64xi1>
    %cst_18 = arith.constant 0.000000e+00 : bf16
    %41 = vector.broadcast %cst_18 : bf16 to vector<8x64xbf16>
    %42 = vector.shape_cast %40 : vector<1x64xi1> to vector<1x64xi1>
    %43 = vector.broadcast %42 : vector<1x64xi1> to vector<8x64xi1>
    %44 = arith.select %43, %33, %41 : vector<8x64xi1>, vector<8x64xbf16>
    %c0_19 = arith.constant 0 : index
    %c0_20 = arith.constant 0 : index
    %45 = vector.load %arg9[%c0_19, %c0_20] : memref<72x64xbf16, #tpu.memory_space<vmem>>, vector<8x64xbf16>
    tpu.vector_store %arg9[%c0_19, %c0_20], %44 {strides = array<i32>} : memref<72x64xbf16, #tpu.memory_space<vmem>>, vector<8x64xbf16>,
    %c0_21 = arith.constant 0 : index
    %c1 = arith.constant 1 : index
    %46 = vector.load %arg8[%c0_21, %c1] : memref<8x82xbf16, #tpu.memory_space<vmem>>, vector<8x64xbf16>
    %c0_i32_22 = arith.constant 0 : i32
    %47 = vector.broadcast %c0_i32_22 : i32 to vector<1x64xi32>
    %48 = arith.addi %32, %47 : vector<1x64xi32>
    %c0_i32_23 = arith.constant 0 : i32
    %49 = vector.broadcast %c0_i32_23 : i32 to vector<1x64xi32>
    %50 = arith.cmpi sge, %48, %49 : vector<1x64xi32>
    %c8_i32_24 = arith.constant 8 : i32
    %51 = vector.broadcast %c8_i32_24 : i32 to vector<1x64xi32>
    %52 = arith.cmpi slt, %48, %51 : vector<1x64xi32>
    %53 = arith.andi %50, %52 : vector<1x64xi1>
    %cst_25 = arith.constant 0.000000e+00 : bf16
    %54 = vector.broadcast %cst_25 : bf16 to vector<8x64xbf16>
    %55 = vector.shape_cast %53 : vector<1x64xi1> to vector<1x64xi1>
    %56 = vector.broadcast %55 : vector<1x64xi1> to vector<8x64xi1>
    %57 = arith.select %56, %46, %54 : vector<8x64xi1>, vector<8x64xbf16>
    %c8 = arith.constant 8 : index
    %c0_26 = arith.constant 0 : index
    %58 = vector.load %arg9[%c8, %c0_26] : memref<72x64xbf16, #tpu.memory_space<vmem>>, vector<8x64xbf16>
    tpu.vector_store %arg9[%c8, %c0_26], %57 {strides = array<i32>} : memref<72x64xbf16, #tpu.memory_space<vmem>>, vector<8x64xbf16>,
    %c0_27 = arith.constant 0 : index
    %c2 = arith.constant 2 : index
    %59 = vector.load %arg8[%c0_27, %c2] : memref<8x82xbf16, #tpu.memory_space<vmem>>, vector<8x64xbf16>
    %c1_i32_28 = arith.constant 1 : i32
    %60 = vector.broadcast %c1_i32_28 : i32 to vector<1x64xi32>
    %61 = arith.addi %32, %60 : vector<1x64xi32>
    %c0_i32_29 = arith.constant 0 : i32
    %62 = vector.broadcast %c0_i32_29 : i32 to vector<1x64xi32>
    %63 = arith.cmpi sge, %61, %62 : vector<1x64xi32>
    %c8_i32_30 = arith.constant 8 : i32
    %64 = vector.broadcast %c8_i32_30 : i32 to vector<1x64xi32>
    %65 = arith.cmpi slt, %61, %64 : vector<1x64xi32>
    %66 = arith.andi %63, %65 : vector<1x64xi1>
    %cst_31 = arith.constant 0.000000e+00 : bf16
    %67 = vector.broadcast %cst_31 : bf16 to vector<8x64xbf16>
    %68 = vector.shape_cast %66 : vector<1x64xi1> to vector<1x64xi1>
    %69 = vector.broadcast %68 : vector<1x64xi1> to vector<8x64xi1>
    %70 = arith.select %69, %59, %67 : vector<8x64xi1>, vector<8x64xbf16>
    %c16 = arith.constant 16 : index
    %c0_32 = arith.constant 0 : index
    %71 = vector.load %arg9[%c16, %c0_32] : memref<72x64xbf16, #tpu.memory_space<vmem>>, vector<8x64xbf16>
    tpu.vector_store %arg9[%c16, %c0_32], %70 {strides = array<i32>} : memref<72x64xbf16, #tpu.memory_space<vmem>>, vector<8x64xbf16>,
    %c0_33 = arith.constant 0 : index
    %c8_34 = arith.constant 8 : index
    %72 = vector.load %arg8[%c0_33, %c8_34] : memref<8x82xbf16, #tpu.memory_space<vmem>>, vector<8x64xbf16>
    %c-1_i32_35 = arith.constant -1 : i32
    %73 = vector.broadcast %c-1_i32_35 : i32 to vector<1x64xi32>
    %74 = arith.addi %32, %73 : vector<1x64xi32>
    %c0_i32_36 = arith.constant 0 : i32
    %75 = vector.broadcast %c0_i32_36 : i32 to vector<1x64xi32>
    %76 = arith.cmpi sge, %74, %75 : vector<1x64xi32>
    %c8_i32_37 = arith.constant 8 : i32
    %77 = vector.broadcast %c8_i32_37 : i32 to vector<1x64xi32>
    %78 = arith.cmpi slt, %74, %77 : vector<1x64xi32>
    %79 = arith.andi %76, %78 : vector<1x64xi1>
    %cst_38 = arith.constant 0.000000e+00 : bf16
    %80 = vector.broadcast %cst_38 : bf16 to vector<8x64xbf16>
    %81 = vector.shape_cast %79 : vector<1x64xi1> to vector<1x64xi1>
    %82 = vector.broadcast %81 : vector<1x64xi1> to vector<8x64xi1>
    %83 = arith.select %82, %72, %80 : vector<8x64xi1>, vector<8x64xbf16>
    %c24 = arith.constant 24 : index
    %c0_39 = arith.constant 0 : index
    %84 = vector.load %arg9[%c24, %c0_39] : memref<72x64xbf16, #tpu.memory_space<vmem>>, vector<8x64xbf16>
    tpu.vector_store %arg9[%c24, %c0_39], %83 {strides = array<i32>} : memref<72x64xbf16, #tpu.memory_space<vmem>>, vector<8x64xbf16>,
    %c0_40 = arith.constant 0 : index
    %c9_41 = arith.constant 9 : index
    %85 = vector.load %arg8[%c0_40, %c9_41] : memref<8x82xbf16, #tpu.memory_space<vmem>>, vector<8x64xbf16>
    %c0_i32_42 = arith.constant 0 : i32
    %86 = vector.broadcast %c0_i32_42 : i32 to vector<1x64xi32>
    %87 = arith.addi %32, %86 : vector<1x64xi32>
    %c0_i32_43 = arith.constant 0 : i32
    %88 = vector.broadcast %c0_i32_43 : i32 to vector<1x64xi32>
    %89 = arith.cmpi sge, %87, %88 : vector<1x64xi32>
    %c8_i32_44 = arith.constant 8 : i32
    %90 = vector.broadcast %c8_i32_44 : i32 to vector<1x64xi32>
    %91 = arith.cmpi slt, %87, %90 : vector<1x64xi32>
    %92 = arith.andi %89, %91 : vector<1x64xi1>
    %cst_45 = arith.constant 0.000000e+00 : bf16
    %93 = vector.broadcast %cst_45 : bf16 to vector<8x64xbf16>
    %94 = vector.shape_cast %92 : vector<1x64xi1> to vector<1x64xi1>
    %95 = vector.broadcast %94 : vector<1x64xi1> to vector<8x64xi1>
    %96 = arith.select %95, %85, %93 : vector<8x64xi1>, vector<8x64xbf16>
    %c32 = arith.constant 32 : index
    %c0_46 = arith.constant 0 : index
    %97 = vector.load %arg9[%c32, %c0_46] : memref<72x64xbf16, #tpu.memory_space<vmem>>, vector<8x64xbf16>
    tpu.vector_store %arg9[%c32, %c0_46], %96 {strides = array<i32>} : memref<72x64xbf16, #tpu.memory_space<vmem>>, vector<8x64xbf16>,
    %c0_47 = arith.constant 0 : index
    %c10 = arith.constant 10 : index
    %98 = vector.load %arg8[%c0_47, %c10] : memref<8x82xbf16, #tpu.memory_space<vmem>>, vector<8x64xbf16>
    %c1_i32_48 = arith.constant 1 : i32
    %99 = vector.broadcast %c1_i32_48 : i32 to vector<1x64xi32>
    %100 = arith.addi %32, %99 : vector<1x64xi32>
    %c0_i32_49 = arith.constant 0 : i32
    %101 = vector.broadcast %c0_i32_49 : i32 to vector<1x64xi32>
    %102 = arith.cmpi sge, %100, %101 : vector<1x64xi32>
    %c8_i32_50 = arith.constant 8 : i32
    %103 = vector.broadcast %c8_i32_50 : i32 to vector<1x64xi32>
    %104 = arith.cmpi slt, %100, %103 : vector<1x64xi32>
    %105 = arith.andi %102, %104 : vector<1x64xi1>
    %cst_51 = arith.constant 0.000000e+00 : bf16
    %106 = vector.broadcast %cst_51 : bf16 to vector<8x64xbf16>
    %107 = vector.shape_cast %105 : vector<1x64xi1> to vector<1x64xi1>
    %108 = vector.broadcast %107 : vector<1x64xi1> to vector<8x64xi1>
    %109 = arith.select %108, %98, %106 : vector<8x64xi1>, vector<8x64xbf16>
    %c40 = arith.constant 40 : index
    %c0_52 = arith.constant 0 : index
    %110 = vector.load %arg9[%c40, %c0_52] : memref<72x64xbf16, #tpu.memory_space<vmem>>, vector<8x64xbf16>
    tpu.vector_store %arg9[%c40, %c0_52], %109 {strides = array<i32>} : memref<72x64xbf16, #tpu.memory_space<vmem>>, vector<8x64xbf16>,
    %c0_53 = arith.constant 0 : index
    %c16_54 = arith.constant 16 : index
    %111 = vector.load %arg8[%c0_53, %c16_54] : memref<8x82xbf16, #tpu.memory_space<vmem>>, vector<8x64xbf16>
    %c-1_i32_55 = arith.constant -1 : i32
    %112 = vector.broadcast %c-1_i32_55 : i32 to vector<1x64xi32>
    %113 = arith.addi %32, %112 : vector<1x64xi32>
    %c0_i32_56 = arith.constant 0 : i32
    %114 = vector.broadcast %c0_i32_56 : i32 to vector<1x64xi32>
    %115 = arith.cmpi sge, %113, %114 : vector<1x64xi32>
    %c8_i32_57 = arith.constant 8 : i32
    %116 = vector.broadcast %c8_i32_57 : i32 to vector<1x64xi32>
    %117 = arith.cmpi slt, %113, %116 : vector<1x64xi32>
    %118 = arith.andi %115, %117 : vector<1x64xi1>
    %cst_58 = arith.constant 0.000000e+00 : bf16
    %119 = vector.broadcast %cst_58 : bf16 to vector<8x64xbf16>
    %120 = vector.shape_cast %118 : vector<1x64xi1> to vector<1x64xi1>
    %121 = vector.broadcast %120 : vector<1x64xi1> to vector<8x64xi1>
    %122 = arith.select %121, %111, %119 : vector<8x64xi1>, vector<8x64xbf16>
    %c48 = arith.constant 48 : index
    %c0_59 = arith.constant 0 : index
    %123 = vector.load %arg9[%c48, %c0_59] : memref<72x64xbf16, #tpu.memory_space<vmem>>, vector<8x64xbf16>
    tpu.vector_store %arg9[%c48, %c0_59], %122 {strides = array<i32>} : memref<72x64xbf16, #tpu.memory_space<vmem>>, vector<8x64xbf16>,
    %c0_60 = arith.constant 0 : index
    %c17 = arith.constant 17 : index
    %124 = vector.load %arg8[%c0_60, %c17] : memref<8x82xbf16, #tpu.memory_space<vmem>>, vector<8x64xbf16>
    %c0_i32_61 = arith.constant 0 : i32
    %125 = vector.broadcast %c0_i32_61 : i32 to vector<1x64xi32>
    %126 = arith.addi %32, %125 : vector<1x64xi32>
    %c0_i32_62 = arith.constant 0 : i32
    %127 = vector.broadcast %c0_i32_62 : i32 to vector<1x64xi32>
    %128 = arith.cmpi sge, %126, %127 : vector<1x64xi32>
    %c8_i32_63 = arith.constant 8 : i32
    %129 = vector.broadcast %c8_i32_63 : i32 to vector<1x64xi32>
    %130 = arith.cmpi slt, %126, %129 : vector<1x64xi32>
    %131 = arith.andi %128, %130 : vector<1x64xi1>
    %cst_64 = arith.constant 0.000000e+00 : bf16
    %132 = vector.broadcast %cst_64 : bf16 to vector<8x64xbf16>
    %133 = vector.shape_cast %131 : vector<1x64xi1> to vector<1x64xi1>
    %134 = vector.broadcast %133 : vector<1x64xi1> to vector<8x64xi1>
    %135 = arith.select %134, %124, %132 : vector<8x64xi1>, vector<8x64xbf16>
    %c56 = arith.constant 56 : index
    %c0_65 = arith.constant 0 : index
    %136 = vector.load %arg9[%c56, %c0_65] : memref<72x64xbf16, #tpu.memory_space<vmem>>, vector<8x64xbf16>
    tpu.vector_store %arg9[%c56, %c0_65], %135 {strides = array<i32>} : memref<72x64xbf16, #tpu.memory_space<vmem>>, vector<8x64xbf16>,
    %c0_66 = arith.constant 0 : index
    %c18 = arith.constant 18 : index
    %137 = vector.load %arg8[%c0_66, %c18] : memref<8x82xbf16, #tpu.memory_space<vmem>>, vector<8x64xbf16>
    %c1_i32_67 = arith.constant 1 : i32
    %138 = vector.broadcast %c1_i32_67 : i32 to vector<1x64xi32>
    %139 = arith.addi %32, %138 : vector<1x64xi32>
    %c0_i32_68 = arith.constant 0 : i32
    %140 = vector.broadcast %c0_i32_68 : i32 to vector<1x64xi32>
    %141 = arith.cmpi sge, %139, %140 : vector<1x64xi32>
    %c8_i32_69 = arith.constant 8 : i32
    %142 = vector.broadcast %c8_i32_69 : i32 to vector<1x64xi32>
    %143 = arith.cmpi slt, %139, %142 : vector<1x64xi32>
    %144 = arith.andi %141, %143 : vector<1x64xi1>
    %cst_70 = arith.constant 0.000000e+00 : bf16
    %145 = vector.broadcast %cst_70 : bf16 to vector<8x64xbf16>
    %146 = vector.shape_cast %144 : vector<1x64xi1> to vector<1x64xi1>
    %147 = vector.broadcast %146 : vector<1x64xi1> to vector<8x64xi1>
    %148 = arith.select %147, %137, %145 : vector<8x64xi1>, vector<8x64xbf16>
    %c64 = arith.constant 64 : index
    %c0_71 = arith.constant 0 : index
    %149 = vector.load %arg9[%c64, %c0_71] : memref<72x64xbf16, #tpu.memory_space<vmem>>, vector<8x64xbf16>
    tpu.vector_store %arg9[%c64, %c0_71], %148 {strides = array<i32>} : memref<72x64xbf16, #tpu.memory_space<vmem>>, vector<8x64xbf16>,
    %c0_72 = arith.constant 0 : index
    %c0_73 = arith.constant 0 : index
    %150 = vector.load %arg4[%c0_72, %c0_73] : memref<8x72xbf16, #tpu.memory_space<vmem>>, vector<8x72xbf16>
    %c0_74 = arith.constant 0 : index
    %c0_75 = arith.constant 0 : index
    %151 = vector.load %arg9[%c0_74, %c0_75] : memref<72x64xbf16, #tpu.memory_space<vmem>>, vector<72x64xbf16>
    %cst_76 = arith.constant dense<0.000000e+00> : vector<8x64xf32>
    %152 = tpu.matmul %150, %151, %cst_76 {dimension_numbers = #tpu.dot_dimension_numbers<[1], [0], [0], [1], [0, 0, 1, 1], [], []>} : vector<8x72xbf16>, vector<72x64xbf16>, vector<8x64xf32> -> vector<8x64xf32>
    %c0_77 = arith.constant 0 : index
    %c0_78 = arith.constant 0 : index
    %153 = vector.load %arg5[%c0_77, %c0_78] : memref<8x1xf32, #tpu.memory_space<vmem>>, vector<8x1xf32>
    %154 = vector.broadcast %153 : vector<8x1xf32> to vector<8x64xf32>
    %155 = arith.addf %152, %154 : vector<8x64xf32>
    %c0_79 = arith.constant 0 : index
    %c0_80 = arith.constant 0 : index
    %c0_81 = arith.constant 0 : index
    %156 = vector.load %arg6[%c0_79, %c0_80, %c0_81] : memref<1x8x64xf32, #tpu.memory_space<vmem>>, vector<1x8x64xf32>
    %157 = vector.shape_cast %156 : vector<1x8x64xf32> to vector<8x64xf32>
    %158 = vector.shape_cast %155 : vector<8x64xf32> to vector<1x8x64xf32>
    tpu.vector_store %arg6[%c0_79, %c0_80, %c0_81], %158 {strides = array<i32>} : memref<1x8x64xf32, #tpu.memory_space<vmem>>, vector<1x8x64xf32>,
    %cst_82 = arith.constant dense<0.000000e+00> : vector<8xf32>
    %159 = vector.multi_reduction <add>, %155, %cst_82 [1] : vector<8x64xf32> to vector<8xf32>
    %160 = vector.shape_cast %159 : vector<8xf32> to vector<8x1xf32>
    %c0_83 = arith.constant 0 : index
    %c0_84 = arith.constant 0 : index
    %c0_85 = arith.constant 0 : index
    %161 = vector.load %arg7[%c0_83, %c0_84, %c0_85] : memref<1x8x2xf32, #tpu.memory_space<vmem>>, vector<1x8x1xf32>
    %162 = vector.shape_cast %161 : vector<1x8x1xf32> to vector<8x1xf32>
    %163 = vector.shape_cast %160 : vector<8x1xf32> to vector<1x8x1xf32>
    tpu.vector_store %arg7[%c0_83, %c0_84, %c0_85], %163 {strides = array<i32>} : memref<1x8x2xf32, #tpu.memory_space<vmem>>, vector<1x8x1xf32>,
    %164 = arith.mulf %155, %155 : vector<8x64xf32>
    %cst_86 = arith.constant dense<0.000000e+00> : vector<8xf32>
    %165 = vector.multi_reduction <add>, %164, %cst_86 [1] : vector<8x64xf32> to vector<8xf32>
    %166 = vector.shape_cast %165 : vector<8xf32> to vector<8x1xf32>
    %c0_87 = arith.constant 0 : index
    %c0_88 = arith.constant 0 : index
    %c1_89 = arith.constant 1 : index
    %167 = vector.load %arg7[%c0_87, %c0_88, %c1_89] : memref<1x8x2xf32, #tpu.memory_space<vmem>>, vector<1x8x1xf32>
    %168 = vector.shape_cast %167 : vector<1x8x1xf32> to vector<8x1xf32>
    %169 = vector.shape_cast %166 : vector<8x1xf32> to vector<1x8x1xf32>
    tpu.vector_store %arg7[%c0_87, %c0_88, %c1_89], %169 {strides = array<i32>} : memref<1x8x2xf32, #tpu.memory_space<vmem>>, vector<1x8x1xf32>,
    return
  }
  func.func @transform_0(%arg0: i32) -> (i32, i32, i32) {
    %c0_i32 = arith.constant 0 : i32
    %c0_i32_0 = arith.constant 0 : i32
    %c0_i32_1 = arith.constant 0 : i32
    return %arg0, %c0_i32, %c0_i32_0 : i32, i32, i32
  }
  func.func @transform_1(%arg0: i32) -> (i32, i32) {
    %c0_i32 = arith.constant 0 : i32
    %c0_i32_0 = arith.constant 0 : i32
    %c0_i32_1 = arith.constant 0 : i32
    return %c0_i32, %c0_i32_0 : i32, i32
  }
  func.func @transform_2(%arg0: i32) -> (i32, i32) {
    %c0_i32 = arith.constant 0 : i32
    %c0_i32_0 = arith.constant 0 : i32
    %c0_i32_1 = arith.constant 0 : i32
    return %c0_i32, %c0_i32_0 : i32, i32
  }
  func.func @transform_3(%arg0: i32) -> (i32, i32) {
    %c0_i32 = arith.constant 0 : i32
    %c0_i32_0 = arith.constant 0 : i32
    %c0_i32_1 = arith.constant 0 : i32
    return %c0_i32, %c0_i32_0 : i32, i32
  }
  func.func @transform_4(%arg0: i32) -> (i32, i32) {
    %c0_i32 = arith.constant 0 : i32
    %c0_i32_0 = arith.constant 0 : i32
    %c0_i32_1 = arith.constant 0 : i32
    return %c0_i32, %c0_i32_0 : i32, i32
  }
  func.func @transform_5(%arg0: i32) -> (i32, i32, i32) {
    %c0_i32 = arith.constant 0 : i32
    %c0_i32_0 = arith.constant 0 : i32
    %c0_i32_1 = arith.constant 0 : i32
    return %arg0, %c0_i32, %c0_i32_0 : i32, i32, i32
  }
  func.func @transform_6(%arg0: i32) -> (i32, i32, i32) {
    %c0_i32 = arith.constant 0 : i32
    %c0_i32_0 = arith.constant 0 : i32
    %c0_i32_1 = arith.constant 0 : i32
    return %arg0, %c0_i32, %c0_i32_0 : i32, i32, i32
  }
}

</mosaic_0001>

<llo_original>
// kernel: down_forward.5
$region0: #{down_forward.5}
  #allocation0 [shape = 'u32[]', space=smem, size = 0x4, offset = 0x4, fixed_abs, tag = 'smem constant byte address 0x4 - core index']
  #allocation1 [shape = 'u32[144,128]{1,0:T(1,128)}', space=vmem, size = 0x12000, scoped, tag = 'internal scratch']
  %s0 = inlined_call_operand.vmem [shape: f32[2,8,64], index: 0, kind: input, shape index: {}]
  %s1 = inlined_call_operand.vmem [shape: f32[8,1], index: 1, kind: input, shape index: {}]
  %s2 = inlined_call_operand.vmem [shape: f32[8,1], index: 2, kind: input, shape index: {}]
  %s3 = inlined_call_operand.vmem [shape: f32[2,8,64], index: 3, kind: output, shape index: {}]
  %s4 = sld [smem:[#allocation0]]
  $region45: #{down_forward.5} parent=0
    _
  %s6 = ssub.s32 1, %s4
  %s7 = scalar_select 0, %s6, %s4
  loop: start=0, step=1, limit=4
  $region2: #{down_forward.5} parent=0 // loop_pre_header
    _
  $region3: #{down_forward.5} parent=0 // loop_header
    %s9 = sphi 0, %s13
    %p10 = scmp.ge.s32.totalorder %s9, 4
    %s19 = sphi 0, %s21
    %s22 = sphi 0, %s19
    %s23 = sphi 0, %s22
    %s39 = sphi 0, %s23
    %s43 = sphi 0, %s43
    %s45 = sphi 0, %s43
    %s46 = sphi 0, %s45
    %s60 = sphi 0, %s46
    %s64 = sphi 0, %s64
    %s66 = sphi 0, %s64
    %s67 = sphi 0, %s66
    %s81 = sphi 0, %s67
    %s87 = sphi 0, %s89
    %s90 = sphi 0, %s87
    %s91 = sphi 0, %s90
    %s107 = sphi 0, %s91
  $region4: #{down_forward.5} parent=0 // loop_header_branch
    %12 = sbr.rel (%p10) target = $region8
  $region5: #{down_forward.5} parent=0 // loop_body
    %s14 = ssub.s32 %s9, 1
    %s15 = ssub.s32 %s9, 2
    %s16 = sadd.s32 %s9, 1
    %s17 = ssub.s32 %s9, %s16
    %p18 = scmp.eq.s32.totalorder %s17, 0
    %s20 = sadd.s32 %s19, 1
    %s21 = scalar_select %p18, %s19, %s20
    %p24 = pneg %p18
    %p25 = scmp.eq.s32.totalorder %s9, 1
    %p26 = por %p24, %p25
    %p27 = scmp.ne.s32.totalorder %s19, %s22
    %p28 = scmp.eq.s32.totalorder %s9, 0
    %p29 = por %p27, %p28
    %p30 = scmp.ne.s32.totalorder %s19, %s22
    %p31 = scmp.eq.s32.totalorder %s14, 1
    %p32 = por %p30, %p31
    %p33 = scmp.ne.s32.totalorder %s22, %s23
    %p34 = scmp.eq.s32.totalorder %s14, 0
    %p35 = por %p33, %p34
    %p36 = scmp.ne.s32.totalorder %s22, %s23
    %p37 = scmp.eq.s32.totalorder %s15, 1
    %p38 = por %p36, %p37
    %p40 = scmp.ne.s32.totalorder %s23, %s39
    %p41 = scmp.eq.s32.totalorder %s15, 0
    %p42 = por %p40, %p41
    %s44 = sadd.s32 %s43, 1
    %p47 = scmp.eq.s32.totalorder %s9, 1
    %p48 = scmp.ne.s32.totalorder %s43, %s45
    %p49 = scmp.eq.s32.totalorder %s9, 0
    %p50 = por %p48, %p49
    %p51 = scmp.ne.s32.totalorder %s43, %s45
    %p52 = scmp.eq.s32.totalorder %s14, 1
    %p53 = por %p51, %p52
    %p54 = scmp.ne.s32.totalorder %s45, %s46
    %p55 = scmp.eq.s32.totalorder %s14, 0
    %p56 = por %p54, %p55
    %p57 = scmp.ne.s32.totalorder %s45, %s46
    %p58 = scmp.eq.s32.totalorder %s15, 1
    %p59 = por %p57, %p58
    %p61 = scmp.ne.s32.totalorder %s46, %s60
    %p62 = scmp.eq.s32.totalorder %s15, 0
    %p63 = por %p61, %p62
    %s65 = sadd.s32 %s64, 1
    %p68 = scmp.eq.s32.totalorder %s9, 1
    %p69 = scmp.ne.s32.totalorder %s64, %s66
    %p70 = scmp.eq.s32.totalorder %s9, 0
    %p71 = por %p69, %p70
    %p72 = scmp.ne.s32.totalorder %s64, %s66
    %p73 = scmp.eq.s32.totalorder %s14, 1
    %p74 = por %p72, %p73
    %p75 = scmp.ne.s32.totalorder %s66, %s67
    %p76 = scmp.eq.s32.totalorder %s14, 0
    %p77 = por %p75, %p76
    %p78 = scmp.ne.s32.totalorder %s66, %s67
    %p79 = scmp.eq.s32.totalorder %s15, 1
    %p80 = por %p78, %p79
    %p82 = scmp.ne.s32.totalorder %s67, %s81
    %p83 = scmp.eq.s32.totalorder %s15, 0
    %p84 = por %p82, %p83
    %s85 = ssub.s32 %s9, %s16
    %p86 = scmp.eq.s32.totalorder %s85, 0
    %s88 = sadd.s32 %s87, 1
    %s89 = scalar_select %p86, %s87, %s88
    %p92 = pneg %p86
    %p93 = scmp.eq.s32.totalorder %s9, 1
    %p94 = por %p92, %p93
    %p95 = scmp.ne.s32.totalorder %s87, %s90
    %p96 = scmp.eq.s32.totalorder %s9, 0
    %p97 = por %p95, %p96
    %p98 = scmp.ne.s32.totalorder %s87, %s90
    %p99 = scmp.eq.s32.totalorder %s14, 1
    %p100 = por %p98, %p99
    %p101 = scmp.ne.s32.totalorder %s90, %s91
    %p102 = scmp.eq.s32.totalorder %s14, 0
    %p103 = por %p101, %p102
    %p104 = scmp.ne.s32.totalorder %s90, %s91
    %p105 = scmp.eq.s32.totalorder %s15, 1
    %p106 = por %p104, %p105
    %p108 = scmp.ne.s32.totalorder %s91, %s107
    %p109 = scmp.eq.s32.totalorder %s15, 0
    %p110 = por %p108, %p109
    %p111 = scmp.le.s32.totalorder 1, %s9
    %p112 = scmp.lt.s32.totalorder %s9, 3
    %p113 = pnand %p111, %p112
    %p114 = pneg %p113
    // Predicated region
    $region9: #{down_forward.5} parent=5 // pred_check
      _
    $region10: #{down_forward.5} parent=5 // pred_check_branch
      %116 = sbr.rel (%p113) target = $region12
    $region11: #{down_forward.5} parent=5 // pred_region
      %s117 = ssub.s32 %s9, 1
      // Predicated region
      $region13: #{down_forward.5} parent=11 // pred_check
        %p118 = pneg %p56
      $region14: #{down_forward.5} parent=11 // pred_check_branch
        %120 = sbr.rel (%p118) target = $region16
      $region15: #{down_forward.5} parent=11 // pred_region
        _
      $region16: #{down_forward.5} parent=11 // pred_fallthru
        _
      // Predicated region
      $region17: #{down_forward.5} parent=11 // pred_check
        %p121 = pneg %p77
      $region18: #{down_forward.5} parent=11 // pred_check_branch
        %123 = sbr.rel (%p121) target = $region20
      $region19: #{down_forward.5} parent=11 // pred_region
        _
      $region20: #{down_forward.5} parent=11 // pred_fallthru
        _
    $region12: #{down_forward.5} parent=5 // pred_fallthru
      _
    %p124 = scmp.lt.s32.totalorder %s9, 2
    // Predicated region
    $region21: #{down_forward.5} parent=5 // pred_check
      %p125 = pneg %p124
    $region22: #{down_forward.5} parent=5 // pred_check_branch
      %127 = sbr.rel (%p125) target = $region24
    $region23: #{down_forward.5} parent=5 // pred_region
      // Predicated region
      $region25: #{down_forward.5} parent=23 // pred_check
        %p128 = pneg %p29
      $region26: #{down_forward.5} parent=23 // pred_check_branch
        %130 = sbr.rel (%p128) target = $region28
      $region27: #{down_forward.5} parent=23 // pred_region
        %p131 = scmp.lt.s32.totalorder %s9, 1
        %s132 = scalar_select %p131, %s9, 1
        %s133 = smul.addr %s132, 8
        %s134 = scalar_lea.vmem %s0, %s133
      $region28: #{down_forward.5} parent=23 // pred_fallthru
        _
    $region24: #{down_forward.5} parent=5 // pred_fallthru
      _
    %p135 = scmp.le.s32.totalorder 1, %s9
    %p136 = scmp.lt.s32.totalorder %s9, 3
    %p137 = pnand %p135, %p136
    %p138 = pneg %p137
    // Predicated region
    $region29: #{down_forward.5} parent=5 // pred_check
      _
    $region30: #{down_forward.5} parent=5 // pred_check_branch
      %140 = sbr.rel (%p137) target = $region32
    $region31: #{down_forward.5} parent=5 // pred_region
      %s141 = ssub.s32 %s9, 1
      %p142 = scmp.lt.s32.totalorder %s14, 1
      %s143 = scalar_select %p142, %s14, 1
      %s144 = smul.addr %s143, 8
      %s145 = scalar_lea.vmem %s0, %s144
      %p146 = pneg %p35
      %p147 = pneg %p32
      %p148 = pneg %p56
      %p149 = pneg %p53
      %p150 = pneg %p77
      %p151 = pneg %p74
      %p152 = pneg %p103
      %p153 = pneg %p100
      %p154 = scmp.lt.s32.totalorder %s14, 1
      %s155 = scalar_select %p154, %s14, 1
      %s156 = smul.addr %s155, 8
      %s157 = scalar_lea.vmem %s3, %s156
      %p158 = scmp.lt.s32.totalorder %s14, 1
      %s159 = scalar_select %p158, %s14, 1
      %s160 = smul.addr %s159, 8
      %s161 = scalar_lea.vmem %s0, %s160
      %p162 = scmp.lt.s32.totalorder %s14, 1
      %s163 = scalar_select %p162, %s14, 1
      %s164 = smul.addr %s163, 8
      %s165 = scalar_lea.vmem %s3, %s164
      %v166 = vld [vmem:[%s161] sm:$0xff]
      %v167 = vld [vmem:[%s1] sm:$0xff]
      %169 = vset.pattern.permute.xlu0 0
      %170 = vperm.xlu0 %169, %v167
      %v171 = vpop.permute.xlu0 %170
      %v173 = vmul.f32 %v166, %v171
      %v174 = vld [vmem:[%s2] sm:$0xff]
      %176 = vset.pattern.permute.xlu0 0
      %177 = vperm.xlu0 %176, %v174
      %v178 = vpop.permute.xlu0 %177
      %v180 = vadd.f32 %v173, %v178
      %v181 = vmax.f32 %v180, 0.0
      %vm182 = vcmask 523264
      %183 = vst.msk [vmem:[%s165] sm:$0xff] %vm182, %v181
      %p184 = scmp.lt.s32.totalorder %s14, 1
      %s185 = scalar_select %p184, %s14, 1
      %s186 = smul.addr %s185, 8
      %s187 = scalar_lea.vmem %s3, %s186
      // Predicated region
      $region33: #{down_forward.5} parent=31 // pred_check
        %p188 = pneg %p100
      $region34: #{down_forward.5} parent=31 // pred_check_branch
        %190 = sbr.rel (%p188) target = $region36
      $region35: #{down_forward.5} parent=31 // pred_region
        _
      $region36: #{down_forward.5} parent=31 // pred_fallthru
        _
    $region32: #{down_forward.5} parent=5 // pred_fallthru
      _
    %p191 = scmp.le.s32.totalorder 2, %s9
    // Predicated region
    $region37: #{down_forward.5} parent=5 // pred_check
      %p192 = pneg %p191
    $region38: #{down_forward.5} parent=5 // pred_check_branch
      %194 = sbr.rel (%p192) target = $region40
    $region39: #{down_forward.5} parent=5 // pred_region
      %s195 = ssub.s32 %s9, 2
      // Predicated region
      $region41: #{down_forward.5} parent=39 // pred_check
        %p196 = pneg %p106
      $region42: #{down_forward.5} parent=39 // pred_check_branch
        %198 = sbr.rel (%p196) target = $region44
      $region43: #{down_forward.5} parent=39 // pred_region
        %p199 = scmp.lt.s32.totalorder %s15, 1
        %s200 = scalar_select %p199, %s15, 1
        %s201 = smul.addr %s200, 8
        %s202 = scalar_lea.vmem %s3, %s201
      $region44: #{down_forward.5} parent=39 // pred_fallthru
        _
    $region40: #{down_forward.5} parent=5 // pred_fallthru
      _
  $region6: #{down_forward.5} parent=0 // loop_footer
    %s13 = sadd.s32 1, %s9
  $region7: #{down_forward.5} parent=0 // loop_footer_branch
    %8 = sbr.rel target = $region3
  $region8: #{down_forward.5} parent=0 // loop_exit
    _

// kernel: down_forward.4
$region0: #{down_forward.4}
  #allocation0 [shape = 'u32[]', space=smem, size = 0x4, offset = 0x4, fixed_abs, tag = 'smem constant byte address 0x4 - core index']
  #allocation1 [shape = 'u32[144,128]{1,0:T(1,128)}', space=vmem, size = 0x12000, scoped, tag = 'internal scratch']
  #allocation2 [shape = 'bf16[8,82]{1,0:T(8,128)(2,1)}', space=vmem, size = 0x800, scoped, tag = 'scratch operand']
  #allocation3 [shape = 'bf16[72,64]{1,0:T(8,128)(2,1)}', space=vmem, size = 0x4800, scoped, tag = 'scratch operand']
  %s0 = inlined_call_operand.vmem [shape: bf16[2,8,64], index: 0, kind: input, shape index: {}]
  %s1 = inlined_call_operand.vmem [shape: f32[8,1], index: 1, kind: input, shape index: {}]
  %s2 = inlined_call_operand.vmem [shape: f32[8,1], index: 2, kind: input, shape index: {}]
  %s3 = inlined_call_operand.vmem [shape: bf16[8,72], index: 3, kind: input, shape index: {}]
  %s4 = inlined_call_operand.vmem [shape: f32[8,1], index: 4, kind: input, shape index: {}]
  %s5 = inlined_call_operand.vmem [shape: f32[2,8,64], index: 5, kind: output, shape index: {0}]
  %s6 = inlined_call_operand.vmem [shape: f32[2,8,2], index: 6, kind: output, shape index: {1}]
  %7 = xla_tuple %s5, %s6
  %s8 = sld [smem:[#allocation0]]
  $region61: #{down_forward.4} parent=0
    _
  %s10 = ssub.s32 1, %s8
  %s11 = scalar_select 0, %s10, %s8
  loop: start=0, step=1, limit=4
  $region2: #{down_forward.4} parent=0 // loop_pre_header
    _
  $region3: #{down_forward.4} parent=0 // loop_header
    %s13 = sphi 0, %s17
    %p14 = scmp.ge.s32.totalorder %s13, 4
    %s23 = sphi 0, %s25
    %s26 = sphi 0, %s23
    %s27 = sphi 0, %s26
    %s43 = sphi 0, %s27
    %s47 = sphi 0, %s47
    %s49 = sphi 0, %s47
    %s50 = sphi 0, %s49
    %s64 = sphi 0, %s50
    %s68 = sphi 0, %s68
    %s70 = sphi 0, %s68
    %s71 = sphi 0, %s70
    %s85 = sphi 0, %s71
    %s89 = sphi 0, %s89
    %s91 = sphi 0, %s89
    %s92 = sphi 0, %s91
    %s106 = sphi 0, %s92
    %s110 = sphi 0, %s110
    %s112 = sphi 0, %s110
    %s113 = sphi 0, %s112
    %s127 = sphi 0, %s113
    %s133 = sphi 0, %s135
    %s136 = sphi 0, %s133
    %s137 = sphi 0, %s136
    %s153 = sphi 0, %s137
    %s159 = sphi 0, %s161
    %s162 = sphi 0, %s159
    %s163 = sphi 0, %s162
    %s179 = sphi 0, %s163
  $region4: #{down_forward.4} parent=0 // loop_header_branch
    %16 = sbr.rel (%p14) target = $region8
  $region5: #{down_forward.4} parent=0 // loop_body
    %s18 = ssub.s32 %s13, 1
    %s19 = ssub.s32 %s13, 2
    %s20 = sadd.s32 %s13, 1
    %s21 = ssub.s32 %s13, %s20
    %p22 = scmp.eq.s32.totalorder %s21, 0
    %s24 = sadd.s32 %s23, 1
    %s25 = scalar_select %p22, %s23, %s24
    %p28 = pneg %p22
    %p29 = scmp.eq.s32.totalorder %s13, 1
    %p30 = por %p28, %p29
    %p31 = scmp.ne.s32.totalorder %s23, %s26
    %p32 = scmp.eq.s32.totalorder %s13, 0
    %p33 = por %p31, %p32
    %p34 = scmp.ne.s32.totalorder %s23, %s26
    %p35 = scmp.eq.s32.totalorder %s18, 1
    %p36 = por %p34, %p35
    %p37 = scmp.ne.s32.totalorder %s26, %s27
    %p38 = scmp.eq.s32.totalorder %s18, 0
    %p39 = por %p37, %p38
    %p40 = scmp.ne.s32.totalorder %s26, %s27
    %p41 = scmp.eq.s32.totalorder %s19, 1
    %p42 = por %p40, %p41
    %p44 = scmp.ne.s32.totalorder %s27, %s43
    %p45 = scmp.eq.s32.totalorder %s19, 0
    %p46 = por %p44, %p45
    %s48 = sadd.s32 %s47, 1
    %p51 = scmp.eq.s32.totalorder %s13, 1
    %p52 = scmp.ne.s32.totalorder %s47, %s49
    %p53 = scmp.eq.s32.totalorder %s13, 0
    %p54 = por %p52, %p53
    %p55 = scmp.ne.s32.totalorder %s47, %s49
    %p56 = scmp.eq.s32.totalorder %s18, 1
    %p57 = por %p55, %p56
    %p58 = scmp.ne.s32.totalorder %s49, %s50
    %p59 = scmp.eq.s32.totalorder %s18, 0
    %p60 = por %p58, %p59
    %p61 = scmp.ne.s32.totalorder %s49, %s50
    %p62 = scmp.eq.s32.totalorder %s19, 1
    %p63 = por %p61, %p62
    %p65 = scmp.ne.s32.totalorder %s50, %s64
    %p66 = scmp.eq.s32.totalorder %s19, 0
    %p67 = por %p65, %p66
    %s69 = sadd.s32 %s68, 1
    %p72 = scmp.eq.s32.totalorder %s13, 1
    %p73 = scmp.ne.s32.totalorder %s68, %s70
    %p74 = scmp.eq.s32.totalorder %s13, 0
    %p75 = por %p73, %p74
    %p76 = scmp.ne.s32.totalorder %s68, %s70
    %p77 = scmp.eq.s32.totalorder %s18, 1
    %p78 = por %p76, %p77
    %p79 = scmp.ne.s32.totalorder %s70, %s71
    %p80 = scmp.eq.s32.totalorder %s18, 0
    %p81 = por %p79, %p80
    %p82 = scmp.ne.s32.totalorder %s70, %s71
    %p83 = scmp.eq.s32.totalorder %s19, 1
    %p84 = por %p82, %p83
    %p86 = scmp.ne.s32.totalorder %s71, %s85
    %p87 = scmp.eq.s32.totalorder %s19, 0
    %p88 = por %p86, %p87
    %s90 = sadd.s32 %s89, 1
    %p93 = scmp.eq.s32.totalorder %s13, 1
    %p94 = scmp.ne.s32.totalorder %s89, %s91
    %p95 = scmp.eq.s32.totalorder %s13, 0
    %p96 = por %p94, %p95
    %p97 = scmp.ne.s32.totalorder %s89, %s91
    %p98 = scmp.eq.s32.totalorder %s18, 1
    %p99 = por %p97, %p98
    %p100 = scmp.ne.s32.totalorder %s91, %s92
    %p101 = scmp.eq.s32.totalorder %s18, 0
    %p102 = por %p100, %p101
    %p103 = scmp.ne.s32.totalorder %s91, %s92
    %p104 = scmp.eq.s32.totalorder %s19, 1
    %p105 = por %p103, %p104
    %p107 = scmp.ne.s32.totalorder %s92, %s106
    %p108 = scmp.eq.s32.totalorder %s19, 0
    %p109 = por %p107, %p108
    %s111 = sadd.s32 %s110, 1
    %p114 = scmp.eq.s32.totalorder %s13, 1
    %p115 = scmp.ne.s32.totalorder %s110, %s112
    %p116 = scmp.eq.s32.totalorder %s13, 0
    %p117 = por %p115, %p116
    %p118 = scmp.ne.s32.totalorder %s110, %s112
    %p119 = scmp.eq.s32.totalorder %s18, 1
    %p120 = por %p118, %p119
    %p121 = scmp.ne.s32.totalorder %s112, %s113
    %p122 = scmp.eq.s32.totalorder %s18, 0
    %p123 = por %p121, %p122
    %p124 = scmp.ne.s32.totalorder %s112, %s113
    %p125 = scmp.eq.s32.totalorder %s19, 1
    %p126 = por %p124, %p125
    %p128 = scmp.ne.s32.totalorder %s113, %s127
    %p129 = scmp.eq.s32.totalorder %s19, 0
    %p130 = por %p128, %p129
    %s131 = ssub.s32 %s13, %s20
    %p132 = scmp.eq.s32.totalorder %s131, 0
    %s134 = sadd.s32 %s133, 1
    %s135 = scalar_select %p132, %s133, %s134
    %p138 = pneg %p132
    %p139 = scmp.eq.s32.totalorder %s13, 1
    %p140 = por %p138, %p139
    %p141 = scmp.ne.s32.totalorder %s133, %s136
    %p142 = scmp.eq.s32.totalorder %s13, 0
    %p143 = por %p141, %p142
    %p144 = scmp.ne.s32.totalorder %s133, %s136
    %p145 = scmp.eq.s32.totalorder %s18, 1
    %p146 = por %p144, %p145
    %p147 = scmp.ne.s32.totalorder %s136, %s137
    %p148 = scmp.eq.s32.totalorder %s18, 0
    %p149 = por %p147, %p148
    %p150 = scmp.ne.s32.totalorder %s136, %s137
    %p151 = scmp.eq.s32.totalorder %s19, 1
    %p152 = por %p150, %p151
    %p154 = scmp.ne.s32.totalorder %s137, %s153
    %p155 = scmp.eq.s32.totalorder %s19, 0
    %p156 = por %p154, %p155
    %s157 = ssub.s32 %s13, %s20
    %p158 = scmp.eq.s32.totalorder %s157, 0
    %s160 = sadd.s32 %s159, 1
    %s161 = scalar_select %p158, %s159, %s160
    %p164 = pneg %p158
    %p165 = scmp.eq.s32.totalorder %s13, 1
    %p166 = por %p164, %p165
    %p167 = scmp.ne.s32.totalorder %s159, %s162
    %p168 = scmp.eq.s32.totalorder %s13, 0
    %p169 = por %p167, %p168
    %p170 = scmp.ne.s32.totalorder %s159, %s162
    %p171 = scmp.eq.s32.totalorder %s18, 1
    %p172 = por %p170, %p171
    %p173 = scmp.ne.s32.totalorder %s162, %s163
    %p174 = scmp.eq.s32.totalorder %s18, 0
    %p175 = por %p173, %p174
    %p176 = scmp.ne.s32.totalorder %s162, %s163
    %p177 = scmp.eq.s32.totalorder %s19, 1
    %p178 = por %p176, %p177
    %p180 = scmp.ne.s32.totalorder %s163, %s179
    %p181 = scmp.eq.s32.totalorder %s19, 0
    %p182 = por %p180, %p181
    %p183 = scmp.le.s32.totalorder 1, %s13
    %p184 = scmp.lt.s32.totalorder %s13, 3
    %p185 = pnand %p183, %p184
    %p186 = pneg %p185
    // Predicated region
    $region9: #{down_forward.4} parent=5 // pred_check
      _
    $region10: #{down_forward.4} parent=5 // pred_check_branch
      %188 = sbr.rel (%p185) target = $region12
    $region11: #{down_forward.4} parent=5 // pred_region
      %s189 = ssub.s32 %s13, 1
      // Predicated region
      $region13: #{down_forward.4} parent=11 // pred_check
        %p190 = pneg %p60
      $region14: #{down_forward.4} parent=11 // pred_check_branch
        %192 = sbr.rel (%p190) target = $region16
      $region15: #{down_forward.4} parent=11 // pred_region
        _
      $region16: #{down_forward.4} parent=11 // pred_fallthru
        _
      // Predicated region
      $region17: #{down_forward.4} parent=11 // pred_check
        %p193 = pneg %p81
      $region18: #{down_forward.4} parent=11 // pred_check_branch
        %195 = sbr.rel (%p193) target = $region20
      $region19: #{down_forward.4} parent=11 // pred_region
        _
      $region20: #{down_forward.4} parent=11 // pred_fallthru
        _
      // Predicated region
      $region21: #{down_forward.4} parent=11 // pred_check
        %p196 = pneg %p102
      $region22: #{down_forward.4} parent=11 // pred_check_branch
        %198 = sbr.rel (%p196) target = $region24
      $region23: #{down_forward.4} parent=11 // pred_region
        _
      $region24: #{down_forward.4} parent=11 // pred_fallthru
        _
      // Predicated region
      $region25: #{down_forward.4} parent=11 // pred_check
        %p199 = pneg %p123
      $region26: #{down_forward.4} parent=11 // pred_check_branch
        %201 = sbr.rel (%p199) target = $region28
      $region27: #{down_forward.4} parent=11 // pred_region
        _
      $region28: #{down_forward.4} parent=11 // pred_fallthru
        _
    $region12: #{down_forward.4} parent=5 // pred_fallthru
      _
    %p202 = scmp.lt.s32.totalorder %s13, 2
    // Predicated region
    $region29: #{down_forward.4} parent=5 // pred_check
      %p203 = pneg %p202
    $region30: #{down_forward.4} parent=5 // pred_check_branch
      %205 = sbr.rel (%p203) target = $region32
    $region31: #{down_forward.4} parent=5 // pred_region
      // Predicated region
      $region33: #{down_forward.4} parent=31 // pred_check
        %p206 = pneg %p33
      $region34: #{down_forward.4} parent=31 // pred_check_branch
        %208 = sbr.rel (%p206) target = $region36
      $region35: #{down_forward.4} parent=31 // pred_region
        %p209 = scmp.lt.s32.totalorder %s13, 1
        %s210 = scalar_select %p209, %s13, 1
        %s211 = smul.addr %s210, 4
        %s212 = scalar_lea.vmem %s0, %s211
      $region36: #{down_forward.4} parent=31 // pred_fallthru
        _
    $region32: #{down_forward.4} parent=5 // pred_fallthru
      _
    %p213 = scmp.le.s32.totalorder 1, %s13
    %p214 = scmp.lt.s32.totalorder %s13, 3
    %p215 = pnand %p213, %p214
    %p216 = pneg %p215
    // Predicated region
    $region37: #{down_forward.4} parent=5 // pred_check
      _
    $region38: #{down_forward.4} parent=5 // pred_check_branch
      %218 = sbr.rel (%p215) target = $region40
    $region39: #{down_forward.4} parent=5 // pred_region
      %s219 = ssub.s32 %s13, 1
      %p220 = scmp.lt.s32.totalorder %s18, 1
      %s221 = scalar_select %p220, %s18, 1
      %s222 = smul.addr %s221, 4
      %s223 = scalar_lea.vmem %s0, %s222
      %p224 = pneg %p39
      %p225 = pneg %p36
      %p226 = pneg %p60
      %p227 = pneg %p57
      %p228 = pneg %p81
      %p229 = pneg %p78
      %p230 = pneg %p102
      %p231 = pneg %p99
      %p232 = pneg %p123
      %p233 = pneg %p120
      %p234 = pneg %p149
      %p235 = pneg %p146
      %p236 = scmp.lt.s32.totalorder %s18, 1
      %s237 = scalar_select %p236, %s18, 1
      %s238 = smul.addr %s237, 8
      %s239 = scalar_lea.vmem %s5, %s238
      %p240 = pneg %p175
      %p241 = pneg %p172
      %p242 = scmp.lt.s32.totalorder %s18, 1
      %s243 = scalar_select %p242, %s18, 1
      %s244 = smul.addr %s243, 8
      %s245 = scalar_lea.vmem %s6, %s244
      %p246 = scmp.lt.s32.totalorder %s18, 1
      %s247 = scalar_select %p246, %s18, 1
      %s248 = smul.addr %s247, 4
      %s249 = scalar_lea.vmem %s0, %s248
      %p250 = scmp.lt.s32.totalorder %s18, 1
      %s251 = scalar_select %p250, %s18, 1
      %s252 = smul.addr %s251, 8
      %s253 = scalar_lea.vmem %s5, %s252
      %p254 = scmp.lt.s32.totalorder %s18, 1
      %s255 = scalar_select %p254, %s18, 1
      %s256 = smul.addr %s255, 8
      %s257 = scalar_lea.vmem %s6, %s256
      %v261 = vld [vmem:[%s249] sm:$0xf]
      %v262 = vunpack.c.l.bf16 %v261
      %v263 = vld [vmem:[%s1] sm:$0xff]
      %265 = vset.pattern.permute.xlu0 0
      %266 = vperm.xlu0 %265, %v263
      %v267 = vpop.permute.xlu0 %266
      %v269 = vmul.f32 %v262, %v267
      %v270 = vld [vmem:[%s2] sm:$0xff]
      %272 = vset.pattern.permute.xlu0 0
      %273 = vperm.xlu0 %272, %v270
      %v274 = vpop.permute.xlu0 %273
      %v276 = vadd.f32 %v269, %v274
      %v277 = vmax.f32 %v276, 0.0
      %vm278 = vcmask 68608
      %279 = vst.msk [vmem:[#allocation2] sm:$0xf] %vm278, 0
      %vm280 = vcmask 667208
      %281 = vst.msk [vmem:[#allocation2] sm:$0xf] %vm280, 0
      %v282 = vpack.c.bf16 %v277, %v277
      %v284 = vunpack.c.l.b16 %v282
      %v285 = vpack.c.b16 %v284, %v284
      %286 = vrot.lane.b32.xlu0 %v285, 9
      %v287 = vpop.permute.xlu0 %286
      %vm289 = vcmask 592968
      %290 = vst.msk [vmem:[#allocation2] sm:$0xf] %vm289, %v287
      %v291 = vlaneseq
      %v292 = vand.u32 %v291, 127
      %vm293 = vcmp.lt.s32.totalorder %v292, 0
      %v294 = vsub.s32 0, %v292
      %v295 = vsel %vm293, %v294, %v292
      %v296 = vshrl.u32 %v295, 3
      %v297 = vand.u32 %v295, 7
      %v298 = vsub.s32 0, %v297
      %v299 = vsel %vm293, %v298, %v297
      %vm300 = vcmp.ne.s32.totalorder %v299, 0
      %vm301 = vcmp.lt.s32.totalorder %v299, 0
      %vm302 = vmand %vm301, %vm300
      %v303 = vadd.s32 %v299, 8
      %v304 = vsel %vm302, %v303, %v299
      %v305 = vld [vmem:[#allocation2] sm:$0xf]
      %v306 = vadd.s32 %v304, 4294967295
      %vm307 = vcmp.ge.s32.totalorder %v306, 0
      %vm308 = vcmp.lt.s32.totalorder %v306, 8
      %vm309 = vmand %vm307, %vm308
      %v310 = vsel %vm309, 1, 0
      %vm311 = vcmp.eq.s32.totalorder %v310, 1
      %vm312 = vmpackc.low %vm311, %vm311
      %v313 = vsel %vm312, %v305, 0
      %vm314 = vcmask 519168
      %315 = vst.msk [vmem:[#allocation3] sm:$0xf] %vm314, %v313
      %v316 = vld [vmem:[#allocation2] sm:$0xf]
      %vm317 = vcmp.ge.s32.totalorder %v304, 0
      %vm318 = vcmp.lt.s32.totalorder %v304, 8
      %vm319 = vmand %vm317, %vm318
      %v320 = vsel %vm319, 1, 0
      %vm321 = vcmp.eq.s32.totalorder %v320, 1
      %vm322 = vmpackc.low %vm321, %vm321
      %v323 = vsel %vm322, 65537, 0
      %324 = vrot.lane.b32.xlu0 %v323, 1
      %v325 = vpop.permute.xlu0 %324
      %vm326 = vcmp.ne.s16.totalorder %v325, 0
      %v327 = vsel %vm326, %v316, 0
      %329 = vrot.lane.b32.xlu0 %v327, 127
      %v330 = vpop.permute.xlu0 %329
      %332 = vst.msk [vmem:[#allocation3 + $0x4] sm:$0xf] %vm314, %v330
      %v333 = vld [vmem:[#allocation2] sm:$0xf]
      %v334 = vadd.s32 %v304, 1
      %vm335 = vcmp.ge.s32.totalorder %v334, 0
      %vm336 = vcmp.lt.s32.totalorder %v334, 8
      %vm337 = vmand %vm335, %vm336
      %v338 = vsel %vm337, 1, 0
      %vm339 = vcmp.eq.s32.totalorder %v338, 1
      %vm340 = vmpackc.low %vm339, %vm339
      %v341 = vsel %vm340, 65537, 0
      %342 = vrot.lane.b32.xlu0 %v341, 2
      %v343 = vpop.permute.xlu0 %342
      %vm344 = vcmp.ne.s16.totalorder %v343, 0
      %v345 = vsel %vm344, %v333, 0
      %347 = vrot.lane.b32.xlu0 %v345, 126
      %v348 = vpop.permute.xlu0 %347
      %350 = vst.msk [vmem:[#allocation3 + $0x8] sm:$0xf] %vm314, %v348
      %v351 = vld [vmem:[#allocation2] sm:$0xf]
      %v352 = vsel %vm312, 65537, 0
      %353 = vrot.lane.b32.xlu0 %v352, 8
      %v354 = vpop.permute.xlu0 %353
      %vm355 = vcmp.ne.s16.totalorder %v354, 0
      %v356 = vsel %vm355, %v351, 0
      %358 = vrot.lane.b32.xlu0 %v356, 120
      %v359 = vpop.permute.xlu0 %358
      %361 = vst.msk [vmem:[#allocation3 + $0xc] sm:$0xf] %vm314, %v359
      %v362 = vld [vmem:[#allocation2] sm:$0xf]
      %363 = vrot.lane.b32.xlu0 %v323, 9
      %v364 = vpop.permute.xlu0 %363
      %vm365 = vcmp.ne.s16.totalorder %v364, 0
      %v366 = vsel %vm365, %v362, 0
      %368 = vrot.lane.b32.xlu0 %v366, 119
      %v369 = vpop.permute.xlu0 %368
      %371 = vst.msk [vmem:[#allocation3 + $0x10] sm:$0xf] %vm314, %v369
      %v372 = vld [vmem:[#allocation2] sm:$0xf]
      %373 = vrot.lane.b32.xlu0 %v341, 10
      %v374 = vpop.permute.xlu0 %373
      %vm375 = vcmp.ne.s16.totalorder %v374, 0
      %v376 = vsel %vm375, %v372, 0
      %378 = vrot.lane.b32.xlu0 %v376, 118
      %v379 = vpop.permute.xlu0 %378
      %381 = vst.msk [vmem:[#allocation3 + $0x14] sm:$0xf] %vm314, %v379
      %v382 = vld [vmem:[#allocation2] sm:$0xf]
      %383 = vrot.lane.b32.xlu0 %v352, 16
      %v384 = vpop.permute.xlu0 %383
      %vm385 = vcmp.ne.s16.totalorder %v384, 0
      %v386 = vsel %vm385, %v382, 0
      %388 = vrot.lane.b32.xlu0 %v386, 112
      %v389 = vpop.permute.xlu0 %388
      %391 = vst.msk [vmem:[#allocation3 + $0x18] sm:$0xf] %vm314, %v389
      %v392 = vld [vmem:[#allocation2] sm:$0xf]
      %393 = vrot.lane.b32.xlu0 %v323, 17
      %v394 = vpop.permute.xlu0 %393
      %vm395 = vcmp.ne.s16.totalorder %v394, 0
      %v396 = vsel %vm395, %v392, 0
      %398 = vrot.lane.b32.xlu0 %v396, 111
      %v399 = vpop.permute.xlu0 %398
      %401 = vst.msk [vmem:[#allocation3 + $0x1c] sm:$0xf] %vm314, %v399
      %v402 = vld [vmem:[#allocation2] sm:$0xf]
      %403 = vrot.lane.b32.xlu0 %v341, 18
      %v404 = vpop.permute.xlu0 %403
      %vm405 = vcmp.ne.s16.totalorder %v404, 0
      %v406 = vsel %vm405, %v402, 0
      %408 = vrot.lane.b32.xlu0 %v406, 110
      %v409 = vpop.permute.xlu0 %408
      %411 = vst.msk [vmem:[#allocation3 + $0x20] sm:$0xf] %vm314, %v409
      %v412 = vld [vmem:[%s3] sm:$0xf]
      %v413 = vld [vmem:[#allocation3] sm:$0xf]
      %v414 = vld [vmem:[#allocation3 + $0x4] sm:$0xf]
      %v415 = vld [vmem:[#allocation3 + $0x8] sm:$0xf]
      %v416 = vld [vmem:[#allocation3 + $0xc] sm:$0xf]
      %v417 = vld [vmem:[#allocation3 + $0x10] sm:$0xf]
      %v418 = vld [vmem:[#allocation3 + $0x14] sm:$0xf]
      %v419 = vld [vmem:[#allocation3 + $0x18] sm:$0xf]
      %v420 = vld [vmem:[#allocation3 + $0x1c] sm:$0xf]
      %v421 = vld [vmem:[#allocation3 + $0x20] sm:$0xf]
      %v422 = vld [vmem:[%s4] sm:$0xff]
      %424 = vset.pattern.permute.xlu0 0
      %425 = vperm.xlu0 %424, %v422
      %v426 = vpop.permute.xlu0 %425
      %v437 = vunpack.c.l.b16 %v413
      %v438 = vunpack.c.l.b16 %v414
      %v439 = vunpack.c.l.b16 %v415
      %v440 = vunpack.c.l.b16 %v416
      %v441 = vunpack.c.l.b16 %v417
      %v442 = vunpack.c.l.b16 %v418
      %v443 = vunpack.c.l.b16 %v419
      %v444 = vunpack.c.l.b16 %v420
      %v445 = vunpack.c.l.b16 %v421
      %v446 = vpack.c.b16 %v438, %v437
      %v447 = vpack.c.b16 %v440, %v439
      %v448 = vpack.c.b16 %v442, %v441
      %v449 = vpack.c.b16 %v444, %v443
      %v450 = vpack.c.b16 %v445, %v445
      %vm455 = vcmask 588800
      %v457 = vsel %vm455, %v412, 0
      %vm459 = vcmask 1043456
      %v461 = vsel %vm459, %v450, 0
      %463 = vmatprep.subr.bf16.mxu0 0
      %464 = vmatpush1.bf16.msra.mxu0 0
      %465 = vmatprep.subr.bf16.mxu0 0
      %466 = vmatpush1.bf16.msra.mxu0 0
      %467 = vmatprep.subr.bf16.mxu0 0
      %468 = vmatpush1.bf16.msra.mxu0 0
      %469 = vmatprep.subr.bf16.mxu0 0
      %470 = vmatpush1.bf16.msra.mxu0 %v461
      %471 = vmatprep.subr.bf16.mxu0 0
      %472 = vmatpush1.bf16.msra.mxu0 %v449
      %473 = vmatprep.subr.bf16.mxu0 0
      %474 = vmatpush1.bf16.msra.mxu0 %v448
      %475 = vmatprep.subr.bf16.mxu0 0
      %476 = vmatpush1.bf16.msra.mxu0 %v447
      %477 = vmatprep.subr.bf16.mxu0 0
      %478 = vmatpush1.bf16.msra.mxu0 %v446
      %479 = vmatprep.subr.bf16.mxu0 0
      %480 = vmatpush2.bf16.msra.mxu0 0
      %481 = vmatprep.subr.bf16.mxu0 0
      %482 = vmatpush2.bf16.msra.mxu0 0
      %483 = vmatprep.subr.bf16.mxu0 0
      %484 = vmatpush2.bf16.msra.mxu0 0
      %485 = vmatprep.subr.bf16.mxu0 0
      %486 = vmatpush2.bf16.msra.mxu0 0
      %487 = vmatprep.subr.bf16.mxu0 0
      %488 = vmatpush2.bf16.msra.mxu0 0
      %489 = vmatprep.subr.bf16.mxu0 0
      %490 = vmatpush2.bf16.msra.mxu0 0
      %491 = vmatprep.subr.bf16.mxu0 0
      %492 = vmatpush2.bf16.msra.mxu0 0
      %493 = vmatprep.subr.bf16.mxu0 0
      %494 = vmatpush2.bf16.msra.mxu0 0
      %495 = vmatprep.mubr.bf16.mxu0 0
      %496 = vmatmul.mubr.bf16.gmra.mxu0 %v457
      %v497 = vpop.f32.mrf.mxu0
      %v498 = vadd.f32 %v426, %v497
      %v499 = vpop.f32.mrf.mxu0
      %v500 = vpop.f32.mrf.mxu0
      %v501 = vpop.f32.mrf.mxu0
      %502 = vdwg.mxu0
      %vm503 = vcmask 523264
      %504 = vst.msk [vmem:[%s253] sm:$0xff] %vm503, %v498
      %v505 = vsel %vm503, %v498, 0.0
      %506 = vadd.xlane.f32.xlu0 %v505
      %v507 = vpop.xlane.xlu0 %506
      %vm508 = vcmask 7168
      %509 = vst.msk [vmem:[%s257] sm:$0xff] %vm508, %v507
      %v510 = vmul.f32 %v498, %v498
      %v511 = vsel %vm503, %v510, 0.0
      %512 = vadd.xlane.f32.xlu0 %v511
      %v513 = vpop.xlane.xlu0 %512
      %vm514 = vcmask 15368
      %515 = vst.msk [vmem:[%s257] sm:$0xff] %vm514, %v513
      %p516 = scmp.lt.s32.totalorder %s18, 1
      %s517 = scalar_select %p516, %s18, 1
      %s518 = smul.addr %s517, 8
      %s519 = scalar_lea.vmem %s5, %s518
      %p520 = scmp.lt.s32.totalorder %s18, 1
      %s521 = scalar_select %p520, %s18, 1
      %s522 = smul.addr %s521, 8
      %s523 = scalar_lea.vmem %s6, %s522
      // Predicated region
      $region41: #{down_forward.4} parent=39 // pred_check
        %p524 = pneg %p146
      $region42: #{down_forward.4} parent=39 // pred_check_branch
        %526 = sbr.rel (%p524) target = $region44
      $region43: #{down_forward.4} parent=39 // pred_region
        _
      $region44: #{down_forward.4} parent=39 // pred_fallthru
        _
      // Predicated region
      $region45: #{down_forward.4} parent=39 // pred_check
        %p527 = pneg %p172
      $region46: #{down_forward.4} parent=39 // pred_check_branch
        %529 = sbr.rel (%p527) target = $region48
      $region47: #{down_forward.4} parent=39 // pred_region
        _
      $region48: #{down_forward.4} parent=39 // pred_fallthru
        _
    $region40: #{down_forward.4} parent=5 // pred_fallthru
      _
    %p530 = scmp.le.s32.totalorder 2, %s13
    // Predicated region
    $region49: #{down_forward.4} parent=5 // pred_check
      %p531 = pneg %p530
    $region50: #{down_forward.4} parent=5 // pred_check_branch
      %533 = sbr.rel (%p531) target = $region52
    $region51: #{down_forward.4} parent=5 // pred_region
      %s534 = ssub.s32 %s13, 2
      // Predicated region
      $region53: #{down_forward.4} parent=51 // pred_check
        %p535 = pneg %p152
      $region54: #{down_forward.4} parent=51 // pred_check_branch
        %537 = sbr.rel (%p535) target = $region56
      $region55: #{down_forward.4} parent=51 // pred_region
        %p538 = scmp.lt.s32.totalorder %s19, 1
        %s539 = scalar_select %p538, %s19, 1
        %s540 = smul.addr %s539, 8
        %s541 = scalar_lea.vmem %s5, %s540
      $region56: #{down_forward.4} parent=51 // pred_fallthru
        _
      // Predicated region
      $region57: #{down_forward.4} parent=51 // pred_check
        %p542 = pneg %p178
      $region58: #{down_forward.4} parent=51 // pred_check_branch
        %544 = sbr.rel (%p542) target = $region60
      $region59: #{down_forward.4} parent=51 // pred_region
        %p545 = scmp.lt.s32.totalorder %s19, 1
        %s546 = scalar_select %p545, %s19, 1
        %s547 = smul.addr %s546, 8
        %s548 = scalar_lea.vmem %s6, %s547
      $region60: #{down_forward.4} parent=51 // pred_fallthru
        _
    $region52: #{down_forward.4} parent=5 // pred_fallthru
      _
  $region6: #{down_forward.4} parent=0 // loop_footer
    %s17 = sadd.s32 1, %s13
  $region7: #{down_forward.4} parent=0 // loop_footer_branch
    %12 = sbr.rel target = $region3
  $region8: #{down_forward.4} parent=0 // loop_exit
    _

// kernel: down_forward.3
$region0: #{down_forward.3}
  #allocation0 [shape = 'u32[]', space=smem, size = 0x4, offset = 0x4, fixed_abs, tag = 'smem constant byte address 0x4 - core index']
  #allocation1 [shape = 'u32[144,128]{1,0:T(1,128)}', space=vmem, size = 0x12000, scoped, tag = 'internal scratch']
  #allocation2 [shape = 'bf16[4,82]{1,0:T(4,128)(2,1)}', space=vmem, size = 0x400, scoped, tag = 'scratch operand']
  #allocation3 [shape = 'bf16[36,64]{1,0:T(8,128)(2,1)}', space=vmem, size = 0x2800, scoped, tag = 'scratch operand']
  %s0 = inlined_call_operand.vmem [shape: f32[2,4,16,16], index: 0, kind: input, shape index: {}]
  %s1 = inlined_call_operand.vmem [shape: bf16[8,36], index: 1, kind: input, shape index: {}]
  %s2 = inlined_call_operand.vmem [shape: f32[8,1], index: 2, kind: input, shape index: {}]
  %s3 = inlined_call_operand.vmem [shape: bf16[2,8,64], index: 3, kind: output, shape index: {0}]
  %s4 = inlined_call_operand.vmem [shape: f32[2,8,2], index: 4, kind: output, shape index: {1}]
  %5 = xla_tuple %s3, %s4
  %s6 = sld [smem:[#allocation0]]
  $region53: #{down_forward.3} parent=0
    _
  %s8 = ssub.s32 1, %s6
  %s9 = scalar_select 0, %s8, %s6
  loop: start=0, step=1, limit=4
  $region2: #{down_forward.3} parent=0 // loop_pre_header
    _
  $region3: #{down_forward.3} parent=0 // loop_header
    %s11 = sphi 0, %s15
    %p12 = scmp.ge.s32.totalorder %s11, 4
    %s21 = sphi 0, %s23
    %s24 = sphi 0, %s21
    %s25 = sphi 0, %s24
    %s41 = sphi 0, %s25
    %s45 = sphi 0, %s45
    %s47 = sphi 0, %s45
    %s48 = sphi 0, %s47
    %s62 = sphi 0, %s48
    %s66 = sphi 0, %s66
    %s68 = sphi 0, %s66
    %s69 = sphi 0, %s68
    %s83 = sphi 0, %s69
    %s89 = sphi 0, %s91
    %s92 = sphi 0, %s89
    %s93 = sphi 0, %s92
    %s109 = sphi 0, %s93
    %s115 = sphi 0, %s117
    %s118 = sphi 0, %s115
    %s119 = sphi 0, %s118
    %s135 = sphi 0, %s119
  $region4: #{down_forward.3} parent=0 // loop_header_branch
    %14 = sbr.rel (%p12) target = $region8
  $region5: #{down_forward.3} parent=0 // loop_body
    %s16 = ssub.s32 %s11, 1
    %s17 = ssub.s32 %s11, 2
    %s18 = sadd.s32 %s11, 1
    %s19 = ssub.s32 %s11, %s18
    %p20 = scmp.eq.s32.totalorder %s19, 0
    %s22 = sadd.s32 %s21, 1
    %s23 = scalar_select %p20, %s21, %s22
    %p26 = pneg %p20
    %p27 = scmp.eq.s32.totalorder %s11, 1
    %p28 = por %p26, %p27
    %p29 = scmp.ne.s32.totalorder %s21, %s24
    %p30 = scmp.eq.s32.totalorder %s11, 0
    %p31 = por %p29, %p30
    %p32 = scmp.ne.s32.totalorder %s21, %s24
    %p33 = scmp.eq.s32.totalorder %s16, 1
    %p34 = por %p32, %p33
    %p35 = scmp.ne.s32.totalorder %s24, %s25
    %p36 = scmp.eq.s32.totalorder %s16, 0
    %p37 = por %p35, %p36
    %p38 = scmp.ne.s32.totalorder %s24, %s25
    %p39 = scmp.eq.s32.totalorder %s17, 1
    %p40 = por %p38, %p39
    %p42 = scmp.ne.s32.totalorder %s25, %s41
    %p43 = scmp.eq.s32.totalorder %s17, 0
    %p44 = por %p42, %p43
    %s46 = sadd.s32 %s45, 1
    %p49 = scmp.eq.s32.totalorder %s11, 1
    %p50 = scmp.ne.s32.totalorder %s45, %s47
    %p51 = scmp.eq.s32.totalorder %s11, 0
    %p52 = por %p50, %p51
    %p53 = scmp.ne.s32.totalorder %s45, %s47
    %p54 = scmp.eq.s32.totalorder %s16, 1
    %p55 = por %p53, %p54
    %p56 = scmp.ne.s32.totalorder %s47, %s48
    %p57 = scmp.eq.s32.totalorder %s16, 0
    %p58 = por %p56, %p57
    %p59 = scmp.ne.s32.totalorder %s47, %s48
    %p60 = scmp.eq.s32.totalorder %s17, 1
    %p61 = por %p59, %p60
    %p63 = scmp.ne.s32.totalorder %s48, %s62
    %p64 = scmp.eq.s32.totalorder %s17, 0
    %p65 = por %p63, %p64
    %s67 = sadd.s32 %s66, 1
    %p70 = scmp.eq.s32.totalorder %s11, 1
    %p71 = scmp.ne.s32.totalorder %s66, %s68
    %p72 = scmp.eq.s32.totalorder %s11, 0
    %p73 = por %p71, %p72
    %p74 = scmp.ne.s32.totalorder %s66, %s68
    %p75 = scmp.eq.s32.totalorder %s16, 1
    %p76 = por %p74, %p75
    %p77 = scmp.ne.s32.totalorder %s68, %s69
    %p78 = scmp.eq.s32.totalorder %s16, 0
    %p79 = por %p77, %p78
    %p80 = scmp.ne.s32.totalorder %s68, %s69
    %p81 = scmp.eq.s32.totalorder %s17, 1
    %p82 = por %p80, %p81
    %p84 = scmp.ne.s32.totalorder %s69, %s83
    %p85 = scmp.eq.s32.totalorder %s17, 0
    %p86 = por %p84, %p85
    %s87 = ssub.s32 %s11, %s18
    %p88 = scmp.eq.s32.totalorder %s87, 0
    %s90 = sadd.s32 %s89, 1
    %s91 = scalar_select %p88, %s89, %s90
    %p94 = pneg %p88
    %p95 = scmp.eq.s32.totalorder %s11, 1
    %p96 = por %p94, %p95
    %p97 = scmp.ne.s32.totalorder %s89, %s92
    %p98 = scmp.eq.s32.totalorder %s11, 0
    %p99 = por %p97, %p98
    %p100 = scmp.ne.s32.totalorder %s89, %s92
    %p101 = scmp.eq.s32.totalorder %s16, 1
    %p102 = por %p100, %p101
    %p103 = scmp.ne.s32.totalorder %s92, %s93
    %p104 = scmp.eq.s32.totalorder %s16, 0
    %p105 = por %p103, %p104
    %p106 = scmp.ne.s32.totalorder %s92, %s93
    %p107 = scmp.eq.s32.totalorder %s17, 1
    %p108 = por %p106, %p107
    %p110 = scmp.ne.s32.totalorder %s93, %s109
    %p111 = scmp.eq.s32.totalorder %s17, 0
    %p112 = por %p110, %p111
    %s113 = ssub.s32 %s11, %s18
    %p114 = scmp.eq.s32.totalorder %s113, 0
    %s116 = sadd.s32 %s115, 1
    %s117 = scalar_select %p114, %s115, %s116
    %p120 = pneg %p114
    %p121 = scmp.eq.s32.totalorder %s11, 1
    %p122 = por %p120, %p121
    %p123 = scmp.ne.s32.totalorder %s115, %s118
    %p124 = scmp.eq.s32.totalorder %s11, 0
    %p125 = por %p123, %p124
    %p126 = scmp.ne.s32.totalorder %s115, %s118
    %p127 = scmp.eq.s32.totalorder %s16, 1
    %p128 = por %p126, %p127
    %p129 = scmp.ne.s32.totalorder %s118, %s119
    %p130 = scmp.eq.s32.totalorder %s16, 0
    %p131 = por %p129, %p130
    %p132 = scmp.ne.s32.totalorder %s118, %s119
    %p133 = scmp.eq.s32.totalorder %s17, 1
    %p134 = por %p132, %p133
    %p136 = scmp.ne.s32.totalorder %s119, %s135
    %p137 = scmp.eq.s32.totalorder %s17, 0
    %p138 = por %p136, %p137
    %p139 = scmp.le.s32.totalorder 1, %s11
    %p140 = scmp.lt.s32.totalorder %s11, 3
    %p141 = pnand %p139, %p140
    %p142 = pneg %p141
    // Predicated region
    $region9: #{down_forward.3} parent=5 // pred_check
      _
    $region10: #{down_forward.3} parent=5 // pred_check_branch
      %144 = sbr.rel (%p141) target = $region12
    $region11: #{down_forward.3} parent=5 // pred_region
      %s145 = ssub.s32 %s11, 1
      // Predicated region
      $region13: #{down_forward.3} parent=11 // pred_check
        %p146 = pneg %p58
      $region14: #{down_forward.3} parent=11 // pred_check_branch
        %148 = sbr.rel (%p146) target = $region16
      $region15: #{down_forward.3} parent=11 // pred_region
        _
      $region16: #{down_forward.3} parent=11 // pred_fallthru
        _
      // Predicated region
      $region17: #{down_forward.3} parent=11 // pred_check
        %p149 = pneg %p79
      $region18: #{down_forward.3} parent=11 // pred_check_branch
        %151 = sbr.rel (%p149) target = $region20
      $region19: #{down_forward.3} parent=11 // pred_region
        _
      $region20: #{down_forward.3} parent=11 // pred_fallthru
        _
    $region12: #{down_forward.3} parent=5 // pred_fallthru
      _
    %p152 = scmp.lt.s32.totalorder %s11, 2
    // Predicated region
    $region21: #{down_forward.3} parent=5 // pred_check
      %p153 = pneg %p152
    $region22: #{down_forward.3} parent=5 // pred_check_branch
      %155 = sbr.rel (%p153) target = $region24
    $region23: #{down_forward.3} parent=5 // pred_region
      // Predicated region
      $region25: #{down_forward.3} parent=23 // pred_check
        %p156 = pneg %p31
      $region26: #{down_forward.3} parent=23 // pred_check_branch
        %158 = sbr.rel (%p156) target = $region28
      $region27: #{down_forward.3} parent=23 // pred_region
        %p159 = scmp.lt.s32.totalorder %s11, 1
        %s160 = scalar_select %p159, %s11, 1
        %s161 = smul.addr %s160, 8
        %s162 = smul.addr %s161, 8
        %s163 = scalar_lea.vmem %s0, %s162
      $region28: #{down_forward.3} parent=23 // pred_fallthru
        _
    $region24: #{down_forward.3} parent=5 // pred_fallthru
      _
    %p164 = scmp.le.s32.totalorder 1, %s11
    %p165 = scmp.lt.s32.totalorder %s11, 3
    %p166 = pnand %p164, %p165
    %p167 = pneg %p166
    // Predicated region
    $region29: #{down_forward.3} parent=5 // pred_check
      _
    $region30: #{down_forward.3} parent=5 // pred_check_branch
      %169 = sbr.rel (%p166) target = $region32
    $region31: #{down_forward.3} parent=5 // pred_region
      %s170 = ssub.s32 %s11, 1
      %p171 = scmp.lt.s32.totalorder %s16, 1
      %s172 = scalar_select %p171, %s16, 1
      %s173 = smul.addr %s172, 8
      %s174 = smul.addr %s173, 8
      %s175 = scalar_lea.vmem %s0, %s174
      %p176 = pneg %p37
      %p177 = pneg %p34
      %p178 = pneg %p58
      %p179 = pneg %p55
      %p180 = pneg %p79
      %p181 = pneg %p76
      %p182 = pneg %p105
      %p183 = pneg %p102
      %p184 = scmp.lt.s32.totalorder %s16, 1
      %s185 = scalar_select %p184, %s16, 1
      %s186 = smul.addr %s185, 4
      %s187 = scalar_lea.vmem %s3, %s186
      %p188 = pneg %p131
      %p189 = pneg %p128
      %p190 = scmp.lt.s32.totalorder %s16, 1
      %s191 = scalar_select %p190, %s16, 1
      %s192 = smul.addr %s191, 8
      %s193 = scalar_lea.vmem %s4, %s192
      %p194 = scmp.lt.s32.totalorder %s16, 1
      %s195 = scalar_select %p194, %s16, 1
      %s196 = smul.addr %s195, 8
      %s197 = smul.addr %s196, 8
      %s198 = scalar_lea.vmem %s0, %s197
      %p199 = scmp.lt.s32.totalorder %s16, 1
      %s200 = scalar_select %p199, %s16, 1
      %s201 = smul.addr %s200, 4
      %s202 = scalar_lea.vmem %s3, %s201
      %p203 = scmp.lt.s32.totalorder %s16, 1
      %s204 = scalar_select %p203, %s16, 1
      %s205 = smul.addr %s204, 8
      %s206 = scalar_lea.vmem %s4, %s205
      %v210 = vld [vmem:[%s198] sm:$0xff]
      %v211 = vld [vmem:[%s198 + $0x8] sm:$0xff]
      %v212 = vld [vmem:[%s198 + $0x10] sm:$0xff]
      %v213 = vld [vmem:[%s198 + $0x18] sm:$0xff]
      %v214 = vld [vmem:[%s198 + $0x20] sm:$0xff]
      %v215 = vld [vmem:[%s198 + $0x28] sm:$0xff]
      %v216 = vld [vmem:[%s198 + $0x30] sm:$0xff]
      %v217 = vld [vmem:[%s198 + $0x38] sm:$0xff]
      %vm226 = vcmask 1046528
      %v227 = vrot.slane %v210, 1
      %v228 = vrot.slane %v211, 1
      %v229 = vsel %vm226, %v227, %v228
      %v230 = vrot.slane %v212, 1
      %v231 = vrot.slane %v213, 1
      %v232 = vsel %vm226, %v230, %v231
      %v233 = vrot.slane %v214, 1
      %v234 = vrot.slane %v215, 1
      %v235 = vsel %vm226, %v233, %v234
      %v236 = vrot.slane %v216, 1
      %v237 = vrot.slane %v217, 1
      %v238 = vsel %vm226, %v236, %v237
      %v247 = vmax.f32 %v210, %v229
      %v248 = vmax.f32 %v211, %v228
      %v249 = vmax.f32 %v212, %v232
      %v250 = vmax.f32 %v213, %v231
      %v251 = vmax.f32 %v214, %v235
      %v252 = vmax.f32 %v215, %v234
      %v253 = vmax.f32 %v216, %v238
      %v254 = vmax.f32 %v217, %v237
      %263 = vrot.lane.b32.xlu0 %v247, 127
      %v264 = vpop.permute.xlu0 %263
      %265 = vrot.lane.b32.xlu0 %v248, 127
      %v266 = vpop.permute.xlu0 %265
      %267 = vrot.lane.b32.xlu0 %v249, 127
      %v268 = vpop.permute.xlu0 %267
      %269 = vrot.lane.b32.xlu0 %v250, 127
      %v270 = vpop.permute.xlu0 %269
      %271 = vrot.lane.b32.xlu0 %v251, 127
      %v272 = vpop.permute.xlu0 %271
      %273 = vrot.lane.b32.xlu0 %v252, 127
      %v274 = vpop.permute.xlu0 %273
      %275 = vrot.lane.b32.xlu0 %v253, 127
      %v276 = vpop.permute.xlu0 %275
      %277 = vrot.lane.b32.xlu0 %v254, 127
      %v278 = vpop.permute.xlu0 %277
      %v287 = vmax.f32 %v247, %v264
      %v288 = vmax.f32 %v248, %v266
      %v289 = vmax.f32 %v249, %v268
      %v290 = vmax.f32 %v250, %v270
      %v291 = vmax.f32 %v251, %v272
      %v292 = vmax.f32 %v252, %v274
      %v293 = vmax.f32 %v253, %v276
      %v294 = vmax.f32 %v254, %v278
      %v303 = vcombine.high %v287, %v287
      %v305 = vunpack.c.l.s4 1966171168
      %v306 = vunpack.c.0.s8 %v305
      %v307 = vlaneseq
      %v308 = vshrl.u32 %v307, 7
      %v309 = vsub.s32 %v306, %v308
      %v310 = vrot.slane %v287, %v309
      %v312 = vunpack.c.l.s4 1966171168
      %v313 = vunpack.c.0.s8 %v312
      %v314 = vlaneseq
      %v315 = vshrl.u32 %v314, 7
      %v316 = vsub.s32 %v313, %v315
      %v317 = vrot.slane %v303, %v316
      %v318 = vcombine.high %v310, %v310
      %v319 = vcombine.high %v317, %v317
      %v321 = vunpack.c.l.s4 1966171168
      %v322 = vunpack.c.0.s8 %v321
      %v323 = vlaneseq
      %v324 = vshrl.u32 %v323, 7
      %v325 = vsub.s32 %v322, %v324
      %v326 = vrot.slane %v310, %v325
      %v328 = vunpack.c.l.s4 1966171168
      %v329 = vunpack.c.0.s8 %v328
      %v330 = vlaneseq
      %v331 = vshrl.u32 %v330, 7
      %v332 = vsub.s32 %v329, %v331
      %v333 = vrot.slane %v317, %v332
      %v335 = vunpack.c.l.s4 1966171168
      %v336 = vunpack.c.0.s8 %v335
      %v337 = vlaneseq
      %v338 = vshrl.u32 %v337, 7
      %v339 = vsub.s32 %v336, %v338
      %v340 = vrot.slane %v318, %v339
      %v342 = vunpack.c.l.s4 1966171168
      %v343 = vunpack.c.0.s8 %v342
      %v344 = vlaneseq
      %v345 = vshrl.u32 %v344, 7
      %v346 = vsub.s32 %v343, %v345
      %v347 = vrot.slane %v319, %v346
      %v348 = vcombine.high %v326, %v326
      %v349 = vcombine.high %v333, %v333
      %v350 = vcombine.high %v340, %v340
      %v351 = vcombine.high %v347, %v347
      %v352 = vcombine.high %v288, %v288
      %v354 = vunpack.c.l.s4 1966171168
      %v355 = vunpack.c.0.s8 %v354
      %v356 = vlaneseq
      %v357 = vshrl.u32 %v356, 7
      %v358 = vsub.s32 %v355, %v357
      %v359 = vrot.slane %v288, %v358
      %v361 = vunpack.c.l.s4 1966171168
      %v362 = vunpack.c.0.s8 %v361
      %v363 = vlaneseq
      %v364 = vshrl.u32 %v363, 7
      %v365 = vsub.s32 %v362, %v364
      %v366 = vrot.slane %v352, %v365
      %v367 = vcombine.high %v359, %v359
      %v368 = vcombine.high %v366, %v366
      %v370 = vunpack.c.l.s4 1966171168
      %v371 = vunpack.c.0.s8 %v370
      %v372 = vlaneseq
      %v373 = vshrl.u32 %v372, 7
      %v374 = vsub.s32 %v371, %v373
      %v375 = vrot.slane %v359, %v374
      %v377 = vunpack.c.l.s4 1966171168
      %v378 = vunpack.c.0.s8 %v377
      %v379 = vlaneseq
      %v380 = vshrl.u32 %v379, 7
      %v381 = vsub.s32 %v378, %v380
      %v382 = vrot.slane %v366, %v381
      %v384 = vunpack.c.l.s4 1966171168
      %v385 = vunpack.c.0.s8 %v384
      %v386 = vlaneseq
      %v387 = vshrl.u32 %v386, 7
      %v388 = vsub.s32 %v385, %v387
      %v389 = vrot.slane %v367, %v388
      %v391 = vunpack.c.l.s4 1966171168
      %v392 = vunpack.c.0.s8 %v391
      %v393 = vlaneseq
      %v394 = vshrl.u32 %v393, 7
      %v395 = vsub.s32 %v392, %v394
      %v396 = vrot.slane %v368, %v395
      %v397 = vcombine.high %v375, %v375
      %v398 = vcombine.high %v382, %v382
      %v399 = vcombine.high %v389, %v389
      %v400 = vcombine.high %v289, %v289
      %v402 = vunpack.c.l.s4 1966171168
      %v403 = vunpack.c.0.s8 %v402
      %v404 = vlaneseq
      %v405 = vshrl.u32 %v404, 7
      %v406 = vsub.s32 %v403, %v405
      %v407 = vrot.slane %v289, %v406
      %v409 = vunpack.c.l.s4 1966171168
      %v410 = vunpack.c.0.s8 %v409
      %v411 = vlaneseq
      %v412 = vshrl.u32 %v411, 7
      %v413 = vsub.s32 %v410, %v412
      %v414 = vrot.slane %v400, %v413
      %v415 = vcombine.high %v407, %v407
      %v416 = vcombine.high %v414, %v414
      %v418 = vunpack.c.l.s4 1966171168
      %v419 = vunpack.c.0.s8 %v418
      %v420 = vlaneseq
      %v421 = vshrl.u32 %v420, 7
      %v422 = vsub.s32 %v419, %v421
      %v423 = vrot.slane %v407, %v422
      %v425 = vunpack.c.l.s4 1966171168
      %v426 = vunpack.c.0.s8 %v425
      %v427 = vlaneseq
      %v428 = vshrl.u32 %v427, 7
      %v429 = vsub.s32 %v426, %v428
      %v430 = vrot.slane %v414, %v429
      %v432 = vunpack.c.l.s4 1966171168
      %v433 = vunpack.c.0.s8 %v432
      %v434 = vlaneseq
      %v435 = vshrl.u32 %v434, 7
      %v436 = vsub.s32 %v433, %v435
      %v437 = vrot.slane %v415, %v436
      %v439 = vunpack.c.l.s4 1966171168
      %v440 = vunpack.c.0.s8 %v439
      %v441 = vlaneseq
      %v442 = vshrl.u32 %v441, 7
      %v443 = vsub.s32 %v440, %v442
      %v444 = vrot.slane %v416, %v443
      %v445 = vcombine.high %v423, %v423
      %v446 = vcombine.high %v430, %v430
      %v447 = vcombine.high %v437, %v437
      %v448 = vcombine.high %v444, %v444
      %v449 = vcombine.high %v290, %v290
      %v451 = vunpack.c.l.s4 1966171168
      %v452 = vunpack.c.0.s8 %v451
      %v453 = vlaneseq
      %v454 = vshrl.u32 %v453, 7
      %v455 = vsub.s32 %v452, %v454
      %v456 = vrot.slane %v290, %v455
      %v458 = vunpack.c.l.s4 1966171168
      %v459 = vunpack.c.0.s8 %v458
      %v460 = vlaneseq
      %v461 = vshrl.u32 %v460, 7
      %v462 = vsub.s32 %v459, %v461
      %v463 = vrot.slane %v449, %v462
      %v464 = vcombine.high %v456, %v456
      %v465 = vcombine.high %v463, %v463
      %v467 = vunpack.c.l.s4 1966171168
      %v468 = vunpack.c.0.s8 %v467
      %v469 = vlaneseq
      %v470 = vshrl.u32 %v469, 7
      %v471 = vsub.s32 %v468, %v470
      %v472 = vrot.slane %v456, %v471
      %v474 = vunpack.c.l.s4 1966171168
      %v475 = vunpack.c.0.s8 %v474
      %v476 = vlaneseq
      %v477 = vshrl.u32 %v476, 7
      %v478 = vsub.s32 %v475, %v477
      %v479 = vrot.slane %v463, %v478
      %v481 = vunpack.c.l.s4 1966171168
      %v482 = vunpack.c.0.s8 %v481
      %v483 = vlaneseq
      %v484 = vshrl.u32 %v483, 7
      %v485 = vsub.s32 %v482, %v484
      %v486 = vrot.slane %v464, %v485
      %v488 = vunpack.c.l.s4 1966171168
      %v489 = vunpack.c.0.s8 %v488
      %v490 = vlaneseq
      %v491 = vshrl.u32 %v490, 7
      %v492 = vsub.s32 %v489, %v491
      %v493 = vrot.slane %v465, %v492
      %v494 = vcombine.high %v472, %v472
      %v495 = vcombine.high %v479, %v479
      %v496 = vcombine.high %v486, %v486
      %v497 = vcombine.high %v291, %v291
      %v499 = vunpack.c.l.s4 1966171168
      %v500 = vunpack.c.0.s8 %v499
      %v501 = vlaneseq
      %v502 = vshrl.u32 %v501, 7
      %v503 = vsub.s32 %v500, %v502
      %v504 = vrot.slane %v291, %v503
      %v506 = vunpack.c.l.s4 1966171168
      %v507 = vunpack.c.0.s8 %v506
      %v508 = vlaneseq
      %v509 = vshrl.u32 %v508, 7
      %v510 = vsub.s32 %v507, %v509
      %v511 = vrot.slane %v497, %v510
      %v512 = vcombine.high %v504, %v504
      %v513 = vcombine.high %v511, %v511
      %v515 = vunpack.c.l.s4 1966171168
      %v516 = vunpack.c.0.s8 %v515
      %v517 = vlaneseq
      %v518 = vshrl.u32 %v517, 7
      %v519 = vsub.s32 %v516, %v518
      %v520 = vrot.slane %v504, %v519
      %v522 = vunpack.c.l.s4 1966171168
      %v523 = vunpack.c.0.s8 %v522
      %v524 = vlaneseq
      %v525 = vshrl.u32 %v524, 7
      %v526 = vsub.s32 %v523, %v525
      %v527 = vrot.slane %v511, %v526
      %v529 = vunpack.c.l.s4 1966171168
      %v530 = vunpack.c.0.s8 %v529
      %v531 = vlaneseq
      %v532 = vshrl.u32 %v531, 7
      %v533 = vsub.s32 %v530, %v532
      %v534 = vrot.slane %v512, %v533
      %v536 = vunpack.c.l.s4 1966171168
      %v537 = vunpack.c.0.s8 %v536
      %v538 = vlaneseq
      %v539 = vshrl.u32 %v538, 7
      %v540 = vsub.s32 %v537, %v539
      %v541 = vrot.slane %v513, %v540
      %v542 = vcombine.high %v520, %v520
      %v543 = vcombine.high %v527, %v527
      %v544 = vcombine.high %v534, %v534
      %v545 = vcombine.high %v541, %v541
      %v546 = vcombine.high %v292, %v292
      %v548 = vunpack.c.l.s4 1966171168
      %v549 = vunpack.c.0.s8 %v548
      %v550 = vlaneseq
      %v551 = vshrl.u32 %v550, 7
      %v552 = vsub.s32 %v549, %v551
      %v553 = vrot.slane %v292, %v552
      %v555 = vunpack.c.l.s4 1966171168
      %v556 = vunpack.c.0.s8 %v555
      %v557 = vlaneseq
      %v558 = vshrl.u32 %v557, 7
      %v559 = vsub.s32 %v556, %v558
      %v560 = vrot.slane %v546, %v559
      %v561 = vcombine.high %v553, %v553
      %v562 = vcombine.high %v560, %v560
      %v564 = vunpack.c.l.s4 1966171168
      %v565 = vunpack.c.0.s8 %v564
      %v566 = vlaneseq
      %v567 = vshrl.u32 %v566, 7
      %v568 = vsub.s32 %v565, %v567
      %v569 = vrot.slane %v553, %v568
      %v571 = vunpack.c.l.s4 1966171168
      %v572 = vunpack.c.0.s8 %v571
      %v573 = vlaneseq
      %v574 = vshrl.u32 %v573, 7
      %v575 = vsub.s32 %v572, %v574
      %v576 = vrot.slane %v560, %v575
      %v578 = vunpack.c.l.s4 1966171168
      %v579 = vunpack.c.0.s8 %v578
      %v580 = vlaneseq
      %v581 = vshrl.u32 %v580, 7
      %v582 = vsub.s32 %v579, %v581
      %v583 = vrot.slane %v561, %v582
      %v585 = vunpack.c.l.s4 1966171168
      %v586 = vunpack.c.0.s8 %v585
      %v587 = vlaneseq
      %v588 = vshrl.u32 %v587, 7
      %v589 = vsub.s32 %v586, %v588
      %v590 = vrot.slane %v562, %v589
      %v591 = vcombine.high %v569, %v569
      %v592 = vcombine.high %v576, %v576
      %v593 = vcombine.high %v583, %v583
      %v594 = vcombine.high %v293, %v293
      %v596 = vunpack.c.l.s4 1966171168
      %v597 = vunpack.c.0.s8 %v596
      %v598 = vlaneseq
      %v599 = vshrl.u32 %v598, 7
      %v600 = vsub.s32 %v597, %v599
      %v601 = vrot.slane %v293, %v600
      %v603 = vunpack.c.l.s4 1966171168
      %v604 = vunpack.c.0.s8 %v603
      %v605 = vlaneseq
      %v606 = vshrl.u32 %v605, 7
      %v607 = vsub.s32 %v604, %v606
      %v608 = vrot.slane %v594, %v607
      %v609 = vcombine.high %v601, %v601
      %v610 = vcombine.high %v608, %v608
      %v612 = vunpack.c.l.s4 1966171168
      %v613 = vunpack.c.0.s8 %v612
      %v614 = vlaneseq
      %v615 = vshrl.u32 %v614, 7
      %v616 = vsub.s32 %v613, %v615
      %v617 = vrot.slane %v601, %v616
      %v619 = vunpack.c.l.s4 1966171168
      %v620 = vunpack.c.0.s8 %v619
      %v621 = vlaneseq
      %v622 = vshrl.u32 %v621, 7
      %v623 = vsub.s32 %v620, %v622
      %v624 = vrot.slane %v608, %v623
      %v626 = vunpack.c.l.s4 1966171168
      %v627 = vunpack.c.0.s8 %v626
      %v628 = vlaneseq
      %v629 = vshrl.u32 %v628, 7
      %v630 = vsub.s32 %v627, %v629
      %v631 = vrot.slane %v609, %v630
      %v633 = vunpack.c.l.s4 1966171168
      %v634 = vunpack.c.0.s8 %v633
      %v635 = vlaneseq
      %v636 = vshrl.u32 %v635, 7
      %v637 = vsub.s32 %v634, %v636
      %v638 = vrot.slane %v610, %v637
      %v639 = vcombine.high %v617, %v617
      %v640 = vcombine.high %v624, %v624
      %v641 = vcombine.high %v631, %v631
      %v642 = vcombine.high %v638, %v638
      %v643 = vcombine.high %v294, %v294
      %v645 = vunpack.c.l.s4 1966171168
      %v646 = vunpack.c.0.s8 %v645
      %v647 = vlaneseq
      %v648 = vshrl.u32 %v647, 7
      %v649 = vsub.s32 %v646, %v648
      %v650 = vrot.slane %v294, %v649
      %v652 = vunpack.c.l.s4 1966171168
      %v653 = vunpack.c.0.s8 %v652
      %v654 = vlaneseq
      %v655 = vshrl.u32 %v654, 7
      %v656 = vsub.s32 %v653, %v655
      %v657 = vrot.slane %v643, %v656
      %v658 = vcombine.high %v650, %v650
      %v659 = vcombine.high %v657, %v657
      %v661 = vunpack.c.l.s4 1966171168
      %v662 = vunpack.c.0.s8 %v661
      %v663 = vlaneseq
      %v664 = vshrl.u32 %v663, 7
      %v665 = vsub.s32 %v662, %v664
      %v666 = vrot.slane %v650, %v665
      %v668 = vunpack.c.l.s4 1966171168
      %v669 = vunpack.c.0.s8 %v668
      %v670 = vlaneseq
      %v671 = vshrl.u32 %v670, 7
      %v672 = vsub.s32 %v669, %v671
      %v673 = vrot.slane %v657, %v672
      %v675 = vunpack.c.l.s4 1966171168
      %v676 = vunpack.c.0.s8 %v675
      %v677 = vlaneseq
      %v678 = vshrl.u32 %v677, 7
      %v679 = vsub.s32 %v676, %v678
      %v680 = vrot.slane %v658, %v679
      %v682 = vunpack.c.l.s4 1966171168
      %v683 = vunpack.c.0.s8 %v682
      %v684 = vlaneseq
      %v685 = vshrl.u32 %v684, 7
      %v686 = vsub.s32 %v683, %v685
      %v687 = vrot.slane %v659, %v686
      %v688 = vcombine.high %v666, %v666
      %v689 = vcombine.high %v673, %v673
      %v690 = vcombine.high %v680, %v680
      %v691 = vcombine.low %v326, %v340
      %v692 = vcombine.low %v348, %v350
      %v693 = vcombine.low %v333, %v347
      %v694 = vcombine.low %v349, %v351
      %v696 = vunpack.c.l.s4 1966171168
      %v697 = vunpack.c.0.s8 %v696
      %v698 = vlaneseq
      %v699 = vshrl.u32 %v698, 7
      %v700 = vsub.s32 %v697, %v699
      %v701 = vrot.slane %v691, %v700
      %v703 = vunpack.c.l.s4 1966171168
      %v704 = vunpack.c.0.s8 %v703
      %v705 = vlaneseq
      %v706 = vshrl.u32 %v705, 7
      %v707 = vsub.s32 %v704, %v706
      %v708 = vrot.slane %v692, %v707
      %v710 = vunpack.c.l.s4 1966171168
      %v711 = vunpack.c.0.s8 %v710
      %v712 = vlaneseq
      %v713 = vshrl.u32 %v712, 7
      %v714 = vsub.s32 %v711, %v713
      %v715 = vrot.slane %v693, %v714
      %v717 = vunpack.c.l.s4 1966171168
      %v718 = vunpack.c.0.s8 %v717
      %v719 = vlaneseq
      %v720 = vshrl.u32 %v719, 7
      %v721 = vsub.s32 %v718, %v720
      %v722 = vrot.slane %v694, %v721
      %v723 = vcombine.low %v701, %v708
      %v724 = vcombine.low %v715, %v722
      %v726 = vunpack.c.l.s4 1966171168
      %v727 = vunpack.c.0.s8 %v726
      %v728 = vlaneseq
      %v729 = vshrl.u32 %v728, 7
      %v730 = vsub.s32 %v727, %v729
      %v731 = vrot.slane %v723, %v730
      %v733 = vunpack.c.l.s4 1966171168
      %v734 = vunpack.c.0.s8 %v733
      %v735 = vlaneseq
      %v736 = vshrl.u32 %v735, 7
      %v737 = vsub.s32 %v734, %v736
      %v738 = vrot.slane %v724, %v737
      %v739 = vcombine.low %v731, %v738
      %v740 = vcombine.low %v375, %v389
      %v741 = vcombine.low %v397, %v399
      %v742 = vcombine.low %v382, %v396
      %v743 = vcombine.low %v398, %v423
      %v745 = vunpack.c.l.s4 1966171168
      %v746 = vunpack.c.0.s8 %v745
      %v747 = vlaneseq
      %v748 = vshrl.u32 %v747, 7
      %v749 = vsub.s32 %v746, %v748
      %v750 = vrot.slane %v740, %v749
      %v752 = vunpack.c.l.s4 1966171168
      %v753 = vunpack.c.0.s8 %v752
      %v754 = vlaneseq
      %v755 = vshrl.u32 %v754, 7
      %v756 = vsub.s32 %v753, %v755
      %v757 = vrot.slane %v741, %v756
      %v759 = vunpack.c.l.s4 1966171168
      %v760 = vunpack.c.0.s8 %v759
      %v761 = vlaneseq
      %v762 = vshrl.u32 %v761, 7
      %v763 = vsub.s32 %v760, %v762
      %v764 = vrot.slane %v742, %v763
      %v766 = vunpack.c.l.s4 1966171168
      %v767 = vunpack.c.0.s8 %v766
      %v768 = vlaneseq
      %v769 = vshrl.u32 %v768, 7
      %v770 = vsub.s32 %v767, %v769
      %v771 = vrot.slane %v743, %v770
      %v772 = vcombine.low %v750, %v757
      %v773 = vcombine.low %v764, %v771
      %v775 = vunpack.c.l.s4 1966171168
      %v776 = vunpack.c.0.s8 %v775
      %v777 = vlaneseq
      %v778 = vshrl.u32 %v777, 7
      %v779 = vsub.s32 %v776, %v778
      %v780 = vrot.slane %v772, %v779
      %v782 = vunpack.c.l.s4 1966171168
      %v783 = vunpack.c.0.s8 %v782
      %v784 = vlaneseq
      %v785 = vshrl.u32 %v784, 7
      %v786 = vsub.s32 %v783, %v785
      %v787 = vrot.slane %v773, %v786
      %v788 = vcombine.low %v780, %v787
      %v789 = vcombine.low %v437, %v445
      %v790 = vcombine.low %v447, %v430
      %v791 = vcombine.low %v444, %v446
      %v792 = vcombine.low %v448, %v472
      %v794 = vunpack.c.l.s4 1966171168
      %v795 = vunpack.c.0.s8 %v794
      %v796 = vlaneseq
      %v797 = vshrl.u32 %v796, 7
      %v798 = vsub.s32 %v795, %v797
      %v799 = vrot.slane %v789, %v798
      %v801 = vunpack.c.l.s4 1966171168
      %v802 = vunpack.c.0.s8 %v801
      %v803 = vlaneseq
      %v804 = vshrl.u32 %v803, 7
      %v805 = vsub.s32 %v802, %v804
      %v806 = vrot.slane %v790, %v805
      %v808 = vunpack.c.l.s4 1966171168
      %v809 = vunpack.c.0.s8 %v808
      %v810 = vlaneseq
      %v811 = vshrl.u32 %v810, 7
      %v812 = vsub.s32 %v809, %v811
      %v813 = vrot.slane %v791, %v812
      %v815 = vunpack.c.l.s4 1966171168
      %v816 = vunpack.c.0.s8 %v815
      %v817 = vlaneseq
      %v818 = vshrl.u32 %v817, 7
      %v819 = vsub.s32 %v816, %v818
      %v820 = vrot.slane %v792, %v819
      %v821 = vcombine.low %v799, %v806
      %v822 = vcombine.low %v813, %v820
      %v824 = vunpack.c.l.s4 1966171168
      %v825 = vunpack.c.0.s8 %v824
      %v826 = vlaneseq
      %v827 = vshrl.u32 %v826, 7
      %v828 = vsub.s32 %v825, %v827
      %v829 = vrot.slane %v821, %v828
      %v831 = vunpack.c.l.s4 1966171168
      %v832 = vunpack.c.0.s8 %v831
      %v833 = vlaneseq
      %v834 = vshrl.u32 %v833, 7
      %v835 = vsub.s32 %v832, %v834
      %v836 = vrot.slane %v822, %v835
      %v837 = vcombine.low %v829, %v836
      %v838 = vcombine.low %v486, %v494
      %v839 = vcombine.low %v496, %v479
      %v840 = vcombine.low %v493, %v495
      %v841 = vcombine.low %v520, %v534
      %v843 = vunpack.c.l.s4 1966171168
      %v844 = vunpack.c.0.s8 %v843
      %v845 = vlaneseq
      %v846 = vshrl.u32 %v845, 7
      %v847 = vsub.s32 %v844, %v846
      %v848 = vrot.slane %v838, %v847
      %v850 = vunpack.c.l.s4 1966171168
      %v851 = vunpack.c.0.s8 %v850
      %v852 = vlaneseq
      %v853 = vshrl.u32 %v852, 7
      %v854 = vsub.s32 %v851, %v853
      %v855 = vrot.slane %v839, %v854
      %v857 = vunpack.c.l.s4 1966171168
      %v858 = vunpack.c.0.s8 %v857
      %v859 = vlaneseq
      %v860 = vshrl.u32 %v859, 7
      %v861 = vsub.s32 %v858, %v860
      %v862 = vrot.slane %v840, %v861
      %v864 = vunpack.c.l.s4 1966171168
      %v865 = vunpack.c.0.s8 %v864
      %v866 = vlaneseq
      %v867 = vshrl.u32 %v866, 7
      %v868 = vsub.s32 %v865, %v867
      %v869 = vrot.slane %v841, %v868
      %v870 = vcombine.low %v848, %v855
      %v871 = vcombine.low %v862, %v869
      %v873 = vunpack.c.l.s4 1966171168
      %v874 = vunpack.c.0.s8 %v873
      %v875 = vlaneseq
      %v876 = vshrl.u32 %v875, 7
      %v877 = vsub.s32 %v874, %v876
      %v878 = vrot.slane %v870, %v877
      %v880 = vunpack.c.l.s4 1966171168
      %v881 = vunpack.c.0.s8 %v880
      %v882 = vlaneseq
      %v883 = vshrl.u32 %v882, 7
      %v884 = vsub.s32 %v881, %v883
      %v885 = vrot.slane %v871, %v884
      %v886 = vcombine.low %v878, %v885
      %v887 = vcombine.low %v542, %v544
      %v888 = vcombine.low %v527, %v541
      %v889 = vcombine.low %v543, %v545
      %v890 = vcombine.low %v569, %v583
      %v892 = vunpack.c.l.s4 1966171168
      %v893 = vunpack.c.0.s8 %v892
      %v894 = vlaneseq
      %v895 = vshrl.u32 %v894, 7
      %v896 = vsub.s32 %v893, %v895
      %v897 = vrot.slane %v887, %v896
      %v899 = vunpack.c.l.s4 1966171168
      %v900 = vunpack.c.0.s8 %v899
      %v901 = vlaneseq
      %v902 = vshrl.u32 %v901, 7
      %v903 = vsub.s32 %v900, %v902
      %v904 = vrot.slane %v888, %v903
      %v906 = vunpack.c.l.s4 1966171168
      %v907 = vunpack.c.0.s8 %v906
      %v908 = vlaneseq
      %v909 = vshrl.u32 %v908, 7
      %v910 = vsub.s32 %v907, %v909
      %v911 = vrot.slane %v889, %v910
      %v913 = vunpack.c.l.s4 1966171168
      %v914 = vunpack.c.0.s8 %v913
      %v915 = vlaneseq
      %v916 = vshrl.u32 %v915, 7
      %v917 = vsub.s32 %v914, %v916
      %v918 = vrot.slane %v890, %v917
      %v919 = vcombine.low %v897, %v904
      %v920 = vcombine.low %v911, %v918
      %v922 = vunpack.c.l.s4 1966171168
      %v923 = vunpack.c.0.s8 %v922
      %v924 = vlaneseq
      %v925 = vshrl.u32 %v924, 7
      %v926 = vsub.s32 %v923, %v925
      %v927 = vrot.slane %v919, %v926
      %v929 = vunpack.c.l.s4 1966171168
      %v930 = vunpack.c.0.s8 %v929
      %v931 = vlaneseq
      %v932 = vshrl.u32 %v931, 7
      %v933 = vsub.s32 %v930, %v932
      %v934 = vrot.slane %v920, %v933
      %v935 = vcombine.low %v927, %v934
      %v936 = vcombine.low %v591, %v593
      %v937 = vcombine.low %v576, %v590
      %v938 = vcombine.low %v592, %v617
      %v939 = vcombine.low %v631, %v639
      %v941 = vunpack.c.l.s4 1966171168
      %v942 = vunpack.c.0.s8 %v941
      %v943 = vlaneseq
      %v944 = vshrl.u32 %v943, 7
      %v945 = vsub.s32 %v942, %v944
      %v946 = vrot.slane %v936, %v945
      %v948 = vunpack.c.l.s4 1966171168
      %v949 = vunpack.c.0.s8 %v948
      %v950 = vlaneseq
      %v951 = vshrl.u32 %v950, 7
      %v952 = vsub.s32 %v949, %v951
      %v953 = vrot.slane %v937, %v952
      %v955 = vunpack.c.l.s4 1966171168
      %v956 = vunpack.c.0.s8 %v955
      %v957 = vlaneseq
      %v958 = vshrl.u32 %v957, 7
      %v959 = vsub.s32 %v956, %v958
      %v960 = vrot.slane %v938, %v959
      %v962 = vunpack.c.l.s4 1966171168
      %v963 = vunpack.c.0.s8 %v962
      %v964 = vlaneseq
      %v965 = vshrl.u32 %v964, 7
      %v966 = vsub.s32 %v963, %v965
      %v967 = vrot.slane %v939, %v966
      %v968 = vcombine.low %v946, %v953
      %v969 = vcombine.low %v960, %v967
      %v971 = vunpack.c.l.s4 1966171168
      %v972 = vunpack.c.0.s8 %v971
      %v973 = vlaneseq
      %v974 = vshrl.u32 %v973, 7
      %v975 = vsub.s32 %v972, %v974
      %v976 = vrot.slane %v968, %v975
      %v978 = vunpack.c.l.s4 1966171168
      %v979 = vunpack.c.0.s8 %v978
      %v980 = vlaneseq
      %v981 = vshrl.u32 %v980, 7
      %v982 = vsub.s32 %v979, %v981
      %v983 = vrot.slane %v969, %v982
      %v984 = vcombine.low %v976, %v983
      %v985 = vcombine.low %v641, %v624
      %v986 = vcombine.low %v638, %v640
      %v987 = vcombine.low %v642, %v666
      %v988 = vcombine.low %v680, %v688
      %v990 = vunpack.c.l.s4 1966171168
      %v991 = vunpack.c.0.s8 %v990
      %v992 = vlaneseq
      %v993 = vshrl.u32 %v992, 7
      %v994 = vsub.s32 %v991, %v993
      %v995 = vrot.slane %v985, %v994
      %v997 = vunpack.c.l.s4 1966171168
      %v998 = vunpack.c.0.s8 %v997
      %v999 = vlaneseq
      %v1000 = vshrl.u32 %v999, 7
      %v1001 = vsub.s32 %v998, %v1000
      %v1002 = vrot.slane %v986, %v1001
      %v1004 = vunpack.c.l.s4 1966171168
      %v1005 = vunpack.c.0.s8 %v1004
      %v1006 = vlaneseq
      %v1007 = vshrl.u32 %v1006, 7
      %v1008 = vsub.s32 %v1005, %v1007
      %v1009 = vrot.slane %v987, %v1008
      %v1011 = vunpack.c.l.s4 1966171168
      %v1012 = vunpack.c.0.s8 %v1011
      %v1013 = vlaneseq
      %v1014 = vshrl.u32 %v1013, 7
      %v1015 = vsub.s32 %v1012, %v1014
      %v1016 = vrot.slane %v988, %v1015
      %v1017 = vcombine.low %v995, %v1002
      %v1018 = vcombine.low %v1009, %v1016
      %v1020 = vunpack.c.l.s4 1966171168
      %v1021 = vunpack.c.0.s8 %v1020
      %v1022 = vlaneseq
      %v1023 = vshrl.u32 %v1022, 7
      %v1024 = vsub.s32 %v1021, %v1023
      %v1025 = vrot.slane %v1017, %v1024
      %v1027 = vunpack.c.l.s4 1966171168
      %v1028 = vunpack.c.0.s8 %v1027
      %v1029 = vlaneseq
      %v1030 = vshrl.u32 %v1029, 7
      %v1031 = vsub.s32 %v1028, %v1030
      %v1032 = vrot.slane %v1018, %v1031
      %v1033 = vcombine.low %v1025, %v1032
      %v1034 = vcombine.low %v690, %v673
      %v1035 = vcombine.low %v687, %v689
      %v1037 = vunpack.c.l.s4 1966171168
      %v1038 = vunpack.c.0.s8 %v1037
      %v1039 = vlaneseq
      %v1040 = vshrl.u32 %v1039, 7
      %v1041 = vsub.s32 %v1038, %v1040
      %v1042 = vrot.slane %v1034, %v1041
      %v1044 = vunpack.c.l.s4 1966171168
      %v1045 = vunpack.c.0.s8 %v1044
      %v1046 = vlaneseq
      %v1047 = vshrl.u32 %v1046, 7
      %v1048 = vsub.s32 %v1045, %v1047
      %v1049 = vrot.slane %v1035, %v1048
      %v1050 = vcombine.low %v1042, %v1049
      %v1052 = vunpack.c.l.s4 1966171168
      %v1053 = vunpack.c.0.s8 %v1052
      %v1054 = vlaneseq
      %v1055 = vshrl.u32 %v1054, 7
      %v1056 = vsub.s32 %v1053, %v1055
      %v1057 = vrot.slane %v1050, %v1056
      %v1066 = vpack.c.bf16 %v788, %v739
      %v1067 = vpack.c.bf16 %v886, %v837
      %v1068 = vpack.c.bf16 %v984, %v935
      %v1069 = vpack.c.bf16 %v1057, %v1033
      %v1070 = vlaneseq
      %v1071 = vshrl.u32 %v1070, 7
      %v1072 = vadd.s32 %v1071, 8
      %v1073 = vlaneseq
      %v1074 = vand.u32 %v1073, 127
      %v1075 = vmul.u32 %v1074, 2
      %vm1076 = vcmp.eq.s32.totalorder %v1071, %v1075
      %vm1077 = vcmp.eq.s32.totalorder %v1072, %v1075
      %v1078 = vsel %vm1076, 1, 0
      %v1079 = vsel %vm1077, 1, 0
      %v1080 = vcvt.s32.f32 %v1078
      %v1081 = vcvt.s32.f32 %v1079
      %v1082 = vpack.c.bf16 %v1081, %v1080
      %vm1083 = vcmask 121856
      %v1085 = vsel %vm1083, %v1066, 0
      %v1088 = vsel %vm1083, %v1067, 0
      %v1091 = vsel %vm1083, %v1068, 0
      %v1094 = vsel %vm1083, %v1069, 0
      %vm1096 = vcmask 1047552
      %v1097 = vsel %vm226, 4294967295, 65535
      %v1098 = vsel %vm1096, %v1097, 0
      %v1100 = vand.u32 %v1082, %v1098
      %1102 = vmatprep.subr.bf16.mxu0 0
      %1103 = vmatpush1.bf16.msra.mxu0 0
      %1104 = vmatprep.subr.bf16.mxu0 0
      %1105 = vmatpush1.bf16.msra.mxu0 0
      %1106 = vmatprep.subr.bf16.mxu0 0
      %1107 = vmatpush1.bf16.msra.mxu0 0
      %1108 = vmatprep.subr.bf16.mxu0 0
      %1109 = vmatpush1.bf16.msra.mxu0 0
      %1110 = vmatprep.subr.bf16.mxu0 0
      %1111 = vmatpush1.bf16.msra.mxu0 0
      %1112 = vmatprep.subr.bf16.mxu0 0
      %1113 = vmatpush1.bf16.msra.mxu0 0
      %1114 = vmatprep.subr.bf16.mxu0 0
      %1115 = vmatpush1.bf16.msra.mxu0 0
      %1116 = vmatprep.subr.bf16.mxu0 0
      %1117 = vmatpush1.bf16.msra.mxu0 %v1100
      %1118 = vmatprep.subr.bf16.mxu0 0
      %1119 = vmatpush2.bf16.msra.mxu0 0
      %1120 = vmatprep.subr.bf16.mxu0 0
      %1121 = vmatpush2.bf16.msra.mxu0 0
      %1122 = vmatprep.subr.bf16.mxu0 0
      %1123 = vmatpush2.bf16.msra.mxu0 0
      %1124 = vmatprep.subr.bf16.mxu0 0
      %1125 = vmatpush2.bf16.msra.mxu0 0
      %1126 = vmatprep.subr.bf16.mxu0 0
      %1127 = vmatpush2.bf16.msra.mxu0 0
      %1128 = vmatprep.subr.bf16.mxu0 0
      %1129 = vmatpush2.bf16.msra.mxu0 0
      %1130 = vmatprep.subr.bf16.mxu0 0
      %1131 = vmatpush2.bf16.msra.mxu0 0
      %1132 = vmatprep.subr.bf16.mxu0 0
      %1133 = vmatpush2.bf16.msra.mxu0 0
      %1134 = vmatprep.mubr.bf16.mxu0 0
      %1135 = vmatmul.mubr.bf16.gmra.mxu0 %v1085
      %v1136 = vpop.f32.mrf.mxu0
      %v1137 = vadd.f32 0.0, %v1136
      %v1138 = vpop.f32.mrf.mxu0
      %v1139 = vpop.f32.mrf.mxu0
      %v1140 = vadd.f32 0.0, %v1139
      %v1141 = vpop.f32.mrf.mxu0
      %1142 = vmatprep.mubr.bf16.mxu0 0
      %1143 = vmatmul.mubr.bf16.gmra.mxu0 %v1088
      %v1144 = vpop.f32.mrf.mxu0
      %v1145 = vadd.f32 0.0, %v1144
      %v1146 = vpop.f32.mrf.mxu0
      %v1147 = vpop.f32.mrf.mxu0
      %v1148 = vadd.f32 0.0, %v1147
      %v1149 = vpop.f32.mrf.mxu0
      %1150 = vmatprep.mubr.bf16.mxu0 0
      %1151 = vmatmul.mubr.bf16.gmra.mxu0 %v1091
      %v1152 = vpop.f32.mrf.mxu0
      %v1153 = vadd.f32 0.0, %v1152
      %v1154 = vpop.f32.mrf.mxu0
      %v1155 = vpop.f32.mrf.mxu0
      %v1156 = vadd.f32 0.0, %v1155
      %v1157 = vpop.f32.mrf.mxu0
      %1158 = vmatprep.mubr.bf16.mxu0 0
      %1159 = vmatmul.mubr.bf16.gmra.mxu0 %v1094
      %v1160 = vpop.f32.mrf.mxu0
      %v1161 = vadd.f32 0.0, %v1160
      %v1162 = vpop.f32.mrf.mxu0
      %v1163 = vpop.f32.mrf.mxu0
      %v1164 = vadd.f32 0.0, %v1163
      %v1165 = vpop.f32.mrf.mxu0
      %1166 = vdwg.mxu0
      %v1175 = vcombine.high %v1137, %v1137
      %v1177 = vunpack.c.l.s4 1966171168
      %v1178 = vunpack.c.0.s8 %v1177
      %v1179 = vlaneseq
      %v1180 = vshrl.u32 %v1179, 7
      %v1181 = vsub.s32 %v1178, %v1180
      %v1182 = vrot.slane %v1137, %v1181
      %v1184 = vunpack.c.l.s4 1966171168
      %v1185 = vunpack.c.0.s8 %v1184
      %v1186 = vlaneseq
      %v1187 = vshrl.u32 %v1186, 7
      %v1188 = vsub.s32 %v1185, %v1187
      %v1189 = vrot.slane %v1175, %v1188
      %v1190 = vcombine.high %v1182, %v1182
      %v1191 = vcombine.high %v1189, %v1189
      %v1193 = vunpack.c.l.s4 1966171168
      %v1194 = vunpack.c.0.s8 %v1193
      %v1195 = vlaneseq
      %v1196 = vshrl.u32 %v1195, 7
      %v1197 = vsub.s32 %v1194, %v1196
      %v1198 = vrot.slane %v1182, %v1197
      %v1200 = vunpack.c.l.s4 1966171168
      %v1201 = vunpack.c.0.s8 %v1200
      %v1202 = vlaneseq
      %v1203 = vshrl.u32 %v1202, 7
      %v1204 = vsub.s32 %v1201, %v1203
      %v1205 = vrot.slane %v1189, %v1204
      %v1207 = vunpack.c.l.s4 1966171168
      %v1208 = vunpack.c.0.s8 %v1207
      %v1209 = vlaneseq
      %v1210 = vshrl.u32 %v1209, 7
      %v1211 = vsub.s32 %v1208, %v1210
      %v1212 = vrot.slane %v1190, %v1211
      %v1214 = vunpack.c.l.s4 1966171168
      %v1215 = vunpack.c.0.s8 %v1214
      %v1216 = vlaneseq
      %v1217 = vshrl.u32 %v1216, 7
      %v1218 = vsub.s32 %v1215, %v1217
      %v1219 = vrot.slane %v1191, %v1218
      %v1220 = vcombine.high %v1198, %v1198
      %v1221 = vcombine.high %v1205, %v1205
      %v1222 = vcombine.high %v1212, %v1212
      %v1223 = vcombine.high %v1219, %v1219
      %v1224 = vcombine.high %v1140, %v1140
      %v1226 = vunpack.c.l.s4 1966171168
      %v1227 = vunpack.c.0.s8 %v1226
      %v1228 = vlaneseq
      %v1229 = vshrl.u32 %v1228, 7
      %v1230 = vsub.s32 %v1227, %v1229
      %v1231 = vrot.slane %v1140, %v1230
      %v1233 = vunpack.c.l.s4 1966171168
      %v1234 = vunpack.c.0.s8 %v1233
      %v1235 = vlaneseq
      %v1236 = vshrl.u32 %v1235, 7
      %v1237 = vsub.s32 %v1234, %v1236
      %v1238 = vrot.slane %v1224, %v1237
      %v1239 = vcombine.high %v1231, %v1231
      %v1240 = vcombine.high %v1238, %v1238
      %v1242 = vunpack.c.l.s4 1966171168
      %v1243 = vunpack.c.0.s8 %v1242
      %v1244 = vlaneseq
      %v1245 = vshrl.u32 %v1244, 7
      %v1246 = vsub.s32 %v1243, %v1245
      %v1247 = vrot.slane %v1231, %v1246
      %v1249 = vunpack.c.l.s4 1966171168
      %v1250 = vunpack.c.0.s8 %v1249
      %v1251 = vlaneseq
      %v1252 = vshrl.u32 %v1251, 7
      %v1253 = vsub.s32 %v1250, %v1252
      %v1254 = vrot.slane %v1238, %v1253
      %v1256 = vunpack.c.l.s4 1966171168
      %v1257 = vunpack.c.0.s8 %v1256
      %v1258 = vlaneseq
      %v1259 = vshrl.u32 %v1258, 7
      %v1260 = vsub.s32 %v1257, %v1259
      %v1261 = vrot.slane %v1239, %v1260
      %v1263 = vunpack.c.l.s4 1966171168
      %v1264 = vunpack.c.0.s8 %v1263
      %v1265 = vlaneseq
      %v1266 = vshrl.u32 %v1265, 7
      %v1267 = vsub.s32 %v1264, %v1266
      %v1268 = vrot.slane %v1240, %v1267
      %v1269 = vcombine.high %v1247, %v1247
      %v1270 = vcombine.high %v1254, %v1254
      %v1271 = vcombine.high %v1261, %v1261
      %v1272 = vcombine.high %v1268, %v1268
      %v1273 = vcombine.high %v1145, %v1145
      %v1275 = vunpack.c.l.s4 1966171168
      %v1276 = vunpack.c.0.s8 %v1275
      %v1277 = vlaneseq
      %v1278 = vshrl.u32 %v1277, 7
      %v1279 = vsub.s32 %v1276, %v1278
      %v1280 = vrot.slane %v1145, %v1279
      %v1282 = vunpack.c.l.s4 1966171168
      %v1283 = vunpack.c.0.s8 %v1282
      %v1284 = vlaneseq
      %v1285 = vshrl.u32 %v1284, 7
      %v1286 = vsub.s32 %v1283, %v1285
      %v1287 = vrot.slane %v1273, %v1286
      %v1288 = vcombine.high %v1280, %v1280
      %v1289 = vcombine.high %v1287, %v1287
      %v1291 = vunpack.c.l.s4 1966171168
      %v1292 = vunpack.c.0.s8 %v1291
      %v1293 = vlaneseq
      %v1294 = vshrl.u32 %v1293, 7
      %v1295 = vsub.s32 %v1292, %v1294
      %v1296 = vrot.slane %v1280, %v1295
      %v1298 = vunpack.c.l.s4 1966171168
      %v1299 = vunpack.c.0.s8 %v1298
      %v1300 = vlaneseq
      %v1301 = vshrl.u32 %v1300, 7
      %v1302 = vsub.s32 %v1299, %v1301
      %v1303 = vrot.slane %v1287, %v1302
      %v1305 = vunpack.c.l.s4 1966171168
      %v1306 = vunpack.c.0.s8 %v1305
      %v1307 = vlaneseq
      %v1308 = vshrl.u32 %v1307, 7
      %v1309 = vsub.s32 %v1306, %v1308
      %v1310 = vrot.slane %v1288, %v1309
      %v1312 = vunpack.c.l.s4 1966171168
      %v1313 = vunpack.c.0.s8 %v1312
      %v1314 = vlaneseq
      %v1315 = vshrl.u32 %v1314, 7
      %v1316 = vsub.s32 %v1313, %v1315
      %v1317 = vrot.slane %v1289, %v1316
      %v1318 = vcombine.high %v1296, %v1296
      %v1319 = vcombine.high %v1303, %v1303
      %v1320 = vcombine.high %v1310, %v1310
      %v1321 = vcombine.high %v1317, %v1317
      %v1322 = vcombine.high %v1148, %v1148
      %v1324 = vunpack.c.l.s4 1966171168
      %v1325 = vunpack.c.0.s8 %v1324
      %v1326 = vlaneseq
      %v1327 = vshrl.u32 %v1326, 7
      %v1328 = vsub.s32 %v1325, %v1327
      %v1329 = vrot.slane %v1148, %v1328
      %v1331 = vunpack.c.l.s4 1966171168
      %v1332 = vunpack.c.0.s8 %v1331
      %v1333 = vlaneseq
      %v1334 = vshrl.u32 %v1333, 7
      %v1335 = vsub.s32 %v1332, %v1334
      %v1336 = vrot.slane %v1322, %v1335
      %v1337 = vcombine.high %v1329, %v1329
      %v1338 = vcombine.high %v1336, %v1336
      %v1340 = vunpack.c.l.s4 1966171168
      %v1341 = vunpack.c.0.s8 %v1340
      %v1342 = vlaneseq
      %v1343 = vshrl.u32 %v1342, 7
      %v1344 = vsub.s32 %v1341, %v1343
      %v1345 = vrot.slane %v1329, %v1344
      %v1347 = vunpack.c.l.s4 1966171168
      %v1348 = vunpack.c.0.s8 %v1347
      %v1349 = vlaneseq
      %v1350 = vshrl.u32 %v1349, 7
      %v1351 = vsub.s32 %v1348, %v1350
      %v1352 = vrot.slane %v1336, %v1351
      %v1354 = vunpack.c.l.s4 1966171168
      %v1355 = vunpack.c.0.s8 %v1354
      %v1356 = vlaneseq
      %v1357 = vshrl.u32 %v1356, 7
      %v1358 = vsub.s32 %v1355, %v1357
      %v1359 = vrot.slane %v1337, %v1358
      %v1361 = vunpack.c.l.s4 1966171168
      %v1362 = vunpack.c.0.s8 %v1361
      %v1363 = vlaneseq
      %v1364 = vshrl.u32 %v1363, 7
      %v1365 = vsub.s32 %v1362, %v1364
      %v1366 = vrot.slane %v1338, %v1365
      %v1367 = vcombine.high %v1345, %v1345
      %v1368 = vcombine.high %v1352, %v1352
      %v1369 = vcombine.high %v1359, %v1359
      %v1370 = vcombine.high %v1366, %v1366
      %v1371 = vcombine.high %v1153, %v1153
      %v1373 = vunpack.c.l.s4 1966171168
      %v1374 = vunpack.c.0.s8 %v1373
      %v1375 = vlaneseq
      %v1376 = vshrl.u32 %v1375, 7
      %v1377 = vsub.s32 %v1374, %v1376
      %v1378 = vrot.slane %v1153, %v1377
      %v1380 = vunpack.c.l.s4 1966171168
      %v1381 = vunpack.c.0.s8 %v1380
      %v1382 = vlaneseq
      %v1383 = vshrl.u32 %v1382, 7
      %v1384 = vsub.s32 %v1381, %v1383
      %v1385 = vrot.slane %v1371, %v1384
      %v1386 = vcombine.high %v1378, %v1378
      %v1387 = vcombine.high %v1385, %v1385
      %v1389 = vunpack.c.l.s4 1966171168
      %v1390 = vunpack.c.0.s8 %v1389
      %v1391 = vlaneseq
      %v1392 = vshrl.u32 %v1391, 7
      %v1393 = vsub.s32 %v1390, %v1392
      %v1394 = vrot.slane %v1378, %v1393
      %v1396 = vunpack.c.l.s4 1966171168
      %v1397 = vunpack.c.0.s8 %v1396
      %v1398 = vlaneseq
      %v1399 = vshrl.u32 %v1398, 7
      %v1400 = vsub.s32 %v1397, %v1399
      %v1401 = vrot.slane %v1385, %v1400
      %v1403 = vunpack.c.l.s4 1966171168
      %v1404 = vunpack.c.0.s8 %v1403
      %v1405 = vlaneseq
      %v1406 = vshrl.u32 %v1405, 7
      %v1407 = vsub.s32 %v1404, %v1406
      %v1408 = vrot.slane %v1386, %v1407
      %v1410 = vunpack.c.l.s4 1966171168
      %v1411 = vunpack.c.0.s8 %v1410
      %v1412 = vlaneseq
      %v1413 = vshrl.u32 %v1412, 7
      %v1414 = vsub.s32 %v1411, %v1413
      %v1415 = vrot.slane %v1387, %v1414
      %v1416 = vcombine.high %v1394, %v1394
      %v1417 = vcombine.high %v1401, %v1401
      %v1418 = vcombine.high %v1408, %v1408
      %v1419 = vcombine.high %v1415, %v1415
      %v1420 = vcombine.high %v1156, %v1156
      %v1422 = vunpack.c.l.s4 1966171168
      %v1423 = vunpack.c.0.s8 %v1422
      %v1424 = vlaneseq
      %v1425 = vshrl.u32 %v1424, 7
      %v1426 = vsub.s32 %v1423, %v1425
      %v1427 = vrot.slane %v1156, %v1426
      %v1429 = vunpack.c.l.s4 1966171168
      %v1430 = vunpack.c.0.s8 %v1429
      %v1431 = vlaneseq
      %v1432 = vshrl.u32 %v1431, 7
      %v1433 = vsub.s32 %v1430, %v1432
      %v1434 = vrot.slane %v1420, %v1433
      %v1435 = vcombine.high %v1427, %v1427
      %v1436 = vcombine.high %v1434, %v1434
      %v1438 = vunpack.c.l.s4 1966171168
      %v1439 = vunpack.c.0.s8 %v1438
      %v1440 = vlaneseq
      %v1441 = vshrl.u32 %v1440, 7
      %v1442 = vsub.s32 %v1439, %v1441
      %v1443 = vrot.slane %v1427, %v1442
      %v1445 = vunpack.c.l.s4 1966171168
      %v1446 = vunpack.c.0.s8 %v1445
      %v1447 = vlaneseq
      %v1448 = vshrl.u32 %v1447, 7
      %v1449 = vsub.s32 %v1446, %v1448
      %v1450 = vrot.slane %v1434, %v1449
      %v1452 = vunpack.c.l.s4 1966171168
      %v1453 = vunpack.c.0.s8 %v1452
      %v1454 = vlaneseq
      %v1455 = vshrl.u32 %v1454, 7
      %v1456 = vsub.s32 %v1453, %v1455
      %v1457 = vrot.slane %v1435, %v1456
      %v1459 = vunpack.c.l.s4 1966171168
      %v1460 = vunpack.c.0.s8 %v1459
      %v1461 = vlaneseq
      %v1462 = vshrl.u32 %v1461, 7
      %v1463 = vsub.s32 %v1460, %v1462
      %v1464 = vrot.slane %v1436, %v1463
      %v1465 = vcombine.high %v1443, %v1443
      %v1466 = vcombine.high %v1450, %v1450
      %v1467 = vcombine.high %v1457, %v1457
      %v1468 = vcombine.high %v1464, %v1464
      %v1469 = vcombine.high %v1161, %v1161
      %v1471 = vunpack.c.l.s4 1966171168
      %v1472 = vunpack.c.0.s8 %v1471
      %v1473 = vlaneseq
      %v1474 = vshrl.u32 %v1473, 7
      %v1475 = vsub.s32 %v1472, %v1474
      %v1476 = vrot.slane %v1161, %v1475
      %v1478 = vunpack.c.l.s4 1966171168
      %v1479 = vunpack.c.0.s8 %v1478
      %v1480 = vlaneseq
      %v1481 = vshrl.u32 %v1480, 7
      %v1482 = vsub.s32 %v1479, %v1481
      %v1483 = vrot.slane %v1469, %v1482
      %v1484 = vcombine.high %v1476, %v1476
      %v1485 = vcombine.high %v1483, %v1483
      %v1487 = vunpack.c.l.s4 1966171168
      %v1488 = vunpack.c.0.s8 %v1487
      %v1489 = vlaneseq
      %v1490 = vshrl.u32 %v1489, 7
      %v1491 = vsub.s32 %v1488, %v1490
      %v1492 = vrot.slane %v1476, %v1491
      %v1494 = vunpack.c.l.s4 1966171168
      %v1495 = vunpack.c.0.s8 %v1494
      %v1496 = vlaneseq
      %v1497 = vshrl.u32 %v1496, 7
      %v1498 = vsub.s32 %v1495, %v1497
      %v1499 = vrot.slane %v1483, %v1498
      %v1501 = vunpack.c.l.s4 1966171168
      %v1502 = vunpack.c.0.s8 %v1501
      %v1503 = vlaneseq
      %v1504 = vshrl.u32 %v1503, 7
      %v1505 = vsub.s32 %v1502, %v1504
      %v1506 = vrot.slane %v1484, %v1505
      %v1508 = vunpack.c.l.s4 1966171168
      %v1509 = vunpack.c.0.s8 %v1508
      %v1510 = vlaneseq
      %v1511 = vshrl.u32 %v1510, 7
      %v1512 = vsub.s32 %v1509, %v1511
      %v1513 = vrot.slane %v1485, %v1512
      %v1514 = vcombine.high %v1492, %v1492
      %v1515 = vcombine.high %v1499, %v1499
      %v1516 = vcombine.high %v1506, %v1506
      %v1517 = vcombine.high %v1513, %v1513
      %v1519 = vunpack.c.l.s4 1966171168
      %v1520 = vunpack.c.0.s8 %v1519
      %v1521 = vlaneseq
      %v1522 = vshrl.u32 %v1521, 7
      %v1523 = vsub.s32 %v1520, %v1522
      %v1524 = vrot.slane %v1164, %v1523
      %v1525 = vcombine.high %v1524, %v1524
      %v1527 = vunpack.c.l.s4 1966171168
      %v1528 = vunpack.c.0.s8 %v1527
      %v1529 = vlaneseq
      %v1530 = vshrl.u32 %v1529, 7
      %v1531 = vsub.s32 %v1528, %v1530
      %v1532 = vrot.slane %v1524, %v1531
      %v1534 = vunpack.c.l.s4 1966171168
      %v1535 = vunpack.c.0.s8 %v1534
      %v1536 = vlaneseq
      %v1537 = vshrl.u32 %v1536, 7
      %v1538 = vsub.s32 %v1535, %v1537
      %v1539 = vrot.slane %v1525, %v1538
      %v1540 = vcombine.high %v1532, %v1532
      %v1541 = vcombine.high %v1539, %v1539
      %v1542 = vcombine.low %v1198, %v1212
      %v1543 = vcombine.low %v1220, %v1222
      %v1544 = vcombine.low %v1205, %v1219
      %v1545 = vcombine.low %v1221, %v1223
      %v1547 = vunpack.c.l.s4 1966171168
      %v1548 = vunpack.c.0.s8 %v1547
      %v1549 = vlaneseq
      %v1550 = vshrl.u32 %v1549, 7
      %v1551 = vsub.s32 %v1548, %v1550
      %v1552 = vrot.slane %v1542, %v1551
      %v1554 = vunpack.c.l.s4 1966171168
      %v1555 = vunpack.c.0.s8 %v1554
      %v1556 = vlaneseq
      %v1557 = vshrl.u32 %v1556, 7
      %v1558 = vsub.s32 %v1555, %v1557
      %v1559 = vrot.slane %v1543, %v1558
      %v1561 = vunpack.c.l.s4 1966171168
      %v1562 = vunpack.c.0.s8 %v1561
      %v1563 = vlaneseq
      %v1564 = vshrl.u32 %v1563, 7
      %v1565 = vsub.s32 %v1562, %v1564
      %v1566 = vrot.slane %v1544, %v1565
      %v1568 = vunpack.c.l.s4 1966171168
      %v1569 = vunpack.c.0.s8 %v1568
      %v1570 = vlaneseq
      %v1571 = vshrl.u32 %v1570, 7
      %v1572 = vsub.s32 %v1569, %v1571
      %v1573 = vrot.slane %v1545, %v1572
      %v1574 = vcombine.low %v1552, %v1559
      %v1575 = vcombine.low %v1566, %v1573
      %v1577 = vunpack.c.l.s4 1966171168
      %v1578 = vunpack.c.0.s8 %v1577
      %v1579 = vlaneseq
      %v1580 = vshrl.u32 %v1579, 7
      %v1581 = vsub.s32 %v1578, %v1580
      %v1582 = vrot.slane %v1574, %v1581
      %v1584 = vunpack.c.l.s4 1966171168
      %v1585 = vunpack.c.0.s8 %v1584
      %v1586 = vlaneseq
      %v1587 = vshrl.u32 %v1586, 7
      %v1588 = vsub.s32 %v1585, %v1587
      %v1589 = vrot.slane %v1575, %v1588
      %v1590 = vcombine.low %v1582, %v1589
      %v1591 = vcombine.low %v1247, %v1261
      %v1592 = vcombine.low %v1269, %v1271
      %v1593 = vcombine.low %v1254, %v1268
      %v1595 = vunpack.c.l.s4 1966171168
      %v1596 = vunpack.c.0.s8 %v1595
      %v1597 = vlaneseq
      %v1598 = vshrl.u32 %v1597, 7
      %v1599 = vsub.s32 %v1596, %v1598
      %v1600 = vrot.slane %v1591, %v1599
      %v1602 = vunpack.c.l.s4 1966171168
      %v1603 = vunpack.c.0.s8 %v1602
      %v1604 = vlaneseq
      %v1605 = vshrl.u32 %v1604, 7
      %v1606 = vsub.s32 %v1603, %v1605
      %v1607 = vrot.slane %v1592, %v1606
      %v1609 = vunpack.c.l.s4 1966171168
      %v1610 = vunpack.c.0.s8 %v1609
      %v1611 = vlaneseq
      %v1612 = vshrl.u32 %v1611, 7
      %v1613 = vsub.s32 %v1610, %v1612
      %v1614 = vrot.slane %v1593, %v1613
      %v1616 = vunpack.c.l.s4 1966171168
      %v1617 = vunpack.c.0.s8 %v1616
      %v1618 = vlaneseq
      %v1619 = vshrl.u32 %v1618, 7
      %v1620 = vsub.s32 %v1617, %v1619
      %v1621 = vrot.slane %v1270, %v1620
      %v1622 = vcombine.low %v1600, %v1607
      %v1623 = vcombine.low %v1614, %v1621
      %v1625 = vunpack.c.l.s4 1966171168
      %v1626 = vunpack.c.0.s8 %v1625
      %v1627 = vlaneseq
      %v1628 = vshrl.u32 %v1627, 7
      %v1629 = vsub.s32 %v1626, %v1628
      %v1630 = vrot.slane %v1622, %v1629
      %v1632 = vunpack.c.l.s4 1966171168
      %v1633 = vunpack.c.0.s8 %v1632
      %v1634 = vlaneseq
      %v1635 = vshrl.u32 %v1634, 7
      %v1636 = vsub.s32 %v1633, %v1635
      %v1637 = vrot.slane %v1623, %v1636
      %v1638 = vcombine.low %v1630, %v1637
      %v1639 = vcombine.low %v1272, %v1296
      %v1640 = vcombine.low %v1310, %v1318
      %v1641 = vcombine.low %v1320, %v1303
      %v1642 = vcombine.low %v1317, %v1319
      %v1644 = vunpack.c.l.s4 1966171168
      %v1645 = vunpack.c.0.s8 %v1644
      %v1646 = vlaneseq
      %v1647 = vshrl.u32 %v1646, 7
      %v1648 = vsub.s32 %v1645, %v1647
      %v1649 = vrot.slane %v1639, %v1648
      %v1651 = vunpack.c.l.s4 1966171168
      %v1652 = vunpack.c.0.s8 %v1651
      %v1653 = vlaneseq
      %v1654 = vshrl.u32 %v1653, 7
      %v1655 = vsub.s32 %v1652, %v1654
      %v1656 = vrot.slane %v1640, %v1655
      %v1658 = vunpack.c.l.s4 1966171168
      %v1659 = vunpack.c.0.s8 %v1658
      %v1660 = vlaneseq
      %v1661 = vshrl.u32 %v1660, 7
      %v1662 = vsub.s32 %v1659, %v1661
      %v1663 = vrot.slane %v1641, %v1662
      %v1665 = vunpack.c.l.s4 1966171168
      %v1666 = vunpack.c.0.s8 %v1665
      %v1667 = vlaneseq
      %v1668 = vshrl.u32 %v1667, 7
      %v1669 = vsub.s32 %v1666, %v1668
      %v1670 = vrot.slane %v1642, %v1669
      %v1671 = vcombine.low %v1649, %v1656
      %v1672 = vcombine.low %v1663, %v1670
      %v1674 = vunpack.c.l.s4 1966171168
      %v1675 = vunpack.c.0.s8 %v1674
      %v1676 = vlaneseq
      %v1677 = vshrl.u32 %v1676, 7
      %v1678 = vsub.s32 %v1675, %v1677
      %v1679 = vrot.slane %v1671, %v1678
      %v1681 = vunpack.c.l.s4 1966171168
      %v1682 = vunpack.c.0.s8 %v1681
      %v1683 = vlaneseq
      %v1684 = vshrl.u32 %v1683, 7
      %v1685 = vsub.s32 %v1682, %v1684
      %v1686 = vrot.slane %v1672, %v1685
      %v1687 = vcombine.low %v1679, %v1686
      %v1688 = vcombine.low %v1321, %v1345
      %v1689 = vcombine.low %v1359, %v1367
      %v1690 = vcombine.low %v1369, %v1352
      %v1692 = vunpack.c.l.s4 1966171168
      %v1693 = vunpack.c.0.s8 %v1692
      %v1694 = vlaneseq
      %v1695 = vshrl.u32 %v1694, 7
      %v1696 = vsub.s32 %v1693, %v1695
      %v1697 = vrot.slane %v1688, %v1696
      %v1699 = vunpack.c.l.s4 1966171168
      %v1700 = vunpack.c.0.s8 %v1699
      %v1701 = vlaneseq
      %v1702 = vshrl.u32 %v1701, 7
      %v1703 = vsub.s32 %v1700, %v1702
      %v1704 = vrot.slane %v1689, %v1703
      %v1706 = vunpack.c.l.s4 1966171168
      %v1707 = vunpack.c.0.s8 %v1706
      %v1708 = vlaneseq
      %v1709 = vshrl.u32 %v1708, 7
      %v1710 = vsub.s32 %v1707, %v1709
      %v1711 = vrot.slane %v1690, %v1710
      %v1713 = vunpack.c.l.s4 1966171168
      %v1714 = vunpack.c.0.s8 %v1713
      %v1715 = vlaneseq
      %v1716 = vshrl.u32 %v1715, 7
      %v1717 = vsub.s32 %v1714, %v1716
      %v1718 = vrot.slane %v1366, %v1717
      %v1719 = vcombine.low %v1697, %v1704
      %v1720 = vcombine.low %v1711, %v1718
      %v1722 = vunpack.c.l.s4 1966171168
      %v1723 = vunpack.c.0.s8 %v1722
      %v1724 = vlaneseq
      %v1725 = vshrl.u32 %v1724, 7
      %v1726 = vsub.s32 %v1723, %v1725
      %v1727 = vrot.slane %v1719, %v1726
      %v1729 = vunpack.c.l.s4 1966171168
      %v1730 = vunpack.c.0.s8 %v1729
      %v1731 = vlaneseq
      %v1732 = vshrl.u32 %v1731, 7
      %v1733 = vsub.s32 %v1730, %v1732
      %v1734 = vrot.slane %v1720, %v1733
      %v1735 = vcombine.low %v1727, %v1734
      %v1736 = vcombine.low %v1368, %v1370
      %v1737 = vcombine.low %v1394, %v1408
      %v1738 = vcombine.low %v1416, %v1418
      %v1739 = vcombine.low %v1401, %v1415
      %v1741 = vunpack.c.l.s4 1966171168
      %v1742 = vunpack.c.0.s8 %v1741
      %v1743 = vlaneseq
      %v1744 = vshrl.u32 %v1743, 7
      %v1745 = vsub.s32 %v1742, %v1744
      %v1746 = vrot.slane %v1736, %v1745
      %v1748 = vunpack.c.l.s4 1966171168
      %v1749 = vunpack.c.0.s8 %v1748
      %v1750 = vlaneseq
      %v1751 = vshrl.u32 %v1750, 7
      %v1752 = vsub.s32 %v1749, %v1751
      %v1753 = vrot.slane %v1737, %v1752
      %v1755 = vunpack.c.l.s4 1966171168
      %v1756 = vunpack.c.0.s8 %v1755
      %v1757 = vlaneseq
      %v1758 = vshrl.u32 %v1757, 7
      %v1759 = vsub.s32 %v1756, %v1758
      %v1760 = vrot.slane %v1738, %v1759
      %v1762 = vunpack.c.l.s4 1966171168
      %v1763 = vunpack.c.0.s8 %v1762
      %v1764 = vlaneseq
      %v1765 = vshrl.u32 %v1764, 7
      %v1766 = vsub.s32 %v1763, %v1765
      %v1767 = vrot.slane %v1739, %v1766
      %v1768 = vcombine.low %v1746, %v1753
      %v1769 = vcombine.low %v1760, %v1767
      %v1771 = vunpack.c.l.s4 1966171168
      %v1772 = vunpack.c.0.s8 %v1771
      %v1773 = vlaneseq
      %v1774 = vshrl.u32 %v1773, 7
      %v1775 = vsub.s32 %v1772, %v1774
      %v1776 = vrot.slane %v1768, %v1775
      %v1778 = vunpack.c.l.s4 1966171168
      %v1779 = vunpack.c.0.s8 %v1778
      %v1780 = vlaneseq
      %v1781 = vshrl.u32 %v1780, 7
      %v1782 = vsub.s32 %v1779, %v1781
      %v1783 = vrot.slane %v1769, %v1782
      %v1784 = vcombine.low %v1776, %v1783
      %v1785 = vcombine.low %v1417, %v1419
      %v1786 = vcombine.low %v1443, %v1457
      %v1787 = vcombine.low %v1465, %v1467
      %v1789 = vunpack.c.l.s4 1966171168
      %v1790 = vunpack.c.0.s8 %v1789
      %v1791 = vlaneseq
      %v1792 = vshrl.u32 %v1791, 7
      %v1793 = vsub.s32 %v1790, %v1792
      %v1794 = vrot.slane %v1785, %v1793
      %v1796 = vunpack.c.l.s4 1966171168
      %v1797 = vunpack.c.0.s8 %v1796
      %v1798 = vlaneseq
      %v1799 = vshrl.u32 %v1798, 7
      %v1800 = vsub.s32 %v1797, %v1799
      %v1801 = vrot.slane %v1786, %v1800
      %v1803 = vunpack.c.l.s4 1966171168
      %v1804 = vunpack.c.0.s8 %v1803
      %v1805 = vlaneseq
      %v1806 = vshrl.u32 %v1805, 7
      %v1807 = vsub.s32 %v1804, %v1806
      %v1808 = vrot.slane %v1787, %v1807
      %v1810 = vunpack.c.l.s4 1966171168
      %v1811 = vunpack.c.0.s8 %v1810
      %v1812 = vlaneseq
      %v1813 = vshrl.u32 %v1812, 7
      %v1814 = vsub.s32 %v1811, %v1813
      %v1815 = vrot.slane %v1450, %v1814
      %v1816 = vcombine.low %v1794, %v1801
      %v1817 = vcombine.low %v1808, %v1815
      %v1819 = vunpack.c.l.s4 1966171168
      %v1820 = vunpack.c.0.s8 %v1819
      %v1821 = vlaneseq
      %v1822 = vshrl.u32 %v1821, 7
      %v1823 = vsub.s32 %v1820, %v1822
      %v1824 = vrot.slane %v1816, %v1823
      %v1826 = vunpack.c.l.s4 1966171168
      %v1827 = vunpack.c.0.s8 %v1826
      %v1828 = vlaneseq
      %v1829 = vshrl.u32 %v1828, 7
      %v1830 = vsub.s32 %v1827, %v1829
      %v1831 = vrot.slane %v1817, %v1830
      %v1832 = vcombine.low %v1824, %v1831
      %v1833 = vcombine.low %v1464, %v1466
      %v1834 = vcombine.low %v1468, %v1492
      %v1835 = vcombine.low %v1506, %v1514
      %v1836 = vcombine.low %v1516, %v1499
      %v1838 = vunpack.c.l.s4 1966171168
      %v1839 = vunpack.c.0.s8 %v1838
      %v1840 = vlaneseq
      %v1841 = vshrl.u32 %v1840, 7
      %v1842 = vsub.s32 %v1839, %v1841
      %v1843 = vrot.slane %v1833, %v1842
      %v1845 = vunpack.c.l.s4 1966171168
      %v1846 = vunpack.c.0.s8 %v1845
      %v1847 = vlaneseq
      %v1848 = vshrl.u32 %v1847, 7
      %v1849 = vsub.s32 %v1846, %v1848
      %v1850 = vrot.slane %v1834, %v1849
      %v1852 = vunpack.c.l.s4 1966171168
      %v1853 = vunpack.c.0.s8 %v1852
      %v1854 = vlaneseq
      %v1855 = vshrl.u32 %v1854, 7
      %v1856 = vsub.s32 %v1853, %v1855
      %v1857 = vrot.slane %v1835, %v1856
      %v1859 = vunpack.c.l.s4 1966171168
      %v1860 = vunpack.c.0.s8 %v1859
      %v1861 = vlaneseq
      %v1862 = vshrl.u32 %v1861, 7
      %v1863 = vsub.s32 %v1860, %v1862
      %v1864 = vrot.slane %v1836, %v1863
      %v1865 = vcombine.low %v1843, %v1850
      %v1866 = vcombine.low %v1857, %v1864
      %v1868 = vunpack.c.l.s4 1966171168
      %v1869 = vunpack.c.0.s8 %v1868
      %v1870 = vlaneseq
      %v1871 = vshrl.u32 %v1870, 7
      %v1872 = vsub.s32 %v1869, %v1871
      %v1873 = vrot.slane %v1865, %v1872
      %v1875 = vunpack.c.l.s4 1966171168
      %v1876 = vunpack.c.0.s8 %v1875
      %v1877 = vlaneseq
      %v1878 = vshrl.u32 %v1877, 7
      %v1879 = vsub.s32 %v1876, %v1878
      %v1880 = vrot.slane %v1866, %v1879
      %v1881 = vcombine.low %v1873, %v1880
      %v1882 = vcombine.low %v1513, %v1515
      %v1883 = vcombine.low %v1517, %v1532
      %v1884 = vcombine.low %v1539, %v1540
      %v1886 = vunpack.c.l.s4 1966171168
      %v1887 = vunpack.c.0.s8 %v1886
      %v1888 = vlaneseq
      %v1889 = vshrl.u32 %v1888, 7
      %v1890 = vsub.s32 %v1887, %v1889
      %v1891 = vrot.slane %v1882, %v1890
      %v1893 = vunpack.c.l.s4 1966171168
      %v1894 = vunpack.c.0.s8 %v1893
      %v1895 = vlaneseq
      %v1896 = vshrl.u32 %v1895, 7
      %v1897 = vsub.s32 %v1894, %v1896
      %v1898 = vrot.slane %v1883, %v1897
      %v1900 = vunpack.c.l.s4 1966171168
      %v1901 = vunpack.c.0.s8 %v1900
      %v1902 = vlaneseq
      %v1903 = vshrl.u32 %v1902, 7
      %v1904 = vsub.s32 %v1901, %v1903
      %v1905 = vrot.slane %v1884, %v1904
      %v1907 = vunpack.c.l.s4 1966171168
      %v1908 = vunpack.c.0.s8 %v1907
      %v1909 = vlaneseq
      %v1910 = vshrl.u32 %v1909, 7
      %v1911 = vsub.s32 %v1908, %v1910
      %v1912 = vrot.slane %v1541, %v1911
      %v1913 = vcombine.low %v1891, %v1898
      %v1914 = vcombine.low %v1905, %v1912
      %v1916 = vunpack.c.l.s4 1966171168
      %v1917 = vunpack.c.0.s8 %v1916
      %v1918 = vlaneseq
      %v1919 = vshrl.u32 %v1918, 7
      %v1920 = vsub.s32 %v1917, %v1919
      %v1921 = vrot.slane %v1913, %v1920
      %v1923 = vunpack.c.l.s4 1966171168
      %v1924 = vunpack.c.0.s8 %v1923
      %v1925 = vlaneseq
      %v1926 = vshrl.u32 %v1925, 7
      %v1927 = vsub.s32 %v1924, %v1926
      %v1928 = vrot.slane %v1914, %v1927
      %v1929 = vcombine.low %v1921, %v1928
      %v1938 = vpack.c.bf16 %v1638, %v1590
      %v1939 = vpack.c.bf16 %v1735, %v1687
      %v1940 = vpack.c.bf16 %v1832, %v1784
      %v1941 = vpack.c.bf16 %v1929, %v1881
      %vm1942 = vcmask 66560
      %1943 = vst.msk [vmem:[#allocation2] sm:$0x3] %vm1942, 0
      %vm1944 = vcmask 665160
      %1945 = vst.msk [vmem:[#allocation2] sm:$0x3] %vm1944, 0
      %v1951 = vunpack.c.l.s4 1983009808
      %v1952 = vunpack.c.0.s8 %v1951
      %v1953 = vlaneseq
      %v1954 = vshrl.u32 %v1953, 7
      %v1955 = vsub.s32 %v1952, %v1954
      %v1956 = vrot.slane %v1938, %v1955
      %v1958 = vunpack.c.l.s4 1983009808
      %v1959 = vunpack.c.0.s8 %v1958
      %v1960 = vlaneseq
      %v1961 = vshrl.u32 %v1960, 7
      %v1962 = vsub.s32 %v1959, %v1961
      %v1963 = vrot.slane %v1939, %v1962
      %v1965 = vunpack.c.l.s4 1983009808
      %v1966 = vunpack.c.0.s8 %v1965
      %v1967 = vlaneseq
      %v1968 = vshrl.u32 %v1967, 7
      %v1969 = vsub.s32 %v1966, %v1968
      %v1970 = vrot.slane %v1940, %v1969
      %v1972 = vunpack.c.l.s4 1983009808
      %v1973 = vunpack.c.0.s8 %v1972
      %v1974 = vlaneseq
      %v1975 = vshrl.u32 %v1974, 7
      %v1976 = vsub.s32 %v1973, %v1975
      %v1977 = vrot.slane %v1941, %v1976
      %v1979 = vunpack.c.l.s4 1983009808
      %v1980 = vunpack.c.0.s8 %v1979
      %v1981 = vlaneseq
      %v1982 = vshrl.u32 %v1981, 7
      %v1983 = vsub.s32 %v1980, %v1982
      %v1984 = vrot.slane %v1956, %v1983
      %v1986 = vunpack.c.l.s4 1983009808
      %v1987 = vunpack.c.0.s8 %v1986
      %v1988 = vlaneseq
      %v1989 = vshrl.u32 %v1988, 7
      %v1990 = vsub.s32 %v1987, %v1989
      %v1991 = vrot.slane %v1963, %v1990
      %v1993 = vunpack.c.l.s4 1983009808
      %v1994 = vunpack.c.0.s8 %v1993
      %v1995 = vlaneseq
      %v1996 = vshrl.u32 %v1995, 7
      %v1997 = vsub.s32 %v1994, %v1996
      %v1998 = vrot.slane %v1970, %v1997
      %v2000 = vunpack.c.l.s4 1983009808
      %v2001 = vunpack.c.0.s8 %v2000
      %v2002 = vlaneseq
      %v2003 = vshrl.u32 %v2002, 7
      %v2004 = vsub.s32 %v2001, %v2003
      %v2005 = vrot.slane %v1977, %v2004
      %v2006 = vunpack.c.l.b16 %v1984
      %v2007 = vunpack.c.l.b16 %v1991
      %v2008 = vunpack.c.l.b16 %v1998
      %v2009 = vunpack.c.l.b16 %v2005
      %v2010 = vrot.slane %v2007, 7
      %vm2011 = vcmask 1041409
      %v2012 = vsel %vm2011, %v2010, %v2006
      %v2013 = vrot.slane %v2008, 6
      %vm2014 = vcmask 1042434
      %v2015 = vsel %vm2014, %v2013, %v2012
      %v2016 = vrot.slane %v2009, 5
      %vm2017 = vcmask 1043459
      %v2018 = vsel %vm2017, %v2016, %v2015
      %v2019 = vpack.c.b16 %v2018, %v2018
      %v2021 = vunpack.c.l.s4 1983009808
      %v2022 = vunpack.c.0.s8 %v2021
      %v2023 = vlaneseq
      %v2024 = vshrl.u32 %v2023, 7
      %v2025 = vsub.s32 %v2022, %v2024
      %v2026 = vrot.slane %v2019, %v2025
      %2027 = vrot.lane.b32.xlu0 %v2026, 9
      %v2028 = vpop.permute.xlu0 %2027
      %vm2030 = vcmask 132168
      %2031 = vst.msk [vmem:[#allocation2] sm:$0x3] %vm2030, %v2028
      %v2032 = vrot.slane %v2006, 2
      %v2033 = vrot.slane %v2007, 1
      %v2034 = vsel %vm2011, %v2033, %v2032
      %v2035 = vsel %vm2014, %v2008, %v2034
      %v2036 = vrot.slane %v2009, 7
      %v2037 = vsel %vm2017, %v2036, %v2035
      %v2038 = vpack.c.b16 %v2037, %v2037
      %v2040 = vunpack.c.l.s4 1983009808
      %v2041 = vunpack.c.0.s8 %v2040
      %v2042 = vlaneseq
      %v2043 = vshrl.u32 %v2042, 7
      %v2044 = vsub.s32 %v2041, %v2043
      %v2045 = vrot.slane %v2038, %v2044
      %2046 = vrot.lane.b32.xlu0 %v2045, 17
      %v2047 = vpop.permute.xlu0 %2046
      %vm2049 = vcmask 197768
      %2050 = vst.msk [vmem:[#allocation2] sm:$0x3] %vm2049, %v2047
      %v2051 = vcombine.high %v1956, %v1956
      %v2052 = vcombine.high %v1963, %v1963
      %v2053 = vcombine.high %v1970, %v1970
      %v2054 = vcombine.high %v1977, %v1977
      %v2056 = vunpack.c.l.s4 1983009808
      %v2057 = vunpack.c.0.s8 %v2056
      %v2058 = vlaneseq
      %v2059 = vshrl.u32 %v2058, 7
      %v2060 = vsub.s32 %v2057, %v2059
      %v2061 = vrot.slane %v2051, %v2060
      %v2063 = vunpack.c.l.s4 1983009808
      %v2064 = vunpack.c.0.s8 %v2063
      %v2065 = vlaneseq
      %v2066 = vshrl.u32 %v2065, 7
      %v2067 = vsub.s32 %v2064, %v2066
      %v2068 = vrot.slane %v2052, %v2067
      %v2070 = vunpack.c.l.s4 1983009808
      %v2071 = vunpack.c.0.s8 %v2070
      %v2072 = vlaneseq
      %v2073 = vshrl.u32 %v2072, 7
      %v2074 = vsub.s32 %v2071, %v2073
      %v2075 = vrot.slane %v2053, %v2074
      %v2077 = vunpack.c.l.s4 1983009808
      %v2078 = vunpack.c.0.s8 %v2077
      %v2079 = vlaneseq
      %v2080 = vshrl.u32 %v2079, 7
      %v2081 = vsub.s32 %v2078, %v2080
      %v2082 = vrot.slane %v2054, %v2081
      %v2083 = vunpack.c.l.b16 %v2061
      %v2084 = vunpack.c.l.b16 %v2068
      %v2085 = vunpack.c.l.b16 %v2075
      %v2086 = vunpack.c.l.b16 %v2082
      %v2087 = vrot.slane %v2084, 7
      %v2088 = vsel %vm2011, %v2087, %v2083
      %v2089 = vrot.slane %v2085, 6
      %v2090 = vsel %vm2014, %v2089, %v2088
      %v2091 = vrot.slane %v2086, 5
      %v2092 = vsel %vm2017, %v2091, %v2090
      %v2093 = vpack.c.b16 %v2092, %v2092
      %v2095 = vunpack.c.l.s4 1983009808
      %v2096 = vunpack.c.0.s8 %v2095
      %v2097 = vlaneseq
      %v2098 = vshrl.u32 %v2097, 7
      %v2099 = vsub.s32 %v2096, %v2098
      %v2100 = vrot.slane %v2093, %v2099
      %2101 = vrot.lane.b32.xlu0 %v2100, 25
      %v2102 = vpop.permute.xlu0 %2101
      %vm2104 = vcmask 263368
      %2105 = vst.msk [vmem:[#allocation2] sm:$0x3] %vm2104, %v2102
      %v2106 = vrot.slane %v2083, 2
      %v2107 = vrot.slane %v2084, 1
      %v2108 = vsel %vm2011, %v2107, %v2106
      %v2109 = vsel %vm2014, %v2085, %v2108
      %v2110 = vrot.slane %v2086, 7
      %v2111 = vsel %vm2017, %v2110, %v2109
      %v2112 = vpack.c.b16 %v2111, %v2111
      %v2114 = vunpack.c.l.s4 1983009808
      %v2115 = vunpack.c.0.s8 %v2114
      %v2116 = vlaneseq
      %v2117 = vshrl.u32 %v2116, 7
      %v2118 = vsub.s32 %v2115, %v2117
      %v2119 = vrot.slane %v2112, %v2118
      %2120 = vrot.lane.b32.xlu0 %v2119, 33
      %v2121 = vpop.permute.xlu0 %2120
      %vm2123 = vcmask 328968
      %2124 = vst.msk [vmem:[#allocation2] sm:$0x3] %vm2123, %v2121
      %v2125 = vcombine.high %v1938, %v1938
      %v2127 = vunpack.c.l.s4 1983009808
      %v2128 = vunpack.c.0.s8 %v2127
      %v2129 = vlaneseq
      %v2130 = vshrl.u32 %v2129, 7
      %v2131 = vsub.s32 %v2128, %v2130
      %v2132 = vrot.slane %v2125, %v2131
      %v2133 = vcombine.high %v1939, %v1939
      %v2135 = vunpack.c.l.s4 1983009808
      %v2136 = vunpack.c.0.s8 %v2135
      %v2137 = vlaneseq
      %v2138 = vshrl.u32 %v2137, 7
      %v2139 = vsub.s32 %v2136, %v2138
      %v2140 = vrot.slane %v2133, %v2139
      %v2141 = vcombine.high %v1940, %v1940
      %v2143 = vunpack.c.l.s4 1983009808
      %v2144 = vunpack.c.0.s8 %v2143
      %v2145 = vlaneseq
      %v2146 = vshrl.u32 %v2145, 7
      %v2147 = vsub.s32 %v2144, %v2146
      %v2148 = vrot.slane %v2141, %v2147
      %v2149 = vcombine.high %v1941, %v1941
      %v2151 = vunpack.c.l.s4 1983009808
      %v2152 = vunpack.c.0.s8 %v2151
      %v2153 = vlaneseq
      %v2154 = vshrl.u32 %v2153, 7
      %v2155 = vsub.s32 %v2152, %v2154
      %v2156 = vrot.slane %v2149, %v2155
      %v2158 = vunpack.c.l.s4 1983009808
      %v2159 = vunpack.c.0.s8 %v2158
      %v2160 = vlaneseq
      %v2161 = vshrl.u32 %v2160, 7
      %v2162 = vsub.s32 %v2159, %v2161
      %v2163 = vrot.slane %v2132, %v2162
      %v2165 = vunpack.c.l.s4 1983009808
      %v2166 = vunpack.c.0.s8 %v2165
      %v2167 = vlaneseq
      %v2168 = vshrl.u32 %v2167, 7
      %v2169 = vsub.s32 %v2166, %v2168
      %v2170 = vrot.slane %v2140, %v2169
      %v2172 = vunpack.c.l.s4 1983009808
      %v2173 = vunpack.c.0.s8 %v2172
      %v2174 = vlaneseq
      %v2175 = vshrl.u32 %v2174, 7
      %v2176 = vsub.s32 %v2173, %v2175
      %v2177 = vrot.slane %v2148, %v2176
      %v2179 = vunpack.c.l.s4 1983009808
      %v2180 = vunpack.c.0.s8 %v2179
      %v2181 = vlaneseq
      %v2182 = vshrl.u32 %v2181, 7
      %v2183 = vsub.s32 %v2180, %v2182
      %v2184 = vrot.slane %v2156, %v2183
      %v2185 = vunpack.c.l.b16 %v2163
      %v2186 = vunpack.c.l.b16 %v2170
      %v2187 = vunpack.c.l.b16 %v2177
      %v2188 = vunpack.c.l.b16 %v2184
      %v2189 = vrot.slane %v2186, 7
      %v2190 = vsel %vm2011, %v2189, %v2185
      %v2191 = vrot.slane %v2187, 6
      %v2192 = vsel %vm2014, %v2191, %v2190
      %v2193 = vrot.slane %v2188, 5
      %v2194 = vsel %vm2017, %v2193, %v2192
      %v2195 = vpack.c.b16 %v2194, %v2194
      %v2197 = vunpack.c.l.s4 1983009808
      %v2198 = vunpack.c.0.s8 %v2197
      %v2199 = vlaneseq
      %v2200 = vshrl.u32 %v2199, 7
      %v2201 = vsub.s32 %v2198, %v2200
      %v2202 = vrot.slane %v2195, %v2201
      %2203 = vrot.lane.b32.xlu0 %v2202, 41
      %v2204 = vpop.permute.xlu0 %2203
      %vm2206 = vcmask 394568
      %2207 = vst.msk [vmem:[#allocation2] sm:$0x3] %vm2206, %v2204
      %v2208 = vrot.slane %v2185, 2
      %v2209 = vrot.slane %v2186, 1
      %v2210 = vsel %vm2011, %v2209, %v2208
      %v2211 = vsel %vm2014, %v2187, %v2210
      %v2212 = vrot.slane %v2188, 7
      %v2213 = vsel %vm2017, %v2212, %v2211
      %v2214 = vpack.c.b16 %v2213, %v2213
      %v2216 = vunpack.c.l.s4 1983009808
      %v2217 = vunpack.c.0.s8 %v2216
      %v2218 = vlaneseq
      %v2219 = vshrl.u32 %v2218, 7
      %v2220 = vsub.s32 %v2217, %v2219
      %v2221 = vrot.slane %v2214, %v2220
      %2222 = vrot.lane.b32.xlu0 %v2221, 49
      %v2223 = vpop.permute.xlu0 %2222
      %vm2225 = vcmask 460168
      %2226 = vst.msk [vmem:[#allocation2] sm:$0x3] %vm2225, %v2223
      %v2227 = vcombine.high %v2132, %v2132
      %v2228 = vcombine.high %v2140, %v2140
      %v2229 = vcombine.high %v2148, %v2148
      %v2230 = vcombine.high %v2156, %v2156
      %v2232 = vunpack.c.l.s4 1983009808
      %v2233 = vunpack.c.0.s8 %v2232
      %v2234 = vlaneseq
      %v2235 = vshrl.u32 %v2234, 7
      %v2236 = vsub.s32 %v2233, %v2235
      %v2237 = vrot.slane %v2227, %v2236
      %v2239 = vunpack.c.l.s4 1983009808
      %v2240 = vunpack.c.0.s8 %v2239
      %v2241 = vlaneseq
      %v2242 = vshrl.u32 %v2241, 7
      %v2243 = vsub.s32 %v2240, %v2242
      %v2244 = vrot.slane %v2228, %v2243
      %v2246 = vunpack.c.l.s4 1983009808
      %v2247 = vunpack.c.0.s8 %v2246
      %v2248 = vlaneseq
      %v2249 = vshrl.u32 %v2248, 7
      %v2250 = vsub.s32 %v2247, %v2249
      %v2251 = vrot.slane %v2229, %v2250
      %v2253 = vunpack.c.l.s4 1983009808
      %v2254 = vunpack.c.0.s8 %v2253
      %v2255 = vlaneseq
      %v2256 = vshrl.u32 %v2255, 7
      %v2257 = vsub.s32 %v2254, %v2256
      %v2258 = vrot.slane %v2230, %v2257
      %v2259 = vunpack.c.l.b16 %v2237
      %v2260 = vunpack.c.l.b16 %v2244
      %v2261 = vunpack.c.l.b16 %v2251
      %v2262 = vunpack.c.l.b16 %v2258
      %v2263 = vrot.slane %v2260, 7
      %v2264 = vsel %vm2011, %v2263, %v2259
      %v2265 = vrot.slane %v2261, 6
      %v2266 = vsel %vm2014, %v2265, %v2264
      %v2267 = vrot.slane %v2262, 5
      %v2268 = vsel %vm2017, %v2267, %v2266
      %v2269 = vpack.c.b16 %v2268, %v2268
      %v2271 = vunpack.c.l.s4 1983009808
      %v2272 = vunpack.c.0.s8 %v2271
      %v2273 = vlaneseq
      %v2274 = vshrl.u32 %v2273, 7
      %v2275 = vsub.s32 %v2272, %v2274
      %v2276 = vrot.slane %v2269, %v2275
      %2277 = vrot.lane.b32.xlu0 %v2276, 57
      %v2278 = vpop.permute.xlu0 %2277
      %vm2280 = vcmask 525768
      %2281 = vst.msk [vmem:[#allocation2] sm:$0x3] %vm2280, %v2278
      %v2282 = vrot.slane %v2259, 2
      %v2283 = vrot.slane %v2260, 1
      %v2284 = vsel %vm2011, %v2283, %v2282
      %v2285 = vsel %vm2014, %v2261, %v2284
      %v2286 = vrot.slane %v2262, 7
      %v2287 = vsel %vm2017, %v2286, %v2285
      %v2288 = vpack.c.b16 %v2287, %v2287
      %v2290 = vunpack.c.l.s4 1983009808
      %v2291 = vunpack.c.0.s8 %v2290
      %v2292 = vlaneseq
      %v2293 = vshrl.u32 %v2292, 7
      %v2294 = vsub.s32 %v2291, %v2293
      %v2295 = vrot.slane %v2288, %v2294
      %2296 = vrot.lane.b32.xlu0 %v2295, 65
      %v2297 = vpop.permute.xlu0 %2296
      %vm2299 = vcmask 591368
      %2300 = vst.msk [vmem:[#allocation2] sm:$0x3] %vm2299, %v2297
      %vm2301 = vcmp.lt.s32.totalorder %v1074, 0
      %v2302 = vsub.s32 0, %v1074
      %v2303 = vsel %vm2301, %v2302, %v1074
      %v2304 = vshrl.u32 %v2303, 3
      %v2305 = vand.u32 %v2303, 7
      %v2306 = vsub.s32 0, %v2305
      %v2307 = vsel %vm2301, %v2306, %v2305
      %vm2308 = vcmp.ne.s32.totalorder %v2307, 0
      %vm2309 = vcmp.lt.s32.totalorder %v2307, 0
      %vm2310 = vmand %vm2309, %vm2308
      %v2311 = vadd.s32 %v2307, 8
      %v2312 = vsel %vm2310, %v2311, %v2307
      %v2313 = vld [vmem:[#allocation2] sm:$0x3]
      %v2314 = vadd.s32 %v2312, 4294967295
      %vm2315 = vcmp.ge.s32.totalorder %v2314, 0
      %vm2316 = vcmp.lt.s32.totalorder %v2314, 8
      %vm2317 = vmand %vm2315, %vm2316
      %v2318 = vsel %vm2317, 1, 0
      %vm2319 = vcmp.eq.s32.totalorder %v2318, 1
      %v2320 = vsel %vm2319, 1, 0
      %v2321 = vpack.c.b16 %v2320, %v2320
      %vm2322 = vcmp.ne.s16.totalorder %v2321, 0
      %v2323 = vsel %vm2322, %v2313, 0
      %vm2324 = vcmask 517120
      %2325 = vst.msk [vmem:[#allocation3] sm:$0x3] %vm2324, %v2323
      %v2326 = vld [vmem:[#allocation2] sm:$0x3]
      %vm2327 = vcmp.ge.s32.totalorder %v2312, 0
      %vm2328 = vcmp.lt.s32.totalorder %v2312, 8
      %vm2329 = vmand %vm2327, %vm2328
      %v2330 = vsel %vm2329, 1, 0
      %vm2331 = vcmp.eq.s32.totalorder %v2330, 1
      %v2332 = vsel %vm2331, 1, 0
      %v2333 = vpack.c.b16 %v2332, %v2332
      %vm2334 = vcmp.ne.s16.totalorder %v2333, 0
      %v2335 = vsel %vm2334, 65537, 0
      %2336 = vrot.lane.b32.xlu0 %v2335, 1
      %v2337 = vpop.permute.xlu0 %2336
      %vm2338 = vcmp.ne.s16.totalorder %v2337, 0
      %v2339 = vsel %vm2338, %v2326, 0
      %v2341 = vcombine.low %v2339, %v2339
      %v2343 = vunpack.c.l.s4 1983009808
      %v2344 = vunpack.c.0.s8 %v2343
      %v2345 = vlaneseq
      %v2346 = vshrl.u32 %v2345, 7
      %v2347 = vsub.s32 %v2344, %v2346
      %v2348 = vrot.slane %v2341, %v2347
      %2349 = vrot.lane.b32.xlu0 %v2348, 127
      %v2350 = vpop.permute.xlu0 %2349
      %vm2352 = vcmask 519170
      %2353 = vst.msk [vmem:[#allocation3] sm:$0xc] %vm2352, %v2350
      %v2354 = vld [vmem:[#allocation2] sm:$0x3]
      %v2355 = vadd.s32 %v2312, 1
      %vm2356 = vcmp.ge.s32.totalorder %v2355, 0
      %vm2357 = vcmp.lt.s32.totalorder %v2355, 8
      %vm2358 = vmand %vm2356, %vm2357
      %v2359 = vsel %vm2358, 1, 0
      %vm2360 = vcmp.eq.s32.totalorder %v2359, 1
      %v2361 = vsel %vm2360, 1, 0
      %v2362 = vpack.c.b16 %v2361, %v2361
      %vm2363 = vcmp.ne.s16.totalorder %v2362, 0
      %v2364 = vsel %vm2363, 65537, 0
      %2365 = vrot.lane.b32.xlu0 %v2364, 2
      %v2366 = vpop.permute.xlu0 %2365
      %vm2367 = vcmp.ne.s16.totalorder %v2366, 0
      %v2368 = vsel %vm2367, %v2354, 0
      %v2371 = vunpack.c.l.s4 1983009808
      %v2372 = vunpack.c.0.s8 %v2371
      %v2373 = vlaneseq
      %v2374 = vshrl.u32 %v2373, 7
      %v2375 = vsub.s32 %v2372, %v2374
      %v2376 = vrot.slane %v2368, %v2375
      %2377 = vrot.lane.b32.xlu0 %v2376, 126
      %v2378 = vpop.permute.xlu0 %2377
      %2380 = vst.msk [vmem:[#allocation3 + $0x4] sm:$0x3] %vm2324, %v2378
      %v2381 = vld [vmem:[#allocation2] sm:$0x3]
      %v2382 = vsel %vm2322, 65537, 0
      %2383 = vrot.lane.b32.xlu0 %v2382, 8
      %v2384 = vpop.permute.xlu0 %2383
      %vm2385 = vcmp.ne.s16.totalorder %v2384, 0
      %v2386 = vsel %vm2385, %v2381, 0
      %v2388 = vcombine.low %v2386, %v2386
      %v2390 = vunpack.c.l.s4 1983009808
      %v2391 = vunpack.c.0.s8 %v2390
      %v2392 = vlaneseq
      %v2393 = vshrl.u32 %v2392, 7
      %v2394 = vsub.s32 %v2391, %v2393
      %v2395 = vrot.slane %v2388, %v2394
      %2396 = vrot.lane.b32.xlu0 %v2395, 120
      %v2397 = vpop.permute.xlu0 %2396
      %2399 = vst.msk [vmem:[#allocation3 + $0x4] sm:$0xc] %vm2352, %v2397
      %v2400 = vld [vmem:[#allocation2] sm:$0x3]
      %2401 = vrot.lane.b32.xlu0 %v2335, 9
      %v2402 = vpop.permute.xlu0 %2401
      %vm2403 = vcmp.ne.s16.totalorder %v2402, 0
      %v2404 = vsel %vm2403, %v2400, 0
      %v2407 = vunpack.c.l.s4 1983009808
      %v2408 = vunpack.c.0.s8 %v2407
      %v2409 = vlaneseq
      %v2410 = vshrl.u32 %v2409, 7
      %v2411 = vsub.s32 %v2408, %v2410
      %v2412 = vrot.slane %v2404, %v2411
      %2413 = vrot.lane.b32.xlu0 %v2412, 119
      %v2414 = vpop.permute.xlu0 %2413
      %2416 = vst.msk [vmem:[#allocation3 + $0x8] sm:$0x3] %vm2324, %v2414
      %v2417 = vld [vmem:[#allocation2] sm:$0x3]
      %2418 = vrot.lane.b32.xlu0 %v2364, 10
      %v2419 = vpop.permute.xlu0 %2418
      %vm2420 = vcmp.ne.s16.totalorder %v2419, 0
      %v2421 = vsel %vm2420, %v2417, 0
      %v2423 = vcombine.low %v2421, %v2421
      %v2425 = vunpack.c.l.s4 1983009808
      %v2426 = vunpack.c.0.s8 %v2425
      %v2427 = vlaneseq
      %v2428 = vshrl.u32 %v2427, 7
      %v2429 = vsub.s32 %v2426, %v2428
      %v2430 = vrot.slane %v2423, %v2429
      %2431 = vrot.lane.b32.xlu0 %v2430, 118
      %v2432 = vpop.permute.xlu0 %2431
      %2434 = vst.msk [vmem:[#allocation3 + $0x8] sm:$0xc] %vm2352, %v2432
      %v2435 = vld [vmem:[#allocation2] sm:$0x3]
      %2436 = vrot.lane.b32.xlu0 %v2382, 16
      %v2437 = vpop.permute.xlu0 %2436
      %vm2438 = vcmp.ne.s16.totalorder %v2437, 0
      %v2439 = vsel %vm2438, %v2435, 0
      %v2442 = vunpack.c.l.s4 1983009808
      %v2443 = vunpack.c.0.s8 %v2442
      %v2444 = vlaneseq
      %v2445 = vshrl.u32 %v2444, 7
      %v2446 = vsub.s32 %v2443, %v2445
      %v2447 = vrot.slane %v2439, %v2446
      %2448 = vrot.lane.b32.xlu0 %v2447, 112
      %v2449 = vpop.permute.xlu0 %2448
      %2451 = vst.msk [vmem:[#allocation3 + $0xc] sm:$0x3] %vm2324, %v2449
      %v2452 = vld [vmem:[#allocation2] sm:$0x3]
      %2453 = vrot.lane.b32.xlu0 %v2335, 17
      %v2454 = vpop.permute.xlu0 %2453
      %vm2455 = vcmp.ne.s16.totalorder %v2454, 0
      %v2456 = vsel %vm2455, %v2452, 0
      %v2458 = vcombine.low %v2456, %v2456
      %v2460 = vunpack.c.l.s4 1983009808
      %v2461 = vunpack.c.0.s8 %v2460
      %v2462 = vlaneseq
      %v2463 = vshrl.u32 %v2462, 7
      %v2464 = vsub.s32 %v2461, %v2463
      %v2465 = vrot.slane %v2458, %v2464
      %2466 = vrot.lane.b32.xlu0 %v2465, 111
      %v2467 = vpop.permute.xlu0 %2466
      %2469 = vst.msk [vmem:[#allocation3 + $0xc] sm:$0xc] %vm2352, %v2467
      %v2470 = vld [vmem:[#allocation2] sm:$0x3]
      %2471 = vrot.lane.b32.xlu0 %v2364, 18
      %v2472 = vpop.permute.xlu0 %2471
      %vm2473 = vcmp.ne.s16.totalorder %v2472, 0
      %v2474 = vsel %vm2473, %v2470, 0
      %v2477 = vunpack.c.l.s4 1983009808
      %v2478 = vunpack.c.0.s8 %v2477
      %v2479 = vlaneseq
      %v2480 = vshrl.u32 %v2479, 7
      %v2481 = vsub.s32 %v2478, %v2480
      %v2482 = vrot.slane %v2474, %v2481
      %2483 = vrot.lane.b32.xlu0 %v2482, 110
      %v2484 = vpop.permute.xlu0 %2483
      %2486 = vst.msk [vmem:[#allocation3 + $0x10] sm:$0x3] %vm2324, %v2484
      %v2487 = vld [vmem:[%s1] sm:$0xf]
      %v2488 = vld [vmem:[#allocation3] sm:$0xf]
      %v2489 = vld [vmem:[#allocation3 + $0x4] sm:$0xf]
      %v2490 = vld [vmem:[#allocation3 + $0x8] sm:$0xf]
      %v2491 = vld [vmem:[#allocation3 + $0xc] sm:$0xf]
      %v2492 = vld [vmem:[#allocation3 + $0x10] sm:$0x3]
      %v2493 = vld [vmem:[%s2] sm:$0xff]
      %2495 = vset.pattern.permute.xlu0 0
      %2496 = vperm.xlu0 %2495, %v2493
      %v2497 = vpop.permute.xlu0 %2496
      %v2504 = vunpack.c.l.b16 %v2488
      %v2505 = vunpack.c.l.b16 %v2489
      %v2506 = vunpack.c.l.b16 %v2490
      %v2507 = vunpack.c.l.b16 %v2491
      %v2508 = vunpack.c.l.b16 %v2492
      %v2509 = vpack.c.b16 %v2505, %v2504
      %v2510 = vpack.c.b16 %v2507, %v2506
      %v2511 = vpack.c.b16 %v2508, %v2508
      %vm2514 = vcmask 293888
      %v2516 = vsel %vm2514, %v2487, 0
      %vm2518 = vcmask 1041408
      %v2520 = vsel %vm2518, %v2511, 0
      %2522 = vmatprep.subr.bf16.mxu0 0
      %2523 = vmatpush1.bf16.msra.mxu0 0
      %2524 = vmatprep.subr.bf16.mxu0 0
      %2525 = vmatpush1.bf16.msra.mxu0 0
      %2526 = vmatprep.subr.bf16.mxu0 0
      %2527 = vmatpush1.bf16.msra.mxu0 0
      %2528 = vmatprep.subr.bf16.mxu0 0
      %2529 = vmatpush1.bf16.msra.mxu0 0
      %2530 = vmatprep.subr.bf16.mxu0 0
      %2531 = vmatpush1.bf16.msra.mxu0 0
      %2532 = vmatprep.subr.bf16.mxu0 0
      %2533 = vmatpush1.bf16.msra.mxu0 %v2520
      %2534 = vmatprep.subr.bf16.mxu0 0
      %2535 = vmatpush1.bf16.msra.mxu0 %v2510
      %2536 = vmatprep.subr.bf16.mxu0 0
      %2537 = vmatpush1.bf16.msra.mxu0 %v2509
      %2538 = vmatprep.subr.bf16.mxu0 0
      %2539 = vmatpush2.bf16.msra.mxu0 0
      %2540 = vmatprep.subr.bf16.mxu0 0
      %2541 = vmatpush2.bf16.msra.mxu0 0
      %2542 = vmatprep.subr.bf16.mxu0 0
      %2543 = vmatpush2.bf16.msra.mxu0 0
      %2544 = vmatprep.subr.bf16.mxu0 0
      %2545 = vmatpush2.bf16.msra.mxu0 0
      %2546 = vmatprep.subr.bf16.mxu0 0
      %2547 = vmatpush2.bf16.msra.mxu0 0
      %2548 = vmatprep.subr.bf16.mxu0 0
      %2549 = vmatpush2.bf16.msra.mxu0 0
      %2550 = vmatprep.subr.bf16.mxu0 0
      %2551 = vmatpush2.bf16.msra.mxu0 0
      %2552 = vmatprep.subr.bf16.mxu0 0
      %2553 = vmatpush2.bf16.msra.mxu0 0
      %2554 = vmatprep.mubr.bf16.mxu0 0
      %2555 = vmatmul.mubr.bf16.gmra.mxu0 %v2516
      %v2556 = vpop.f32.mrf.mxu0
      %v2557 = vadd.f32 %v2497, %v2556
      %v2558 = vpop.f32.mrf.mxu0
      %v2559 = vpop.f32.mrf.mxu0
      %v2560 = vpop.f32.mrf.mxu0
      %2561 = vdwg.mxu0
      %v2562 = vpack.c.bf16 %v2557, %v2557
      %vm2563 = vcmask 519168
      %2564 = vst.msk [vmem:[%s202] sm:$0xf] %vm2563, %v2562
      %vm2565 = vcmask 523264
      %v2566 = vsel %vm2565, %v2557, 0.0
      %2567 = vadd.xlane.f32.xlu0 %v2566
      %v2568 = vpop.xlane.xlu0 %2567
      %vm2569 = vcmask 7168
      %2570 = vst.msk [vmem:[%s206] sm:$0xff] %vm2569, %v2568
      %v2571 = vmul.f32 %v2557, %v2557
      %v2572 = vsel %vm2565, %v2571, 0.0
      %2573 = vadd.xlane.f32.xlu0 %v2572
      %v2574 = vpop.xlane.xlu0 %2573
      %vm2575 = vcmask 15368
      %2576 = vst.msk [vmem:[%s206] sm:$0xff] %vm2575, %v2574
      %p2577 = scmp.lt.s32.totalorder %s16, 1
      %s2578 = scalar_select %p2577, %s16, 1
      %s2579 = smul.addr %s2578, 4
      %s2580 = scalar_lea.vmem %s3, %s2579
      %p2581 = scmp.lt.s32.totalorder %s16, 1
      %s2582 = scalar_select %p2581, %s16, 1
      %s2583 = smul.addr %s2582, 8
      %s2584 = scalar_lea.vmem %s4, %s2583
      // Predicated region
      $region33: #{down_forward.3} parent=31 // pred_check
        %p2585 = pneg %p102
      $region34: #{down_forward.3} parent=31 // pred_check_branch
        %2587 = sbr.rel (%p2585) target = $region36
      $region35: #{down_forward.3} parent=31 // pred_region
        _
      $region36: #{down_forward.3} parent=31 // pred_fallthru
        _
      // Predicated region
      $region37: #{down_forward.3} parent=31 // pred_check
        %p2588 = pneg %p128
      $region38: #{down_forward.3} parent=31 // pred_check_branch
        %2590 = sbr.rel (%p2588) target = $region40
      $region39: #{down_forward.3} parent=31 // pred_region
        _
      $region40: #{down_forward.3} parent=31 // pred_fallthru
        _
    $region32: #{down_forward.3} parent=5 // pred_fallthru
      _
    %p2591 = scmp.le.s32.totalorder 2, %s11
    // Predicated region
    $region41: #{down_forward.3} parent=5 // pred_check
      %p2592 = pneg %p2591
    $region42: #{down_forward.3} parent=5 // pred_check_branch
      %2594 = sbr.rel (%p2592) target = $region44
    $region43: #{down_forward.3} parent=5 // pred_region
      %s2595 = ssub.s32 %s11, 2
      // Predicated region
      $region45: #{down_forward.3} parent=43 // pred_check
        %p2596 = pneg %p108
      $region46: #{down_forward.3} parent=43 // pred_check_branch
        %2598 = sbr.rel (%p2596) target = $region48
      $region47: #{down_forward.3} parent=43 // pred_region
        %p2599 = scmp.lt.s32.totalorder %s17, 1
        %s2600 = scalar_select %p2599, %s17, 1
        %s2601 = smul.addr %s2600, 4
        %s2602 = scalar_lea.vmem %s3, %s2601
      $region48: #{down_forward.3} parent=43 // pred_fallthru
        _
      // Predicated region
      $region49: #{down_forward.3} parent=43 // pred_check
        %p2603 = pneg %p134
      $region50: #{down_forward.3} parent=43 // pred_check_branch
        %2605 = sbr.rel (%p2603) target = $region52
      $region51: #{down_forward.3} parent=43 // pred_region
        %p2606 = scmp.lt.s32.totalorder %s17, 1
        %s2607 = scalar_select %p2606, %s17, 1
        %s2608 = smul.addr %s2607, 8
        %s2609 = scalar_lea.vmem %s4, %s2608
      $region52: #{down_forward.3} parent=43 // pred_fallthru
        _
    $region44: #{down_forward.3} parent=5 // pred_fallthru
      _
  $region6: #{down_forward.3} parent=0 // loop_footer
    %s15 = sadd.s32 1, %s11
  $region7: #{down_forward.3} parent=0 // loop_footer_branch
    %10 = sbr.rel target = $region3
  $region8: #{down_forward.3} parent=0 // loop_exit
    _

</llo_original>
